<compile_context>
chip_gen: v7x
topology: tpu7x:2x2x1
jax: 0.10.0
libtpu: 0.0.40
codegen_flags: <defaults>
</compile_context>

<pallas_src>
import jax
import jax.numpy as jnp
from jax import lax
from jax.experimental import pallas as pl
from jax.experimental.pallas import tpu as pltpu


_DN_P1 = ("NDHWC", "DHWIO", "NDHWC")   # f1 patches: batch-major output
_DN_P3 = ("NDHWC", "DHWIO", "DHWNC")   # f3 patches: position-major output

_TM1_MAX = 512     # rows/block for the f1 GEMM
_TB_MAX = 512      # batch rows/block for the fused tail kernel
_M_CHUNK = 4       # f8 taps handled per grid step (44 / 4 = 11 steps)


# ------------------------- Pallas kernels -------------------------

def _conv1_kernel(p_ref, w_ref, b_ref, o_ref):
    """f0+f1+f2: (tm, 27) @ (27, 22) + bias, tanh.  bf16 in, f32 accumulate."""
    acc = jnp.dot(p_ref[...], w_ref[...], preferred_element_type=jnp.float32)
    acc = acc + b_ref[...]
    o_ref[...] = jnp.tanh(acc).astype(o_ref.dtype)


def _tail_kernel(p_ref, w34_ref, b4_ref, w6_ref, b6_ref, w8_ref, o_ref,
                 acc_ref):
    """f3..f9 fused.  Grid = (batch_tiles, 44 // _M_CHUNK); axis 1 runs over
    the 44 (d,h,w) taps of the f8 kernel (== the f3 output positions), whose
    partial f8 products are accumulated in acc_ref; log-softmax on last step.
    """
    m = pl.program_id(1)

    @pl.when(m == 0)
    def _():
        acc_ref[...] = jnp.zeros_like(acc_ref)

    for j in range(p_ref.shape[0]):               # _M_CHUNK static taps
        x = p_ref[j]                              # (tb, 1408) bf16
        # f3 + f4 (W3 @ W4 folded) + f5
        h = jnp.dot(x, w34_ref[...], preferred_element_type=jnp.float32)
        h = jnp.tanh(h + b4_ref[...])
        # f6 + f7
        h = jnp.dot(h.astype(jnp.bfloat16), w6_ref[...],
                    preferred_element_type=jnp.float32)
        h = jnp.tanh(h + b6_ref[...])
        # f8 partial contraction for this tap
        acc_ref[...] += jnp.dot(h.astype(jnp.bfloat16), w8_ref[j],
                                preferred_element_type=jnp.float32)

    @pl.when(m == pl.num_programs(1) - 1)
    def _():
        logits = acc_ref[...]
        mx = jnp.max(logits, axis=-1, keepdims=True)
        s = logits - mx
        lse = jnp.log(jnp.sum(jnp.exp(s), axis=-1, keepdims=True))
        o_ref[...] = (s - lse).astype(o_ref.dtype)   # f9: log-softmax


# ------------------------- Pallas wrappers -------------------------

def _conv1(p1, w1m, b1):
    m_rows = p1.shape[0]
    tm = m_rows if m_rows <= _TM1_MAX else _TM1_MAX
    grid = (pl.cdiv(m_rows, tm),)
    cost = pl.CostEstimate(
        flops=2 * m_rows * 27 * 22,
        transcendentals=m_rows * 22,
        bytes_accessed=p1.size * 2 + w1m.size * 2 + b1.size * 4
        + m_rows * 22 * 2)
    return pl.pallas_call(
        _conv1_kernel,
        out_shape=jax.ShapeDtypeStruct((m_rows, 22), jnp.bfloat16),
        grid=grid,
        in_specs=[pl.BlockSpec((tm, 27), lambda i: (i, 0)),
                  pl.BlockSpec((27, 22), lambda i: (0, 0)),
                  pl.BlockSpec((1, 22), lambda i: (0, 0))],
        out_specs=pl.BlockSpec((tm, 22), lambda i: (i, 0)),
        compiler_params=pltpu.CompilerParams(
            dimension_semantics=("parallel",)),
        cost_estimate=cost,
    )(p1, w1m, b1)


def _tail(p3, w34, b4, w6m, b6, w8m, batch):
    tb = batch if batch <= _TB_MAX else _TB_MAX
    grid = (pl.cdiv(batch, tb), 44 // _M_CHUNK)
    cost = pl.CostEstimate(
        flops=2 * batch * 44 * (1408 * 55 + 55 * 61 + 61 * 10),
        transcendentals=batch * (44 * (55 + 61) + 10),
        bytes_accessed=p3.size * 2 + w34.size * 2 + w6m.size * 2
        + w8m.size * 2 + (b4.size + b6.size) * 4 + batch * 10 * 4)
    return pl.pallas_call(
        _tail_kernel,
        out_shape=jax.ShapeDtypeStruct((batch, 10), jnp.float32),
        grid=grid,
        in_specs=[pl.BlockSpec((_M_CHUNK, tb, 1408), lambda b, m: (m, b, 0)),
                  pl.BlockSpec((1408, 55), lambda b, m: (0, 0)),
                  pl.BlockSpec((1, 55), lambda b, m: (0, 0)),
                  pl.BlockSpec((55, 61), lambda b, m: (0, 0)),
                  pl.BlockSpec((1, 61), lambda b, m: (0, 0)),
                  pl.BlockSpec((_M_CHUNK, 61, 10), lambda b, m: (m, 0, 0))],
        out_specs=pl.BlockSpec((tb, 10), lambda b, m: (b, 0)),
        scratch_shapes=[pltpu.VMEM((tb, 10), jnp.float32)],
        compiler_params=pltpu.CompilerParams(
            dimension_semantics=("parallel", "arbitrary")),
        cost_estimate=cost,
    )(p3, w34, b4, w6m, b6, w8m)


# ------------------------- Params -------------------------

def init_params(key):
    ks = jax.random.split(key, 9)

    def w_init(k, shape):
        fan_in = shape[1] * shape[2] * shape[3] * shape[4]
        bound = 1.0 / (fan_in ** 0.5)
        return jax.random.uniform(k, shape, jnp.float32, -bound, bound)

    def b_init(k, cout, fan_in):
        bound = 1.0 / (fan_in ** 0.5)
        return jax.random.uniform(k, (cout,), jnp.float32, -bound, bound)

    return {
        "w0": w_init(ks[0], (34, 1, 1, 1, 1)),
        "w1": w_init(ks[1], (22, 34, 3, 3, 3)),
        "b1": b_init(ks[2], 22, 34 * 27),
        "w3": w_init(ks[3], (53, 22, 4, 4, 4)),
        "w4": w_init(ks[4], (55, 53, 1, 1, 1)),
        "b4": b_init(ks[5], 55, 53),
        "w6": w_init(ks[6], (61, 55, 1, 1, 1)),
        "b6": b_init(ks[7], 61, 55),
        "w8": w_init(ks[8], (10, 61, 11, 2, 2)),
    }


def prepare_params(p):
    """One-time weight relayout (hoisted out of forward): fold f0 into f1 and
    f3 into f4 (both exact in f32), flatten conv weights to GEMM matrices
    whose row ordering matches conv_general_dilated_patches (Cin slowest,
    then kd,kh,kw), and cast matmul operands to bf16 (biases stay f32)."""
    f32, bf16 = jnp.float32, jnp.bfloat16
    # Exact fold: f1(f0(x)) with f0 a bias-free 1x1x1 conv.
    w0 = p["w0"][:, 0, 0, 0, 0]                                  # (34,)
    w1_eff = jnp.einsum("oidhw,i->odhw", p["w1"], w0)            # (22,3,3,3)
    # Exact fold: f4(f3(x)) -- f3 has no bias and no activation before f4.
    w3m = p["w3"].reshape(53, 22 * 64).T                          # (1408, 53)
    w4m = p["w4"].reshape(55, 53).T                               # (53, 55)
    w34 = jnp.dot(w3m, w4m, precision=lax.Precision.HIGHEST)      # (1408, 55)
    return {
        "w1m": w1_eff.reshape(22, 27).T.astype(bf16),             # (27, 22)
        "b1":  p["b1"].reshape(1, 22).astype(f32),
        "w34": w34.astype(bf16),                                  # (1408, 55)
        "b4":  p["b4"].reshape(1, 55).astype(f32),
        "w6m": p["w6"].reshape(61, 55).T.astype(bf16),            # (55, 61)
        "b6":  p["b6"].reshape(1, 61).astype(f32),
        # f8 weight per (d,h,w) tap, m ordered d-major: (44, 61, 10)
        "w8m": p["w8"].transpose(2, 3, 4, 1, 0)
                      .reshape(44, 61, 10).astype(bf16),
    }


# ------------------------- Model -------------------------

def forward(prep, x):
    B = x.shape[0]
    # x.view(B, 1, 16, 7, 7) in channel-last form (C == 1 after folding f0).
    xc = x.reshape(B, 16, 7, 7, 1).astype(jnp.bfloat16)
    # f1 patches: (B, 14, 5, 5, 27); feature order (Cin=1, kd, kh, kw).
    p1 = lax.conv_general_dilated_patches(
        xc, (3, 3, 3), (1, 1, 1), "VALID", dimension_numbers=_DN_P1)
    y1 = _conv1(p1.reshape(B * 350, 27), prep["w1m"], prep["b1"])   # f0+f1+f2
    # f3 patches, position-major: (11, 2, 2, B, 1408) -> (44, B, 1408);
    # feature order (Cin=22, kd, kh, kw).
    p3 = lax.conv_general_dilated_patches(
        y1.reshape(B, 14, 5, 5, 22), (4, 4, 4), (1, 1, 1), "VALID",
        dimension_numbers=_DN_P3)
    p3 = p3.reshape(44, B, 1408)
    # f3..f9 fused (f8's 44-tap contraction is the reduction grid axis).
    return _tail(p3, prep["w34"], prep["b4"], prep["w6m"], prep["b6"],
                 prep["w8m"], B)


def forward_ref(params, x):
    """Pure-JAX reference mirroring the PyTorch module (f0..f9, unfused)."""
    B = x.shape[0]
    x = x.reshape(B, 1, 16, 7, 7)
    dn = ("NCDHW", "OIDHW", "NCDHW")

    def conv(v, w):
        return lax.conv_general_dilated(v, w, (1, 1, 1), "VALID",
                                        dimension_numbers=dn)

    x = conv(x, params["w0"])
    x = jnp.tanh(conv(x, params["w1"]) + params["b1"][None, :, None, None, None])
    x = conv(x, params["w3"])
    x = jnp.tanh(conv(x, params["w4"]) + params["b4"][None, :, None, None, None])
    x = jnp.tanh(conv(x, params["w6"]) + params["b6"][None, :, None, None, None])
    x = conv(x, params["w8"]).reshape(B, 10)
    return jax.nn.log_softmax(x, axis=1)


if __name__ == "__main__":
    key = jax.random.PRNGKey(0)
    k_param, k_x = jax.random.split(key)
    params = init_params(k_param)
    prep = prepare_params(params)          # one-time weight fold / relayout
    # 784 elements per example, matching x.view(B, 1, 16, 7, 7)
    x = jax.random.normal(k_x, (2, 1, 28, 28), dtype=jnp.float32)

    fwd = jax.jit(forward)
    out = jax.block_until_ready(fwd(prep, x))
    assert out.shape == (2, 10), out.shape

    ref = jax.block_until_ready(forward_ref(params, x))
    max_err = float(jnp.max(jnp.abs(out - ref)))
    assert jnp.allclose(out, ref, atol=2e-2, rtol=2e-2), (
        f"mismatch vs reference: max abs err {max_err}")
    print("KERNEL_OK")
</pallas_src>

<mosaic_0001>
module attributes {stable_mosaic.version = 11 : i64} {
  func.func @_conv1_kernel(%arg0: i32, %arg1: memref<512x27xbf16, #tpu.memory_space<vmem>>, %arg2: memref<27x22xbf16, #tpu.memory_space<vmem>>, %arg3: memref<1x22xf32, #tpu.memory_space<vmem>>, %arg4: memref<512x22xbf16, #tpu.memory_space<vmem>>) attributes {dimension_semantics = [#tpu.dimension_semantics<parallel>], iteration_bounds = array<i64: 2>, scalar_prefetch = 0 : i64, scratch_operands = 0 : i64, tpu.core_type = #tpu.core_type<tc>, window_params = [{transform_indices = @transform_0, window_bounds = array<i64: 512, 27>}, {pipeline_mode = #tpu.pipeline_mode<synchronous>, transform_indices = @transform_1, window_bounds = array<i64: 27, 22>}, {pipeline_mode = #tpu.pipeline_mode<synchronous>, transform_indices = @transform_2, window_bounds = array<i64: 1, 22>}, {transform_indices = @transform_3, window_bounds = array<i64: 512, 22>}]} {
    %c0 = arith.constant 0 : index
    %c0_0 = arith.constant 0 : index
    %0 = vector.load %arg1[%c0, %c0_0] : memref<512x27xbf16, #tpu.memory_space<vmem>>, vector<512x27xbf16>
    %c0_1 = arith.constant 0 : index
    %c0_2 = arith.constant 0 : index
    %1 = vector.load %arg2[%c0_1, %c0_2] : memref<27x22xbf16, #tpu.memory_space<vmem>>, vector<27x22xbf16>
    %cst = arith.constant dense<0.000000e+00> : vector<512x22xf32>
    %2 = tpu.matmul %0, %1, %cst {dimension_numbers = #tpu.dot_dimension_numbers<[1], [0], [0], [1], [0, 0, 1, 1], [], []>} : vector<512x27xbf16>, vector<27x22xbf16>, vector<512x22xf32> -> vector<512x22xf32>
    %c0_3 = arith.constant 0 : index
    %c0_4 = arith.constant 0 : index
    %3 = vector.load %arg3[%c0_3, %c0_4] : memref<1x22xf32, #tpu.memory_space<vmem>>, vector<1x22xf32>
    %4 = vector.broadcast %3 : vector<1x22xf32> to vector<512x22xf32>
    %5 = arith.addf %2, %4 : vector<512x22xf32>
    %6 = math.tanh %5 : vector<512x22xf32>
    %7 = arith.truncf %6 : vector<512x22xf32> to vector<512x22xbf16>
    %c0_5 = arith.constant 0 : index
    %c0_6 = arith.constant 0 : index
    %8 = vector.load %arg4[%c0_5, %c0_6] : memref<512x22xbf16, #tpu.memory_space<vmem>>, vector<512x22xbf16>
    tpu.vector_store %arg4[%c0_5, %c0_6], %7 {strides = array<i32>} : memref<512x22xbf16, #tpu.memory_space<vmem>>, vector<512x22xbf16>,
    return
  }
  func.func @transform_0(%arg0: i32) -> (i32, i32) {
    %c0_i32 = arith.constant 0 : i32
    %c0_i32_0 = arith.constant 0 : i32
    return %arg0, %c0_i32 : i32, i32
  }
  func.func @transform_1(%arg0: i32) -> (i32, i32) {
    %c0_i32 = arith.constant 0 : i32
    %c0_i32_0 = arith.constant 0 : i32
    %c0_i32_1 = arith.constant 0 : i32
    return %c0_i32, %c0_i32_0 : i32, i32
  }
  func.func @transform_2(%arg0: i32) -> (i32, i32) {
    %c0_i32 = arith.constant 0 : i32
    %c0_i32_0 = arith.constant 0 : i32
    %c0_i32_1 = arith.constant 0 : i32
    return %c0_i32, %c0_i32_0 : i32, i32
  }
  func.func @transform_3(%arg0: i32) -> (i32, i32) {
    %c0_i32 = arith.constant 0 : i32
    %c0_i32_0 = arith.constant 0 : i32
    return %arg0, %c0_i32 : i32, i32
  }
}

module attributes {stable_mosaic.version = 11 : i64} {
  func.func @_tail_kernel(%arg0: i32, %arg1: i32, %arg2: memref<4x2x1408xbf16, #tpu.memory_space<vmem>>, %arg3: memref<1408x55xbf16, #tpu.memory_space<vmem>>, %arg4: memref<1x55xf32, #tpu.memory_space<vmem>>, %arg5: memref<55x61xbf16, #tpu.memory_space<vmem>>, %arg6: memref<1x61xf32, #tpu.memory_space<vmem>>, %arg7: memref<4x61x10xbf16, #tpu.memory_space<vmem>>, %arg8: memref<2x10xf32, #tpu.memory_space<vmem>>, %arg9: memref<2x10xf32, #tpu.memory_space<vmem>>) attributes {dimension_semantics = [#tpu.dimension_semantics<parallel>, #tpu.dimension_semantics<arbitrary>], iteration_bounds = array<i64: 1, 11>, scalar_prefetch = 0 : i64, scratch_operands = 1 : i64, tpu.core_type = #tpu.core_type<tc>, window_params = [{transform_indices = @transform_0, window_bounds = array<i64: 4, 2, 1408>}, {pipeline_mode = #tpu.pipeline_mode<synchronous>, transform_indices = @transform_1, window_bounds = array<i64: 1408, 55>}, {pipeline_mode = #tpu.pipeline_mode<synchronous>, transform_indices = @transform_2, window_bounds = array<i64: 1, 55>}, {pipeline_mode = #tpu.pipeline_mode<synchronous>, transform_indices = @transform_3, window_bounds = array<i64: 55, 61>}, {pipeline_mode = #tpu.pipeline_mode<synchronous>, transform_indices = @transform_4, window_bounds = array<i64: 1, 61>}, {transform_indices = @transform_5, window_bounds = array<i64: 4, 61, 10>}, {transform_indices = @transform_6, window_bounds = array<i64: 2, 10>}]} {
    %c0_i32 = arith.constant 0 : i32
    %0 = arith.cmpi eq, %arg1, %c0_i32 : i32
    %1 = arith.extui %0 : i1 to i32
    %c0_i32_0 = arith.constant 0 : i32
    %2 = arith.cmpi ne, %1, %c0_i32_0 : i32
    scf.if %2 {
      %cst_81 = arith.constant 0.000000e+00 : f32
      %94 = vector.broadcast %cst_81 : f32 to vector<2x10xf32>
      %c0_82 = arith.constant 0 : index
      %c0_83 = arith.constant 0 : index
      %95 = vector.load %arg9[%c0_82, %c0_83] : memref<2x10xf32, #tpu.memory_space<vmem>>, vector<2x10xf32>
      tpu.vector_store %arg9[%c0_82, %c0_83], %94 {strides = array<i32>} : memref<2x10xf32, #tpu.memory_space<vmem>>, vector<2x10xf32>,
    } else {
    }
    %c0 = arith.constant 0 : index
    %c0_1 = arith.constant 0 : index
    %c0_2 = arith.constant 0 : index
    %3 = vector.load %arg2[%c0, %c0_1, %c0_2] : memref<4x2x1408xbf16, #tpu.memory_space<vmem>>, vector<1x2x1408xbf16>
    %4 = vector.shape_cast %3 : vector<1x2x1408xbf16> to vector<2x1408xbf16>
    %c0_3 = arith.constant 0 : index
    %c0_4 = arith.constant 0 : index
    %5 = vector.load %arg3[%c0_3, %c0_4] : memref<1408x55xbf16, #tpu.memory_space<vmem>>, vector<1408x55xbf16>
    %cst = arith.constant dense<0.000000e+00> : vector<2x55xf32>
    %6 = tpu.matmul %4, %5, %cst {dimension_numbers = #tpu.dot_dimension_numbers<[1], [0], [0], [1], [0, 0, 1, 1], [], []>} : vector<2x1408xbf16>, vector<1408x55xbf16>, vector<2x55xf32> -> vector<2x55xf32>
    %c0_5 = arith.constant 0 : index
    %c0_6 = arith.constant 0 : index
    %7 = vector.load %arg4[%c0_5, %c0_6] : memref<1x55xf32, #tpu.memory_space<vmem>>, vector<1x55xf32>
    %8 = vector.broadcast %7 : vector<1x55xf32> to vector<2x55xf32>
    %9 = arith.addf %6, %8 : vector<2x55xf32>
    %10 = math.tanh %9 : vector<2x55xf32>
    %11 = arith.truncf %10 : vector<2x55xf32> to vector<2x55xbf16>
    %c0_7 = arith.constant 0 : index
    %c0_8 = arith.constant 0 : index
    %12 = vector.load %arg5[%c0_7, %c0_8] : memref<55x61xbf16, #tpu.memory_space<vmem>>, vector<55x61xbf16>
    %cst_9 = arith.constant dense<0.000000e+00> : vector<2x61xf32>
    %13 = tpu.matmul %11, %12, %cst_9 {dimension_numbers = #tpu.dot_dimension_numbers<[1], [0], [0], [1], [0, 0, 1, 1], [], []>} : vector<2x55xbf16>, vector<55x61xbf16>, vector<2x61xf32> -> vector<2x61xf32>
    %c0_10 = arith.constant 0 : index
    %c0_11 = arith.constant 0 : index
    %14 = vector.load %arg6[%c0_10, %c0_11] : memref<1x61xf32, #tpu.memory_space<vmem>>, vector<1x61xf32>
    %15 = vector.broadcast %14 : vector<1x61xf32> to vector<2x61xf32>
    %16 = arith.addf %13, %15 : vector<2x61xf32>
    %17 = math.tanh %16 : vector<2x61xf32>
    %c0_12 = arith.constant 0 : index
    %c0_13 = arith.constant 0 : index
    %18 = vector.load %arg9[%c0_12, %c0_13] : memref<2x10xf32, #tpu.memory_space<vmem>>, vector<2x10xf32>
    %19 = arith.truncf %17 : vector<2x61xf32> to vector<2x61xbf16>
    %c0_14 = arith.constant 0 : index
    %c0_15 = arith.constant 0 : index
    %c0_16 = arith.constant 0 : index
    %20 = vector.load %arg7[%c0_14, %c0_15, %c0_16] : memref<4x61x10xbf16, #tpu.memory_space<vmem>>, vector<1x61x10xbf16>
    %21 = vector.shape_cast %20 : vector<1x61x10xbf16> to vector<61x10xbf16>
    %cst_17 = arith.constant dense<0.000000e+00> : vector<2x10xf32>
    %22 = tpu.matmul %19, %21, %cst_17 {dimension_numbers = #tpu.dot_dimension_numbers<[1], [0], [0], [1], [0, 0, 1, 1], [], []>} : vector<2x61xbf16>, vector<61x10xbf16>, vector<2x10xf32> -> vector<2x10xf32>
    %23 = arith.addf %18, %22 : vector<2x10xf32>
    %c0_18 = arith.constant 0 : index
    %c0_19 = arith.constant 0 : index
    %24 = vector.load %arg9[%c0_18, %c0_19] : memref<2x10xf32, #tpu.memory_space<vmem>>, vector<2x10xf32>
    tpu.vector_store %arg9[%c0_18, %c0_19], %23 {strides = array<i32>} : memref<2x10xf32, #tpu.memory_space<vmem>>, vector<2x10xf32>,
    %c1 = arith.constant 1 : index
    %c0_20 = arith.constant 0 : index
    %c0_21 = arith.constant 0 : index
    %25 = vector.load %arg2[%c1, %c0_20, %c0_21] : memref<4x2x1408xbf16, #tpu.memory_space<vmem>>, vector<1x2x1408xbf16>
    %26 = vector.shape_cast %25 : vector<1x2x1408xbf16> to vector<2x1408xbf16>
    %c0_22 = arith.constant 0 : index
    %c0_23 = arith.constant 0 : index
    %27 = vector.load %arg3[%c0_22, %c0_23] : memref<1408x55xbf16, #tpu.memory_space<vmem>>, vector<1408x55xbf16>
    %cst_24 = arith.constant dense<0.000000e+00> : vector<2x55xf32>
    %28 = tpu.matmul %26, %27, %cst_24 {dimension_numbers = #tpu.dot_dimension_numbers<[1], [0], [0], [1], [0, 0, 1, 1], [], []>} : vector<2x1408xbf16>, vector<1408x55xbf16>, vector<2x55xf32> -> vector<2x55xf32>
    %c0_25 = arith.constant 0 : index
    %c0_26 = arith.constant 0 : index
    %29 = vector.load %arg4[%c0_25, %c0_26] : memref<1x55xf32, #tpu.memory_space<vmem>>, vector<1x55xf32>
    %30 = vector.broadcast %29 : vector<1x55xf32> to vector<2x55xf32>
    %31 = arith.addf %28, %30 : vector<2x55xf32>
    %32 = math.tanh %31 : vector<2x55xf32>
    %33 = arith.truncf %32 : vector<2x55xf32> to vector<2x55xbf16>
    %c0_27 = arith.constant 0 : index
    %c0_28 = arith.constant 0 : index
    %34 = vector.load %arg5[%c0_27, %c0_28] : memref<55x61xbf16, #tpu.memory_space<vmem>>, vector<55x61xbf16>
    %cst_29 = arith.constant dense<0.000000e+00> : vector<2x61xf32>
    %35 = tpu.matmul %33, %34, %cst_29 {dimension_numbers = #tpu.dot_dimension_numbers<[1], [0], [0], [1], [0, 0, 1, 1], [], []>} : vector<2x55xbf16>, vector<55x61xbf16>, vector<2x61xf32> -> vector<2x61xf32>
    %c0_30 = arith.constant 0 : index
    %c0_31 = arith.constant 0 : index
    %36 = vector.load %arg6[%c0_30, %c0_31] : memref<1x61xf32, #tpu.memory_space<vmem>>, vector<1x61xf32>
    %37 = vector.broadcast %36 : vector<1x61xf32> to vector<2x61xf32>
    %38 = arith.addf %35, %37 : vector<2x61xf32>
    %39 = math.tanh %38 : vector<2x61xf32>
    %c0_32 = arith.constant 0 : index
    %c0_33 = arith.constant 0 : index
    %40 = vector.load %arg9[%c0_32, %c0_33] : memref<2x10xf32, #tpu.memory_space<vmem>>, vector<2x10xf32>
    %41 = arith.truncf %39 : vector<2x61xf32> to vector<2x61xbf16>
    %c1_34 = arith.constant 1 : index
    %c0_35 = arith.constant 0 : index
    %c0_36 = arith.constant 0 : index
    %42 = vector.load %arg7[%c1_34, %c0_35, %c0_36] : memref<4x61x10xbf16, #tpu.memory_space<vmem>>, vector<1x61x10xbf16>
    %43 = vector.shape_cast %42 : vector<1x61x10xbf16> to vector<61x10xbf16>
    %cst_37 = arith.constant dense<0.000000e+00> : vector<2x10xf32>
    %44 = tpu.matmul %41, %43, %cst_37 {dimension_numbers = #tpu.dot_dimension_numbers<[1], [0], [0], [1], [0, 0, 1, 1], [], []>} : vector<2x61xbf16>, vector<61x10xbf16>, vector<2x10xf32> -> vector<2x10xf32>
    %45 = arith.addf %40, %44 : vector<2x10xf32>
    %c0_38 = arith.constant 0 : index
    %c0_39 = arith.constant 0 : index
    %46 = vector.load %arg9[%c0_38, %c0_39] : memref<2x10xf32, #tpu.memory_space<vmem>>, vector<2x10xf32>
    tpu.vector_store %arg9[%c0_38, %c0_39], %45 {strides = array<i32>} : memref<2x10xf32, #tpu.memory_space<vmem>>, vector<2x10xf32>,
    %c2 = arith.constant 2 : index
    %c0_40 = arith.constant 0 : index
    %c0_41 = arith.constant 0 : index
    %47 = vector.load %arg2[%c2, %c0_40, %c0_41] : memref<4x2x1408xbf16, #tpu.memory_space<vmem>>, vector<1x2x1408xbf16>
    %48 = vector.shape_cast %47 : vector<1x2x1408xbf16> to vector<2x1408xbf16>
    %c0_42 = arith.constant 0 : index
    %c0_43 = arith.constant 0 : index
    %49 = vector.load %arg3[%c0_42, %c0_43] : memref<1408x55xbf16, #tpu.memory_space<vmem>>, vector<1408x55xbf16>
    %cst_44 = arith.constant dense<0.000000e+00> : vector<2x55xf32>
    %50 = tpu.matmul %48, %49, %cst_44 {dimension_numbers = #tpu.dot_dimension_numbers<[1], [0], [0], [1], [0, 0, 1, 1], [], []>} : vector<2x1408xbf16>, vector<1408x55xbf16>, vector<2x55xf32> -> vector<2x55xf32>
    %c0_45 = arith.constant 0 : index
    %c0_46 = arith.constant 0 : index
    %51 = vector.load %arg4[%c0_45, %c0_46] : memref<1x55xf32, #tpu.memory_space<vmem>>, vector<1x55xf32>
    %52 = vector.broadcast %51 : vector<1x55xf32> to vector<2x55xf32>
    %53 = arith.addf %50, %52 : vector<2x55xf32>
    %54 = math.tanh %53 : vector<2x55xf32>
    %55 = arith.truncf %54 : vector<2x55xf32> to vector<2x55xbf16>
    %c0_47 = arith.constant 0 : index
    %c0_48 = arith.constant 0 : index
    %56 = vector.load %arg5[%c0_47, %c0_48] : memref<55x61xbf16, #tpu.memory_space<vmem>>, vector<55x61xbf16>
    %cst_49 = arith.constant dense<0.000000e+00> : vector<2x61xf32>
    %57 = tpu.matmul %55, %56, %cst_49 {dimension_numbers = #tpu.dot_dimension_numbers<[1], [0], [0], [1], [0, 0, 1, 1], [], []>} : vector<2x55xbf16>, vector<55x61xbf16>, vector<2x61xf32> -> vector<2x61xf32>
    %c0_50 = arith.constant 0 : index
    %c0_51 = arith.constant 0 : index
    %58 = vector.load %arg6[%c0_50, %c0_51] : memref<1x61xf32, #tpu.memory_space<vmem>>, vector<1x61xf32>
    %59 = vector.broadcast %58 : vector<1x61xf32> to vector<2x61xf32>
    %60 = arith.addf %57, %59 : vector<2x61xf32>
    %61 = math.tanh %60 : vector<2x61xf32>
    %c0_52 = arith.constant 0 : index
    %c0_53 = arith.constant 0 : index
    %62 = vector.load %arg9[%c0_52, %c0_53] : memref<2x10xf32, #tpu.memory_space<vmem>>, vector<2x10xf32>
    %63 = arith.truncf %61 : vector<2x61xf32> to vector<2x61xbf16>
    %c2_54 = arith.constant 2 : index
    %c0_55 = arith.constant 0 : index
    %c0_56 = arith.constant 0 : index
    %64 = vector.load %arg7[%c2_54, %c0_55, %c0_56] : memref<4x61x10xbf16, #tpu.memory_space<vmem>>, vector<1x61x10xbf16>
    %65 = vector.shape_cast %64 : vector<1x61x10xbf16> to vector<61x10xbf16>
    %cst_57 = arith.constant dense<0.000000e+00> : vector<2x10xf32>
    %66 = tpu.matmul %63, %65, %cst_57 {dimension_numbers = #tpu.dot_dimension_numbers<[1], [0], [0], [1], [0, 0, 1, 1], [], []>} : vector<2x61xbf16>, vector<61x10xbf16>, vector<2x10xf32> -> vector<2x10xf32>
    %67 = arith.addf %62, %66 : vector<2x10xf32>
    %c0_58 = arith.constant 0 : index
    %c0_59 = arith.constant 0 : index
    %68 = vector.load %arg9[%c0_58, %c0_59] : memref<2x10xf32, #tpu.memory_space<vmem>>, vector<2x10xf32>
    tpu.vector_store %arg9[%c0_58, %c0_59], %67 {strides = array<i32>} : memref<2x10xf32, #tpu.memory_space<vmem>>, vector<2x10xf32>,
    %c3 = arith.constant 3 : index
    %c0_60 = arith.constant 0 : index
    %c0_61 = arith.constant 0 : index
    %69 = vector.load %arg2[%c3, %c0_60, %c0_61] : memref<4x2x1408xbf16, #tpu.memory_space<vmem>>, vector<1x2x1408xbf16>
    %70 = vector.shape_cast %69 : vector<1x2x1408xbf16> to vector<2x1408xbf16>
    %c0_62 = arith.constant 0 : index
    %c0_63 = arith.constant 0 : index
    %71 = vector.load %arg3[%c0_62, %c0_63] : memref<1408x55xbf16, #tpu.memory_space<vmem>>, vector<1408x55xbf16>
    %cst_64 = arith.constant dense<0.000000e+00> : vector<2x55xf32>
    %72 = tpu.matmul %70, %71, %cst_64 {dimension_numbers = #tpu.dot_dimension_numbers<[1], [0], [0], [1], [0, 0, 1, 1], [], []>} : vector<2x1408xbf16>, vector<1408x55xbf16>, vector<2x55xf32> -> vector<2x55xf32>
    %c0_65 = arith.constant 0 : index
    %c0_66 = arith.constant 0 : index
    %73 = vector.load %arg4[%c0_65, %c0_66] : memref<1x55xf32, #tpu.memory_space<vmem>>, vector<1x55xf32>
    %74 = vector.broadcast %73 : vector<1x55xf32> to vector<2x55xf32>
    %75 = arith.addf %72, %74 : vector<2x55xf32>
    %76 = math.tanh %75 : vector<2x55xf32>
    %77 = arith.truncf %76 : vector<2x55xf32> to vector<2x55xbf16>
    %c0_67 = arith.constant 0 : index
    %c0_68 = arith.constant 0 : index
    %78 = vector.load %arg5[%c0_67, %c0_68] : memref<55x61xbf16, #tpu.memory_space<vmem>>, vector<55x61xbf16>
    %cst_69 = arith.constant dense<0.000000e+00> : vector<2x61xf32>
    %79 = tpu.matmul %77, %78, %cst_69 {dimension_numbers = #tpu.dot_dimension_numbers<[1], [0], [0], [1], [0, 0, 1, 1], [], []>} : vector<2x55xbf16>, vector<55x61xbf16>, vector<2x61xf32> -> vector<2x61xf32>
    %c0_70 = arith.constant 0 : index
    %c0_71 = arith.constant 0 : index
    %80 = vector.load %arg6[%c0_70, %c0_71] : memref<1x61xf32, #tpu.memory_space<vmem>>, vector<1x61xf32>
    %81 = vector.broadcast %80 : vector<1x61xf32> to vector<2x61xf32>
    %82 = arith.addf %79, %81 : vector<2x61xf32>
    %83 = math.tanh %82 : vector<2x61xf32>
    %c0_72 = arith.constant 0 : index
    %c0_73 = arith.constant 0 : index
    %84 = vector.load %arg9[%c0_72, %c0_73] : memref<2x10xf32, #tpu.memory_space<vmem>>, vector<2x10xf32>
    %85 = arith.truncf %83 : vector<2x61xf32> to vector<2x61xbf16>
    %c3_74 = arith.constant 3 : index
    %c0_75 = arith.constant 0 : index
    %c0_76 = arith.constant 0 : index
    %86 = vector.load %arg7[%c3_74, %c0_75, %c0_76] : memref<4x61x10xbf16, #tpu.memory_space<vmem>>, vector<1x61x10xbf16>
    %87 = vector.shape_cast %86 : vector<1x61x10xbf16> to vector<61x10xbf16>
    %cst_77 = arith.constant dense<0.000000e+00> : vector<2x10xf32>
    %88 = tpu.matmul %85, %87, %cst_77 {dimension_numbers = #tpu.dot_dimension_numbers<[1], [0], [0], [1], [0, 0, 1, 1], [], []>} : vector<2x61xbf16>, vector<61x10xbf16>, vector<2x10xf32> -> vector<2x10xf32>
    %89 = arith.addf %84, %88 : vector<2x10xf32>
    %c0_78 = arith.constant 0 : index
    %c0_79 = arith.constant 0 : index
    %90 = vector.load %arg9[%c0_78, %c0_79] : memref<2x10xf32, #tpu.memory_space<vmem>>, vector<2x10xf32>
    tpu.vector_store %arg9[%c0_78, %c0_79], %89 {strides = array<i32>} : memref<2x10xf32, #tpu.memory_space<vmem>>, vector<2x10xf32>,
    %c10_i32 = arith.constant 10 : i32
    %91 = arith.cmpi eq, %arg1, %c10_i32 : i32
    %92 = arith.extui %91 : i1 to i32
    %c0_i32_80 = arith.constant 0 : i32
    %93 = arith.cmpi ne, %92, %c0_i32_80 : i32
    scf.if %93 {
      %c0_81 = arith.constant 0 : index
      %c0_82 = arith.constant 0 : index
      %94 = vector.load %arg9[%c0_81, %c0_82] : memref<2x10xf32, #tpu.memory_space<vmem>>, vector<2x10xf32>
      %cst_83 = arith.constant dense<0xFF800000> : vector<2xf32>
      %95 = vector.multi_reduction <maximumf>, %94, %cst_83 [1] : vector<2x10xf32> to vector<2xf32>
      %96 = vector.shape_cast %95 : vector<2xf32> to vector<2x1xf32>
      %97 = vector.broadcast %96 : vector<2x1xf32> to vector<2x10xf32>
      %98 = arith.subf %94, %97 : vector<2x10xf32>
      %99 = math.exp %98 : vector<2x10xf32>
      %cst_84 = arith.constant dense<0.000000e+00> : vector<2xf32>
      %100 = vector.multi_reduction <add>, %99, %cst_84 [1] : vector<2x10xf32> to vector<2xf32>
      %101 = vector.shape_cast %100 : vector<2xf32> to vector<2x1xf32>
      %102 = math.log %101 : vector<2x1xf32>
      %103 = vector.broadcast %102 : vector<2x1xf32> to vector<2x10xf32>
      %104 = arith.subf %98, %103 : vector<2x10xf32>
      %c0_85 = arith.constant 0 : index
      %c0_86 = arith.constant 0 : index
      %105 = vector.load %arg8[%c0_85, %c0_86] : memref<2x10xf32, #tpu.memory_space<vmem>>, vector<2x10xf32>
      tpu.vector_store %arg8[%c0_85, %c0_86], %104 {strides = array<i32>} : memref<2x10xf32, #tpu.memory_space<vmem>>, vector<2x10xf32>,
    } else {
    }
    return
  }
  func.func @transform_0(%arg0: i32, %arg1: i32) -> (i32, i32, i32) {
    %c0_i32 = arith.constant 0 : i32
    %c0_i32_0 = arith.constant 0 : i32
    return %arg1, %arg0, %c0_i32 : i32, i32, i32
  }
  func.func @transform_1(%arg0: i32, %arg1: i32) -> (i32, i32) {
    %c0_i32 = arith.constant 0 : i32
    %c0_i32_0 = arith.constant 0 : i32
    %c0_i32_1 = arith.constant 0 : i32
    return %c0_i32, %c0_i32_0 : i32, i32
  }
  func.func @transform_2(%arg0: i32, %arg1: i32) -> (i32, i32) {
    %c0_i32 = arith.constant 0 : i32
    %c0_i32_0 = arith.constant 0 : i32
    %c0_i32_1 = arith.constant 0 : i32
    return %c0_i32, %c0_i32_0 : i32, i32
  }
  func.func @transform_3(%arg0: i32, %arg1: i32) -> (i32, i32) {
    %c0_i32 = arith.constant 0 : i32
    %c0_i32_0 = arith.constant 0 : i32
    %c0_i32_1 = arith.constant 0 : i32
    return %c0_i32, %c0_i32_0 : i32, i32
  }
  func.func @transform_4(%arg0: i32, %arg1: i32) -> (i32, i32) {
    %c0_i32 = arith.constant 0 : i32
    %c0_i32_0 = arith.constant 0 : i32
    %c0_i32_1 = arith.constant 0 : i32
    return %c0_i32, %c0_i32_0 : i32, i32
  }
  func.func @transform_5(%arg0: i32, %arg1: i32) -> (i32, i32, i32) {
    %c0_i32 = arith.constant 0 : i32
    %c0_i32_0 = arith.constant 0 : i32
    %c0_i32_1 = arith.constant 0 : i32
    return %arg1, %c0_i32, %c0_i32_0 : i32, i32, i32
  }
  func.func @transform_6(%arg0: i32, %arg1: i32) -> (i32, i32) {
    %c0_i32 = arith.constant 0 : i32
    %c0_i32_0 = arith.constant 0 : i32
    return %arg0, %c0_i32 : i32, i32
  }
}

</mosaic_0001>

<llo_original>
// kernel: forward.2
$region0: #{forward.2}
  #allocation0 [shape = 'u32[]', space=smem, size = 0x4, offset = 0x4, fixed_abs, tag = 'smem constant byte address 0x4 - core index']
  #allocation1 [shape = 'u32[144,128]{1,0:T(1,128)}', space=vmem, size = 0x12000, scoped, tag = 'internal scratch']
  %s0 = inlined_call_operand.vmem [shape: bf16[700,27], index: 0, kind: input, shape index: {}]
  %s1 = inlined_call_operand.vmem [shape: bf16[27,22], index: 1, kind: input, shape index: {}]
  %s2 = inlined_call_operand.vmem [shape: f32[1,22], index: 2, kind: input, shape index: {}]
  %s3 = inlined_call_operand.vmem [shape: bf16[700,22], index: 3, kind: output, shape index: {}]
  %s4 = sld [smem:[#allocation0]]
  $region89: #{forward.2} parent=0
    _
  %s6 = ssub.s32 1, %s4
  %s7 = scalar_select 0, %s6, %s4
  $region1: #{forward.2} parent=0
    #allocation2 [shape = 'u8[262144]{0}', space=vmem, size = 0x40000, scoped, tag = 'output window, operand 0']
    loop: start=0, step=1, limit=4
    $region2: #{forward.2} parent=1 // loop_pre_header
      _
    $region3: #{forward.2} parent=1 // loop_header
      %s9 = sphi 0, %s13
      %p10 = scmp.ge.s32.totalorder %s9, 4
      %s19 = sphi 0, %s21
      %s22 = sphi 0, %s19
      %s23 = sphi 0, %s22
      %s39 = sphi 0, %s23
      %s43 = sphi 0, %s43
      %s45 = sphi 0, %s43
      %s46 = sphi 0, %s45
      %s60 = sphi 0, %s46
      %s64 = sphi 0, %s64
      %s66 = sphi 0, %s64
      %s67 = sphi 0, %s66
      %s81 = sphi 0, %s67
      %s87 = sphi 0, %s89
      %s90 = sphi 0, %s87
      %s91 = sphi 0, %s90
      %s107 = sphi 0, %s91
    $region4: #{forward.2} parent=1 // loop_header_branch
      %12 = sbr.rel (%p10) target = $region8
    $region5: #{forward.2} parent=1 // loop_body
      %s14 = ssub.s32 %s9, 1
      %s15 = ssub.s32 %s9, 2
      %s16 = sadd.s32 %s9, 1
      %s17 = ssub.s32 %s9, %s16
      %p18 = scmp.eq.s32.totalorder %s17, 0
      %s20 = sadd.s32 %s19, 1
      %s21 = scalar_select %p18, %s19, %s20
      %p24 = pneg %p18
      %p25 = scmp.eq.s32.totalorder %s9, 1
      %p26 = por %p24, %p25
      %p27 = scmp.ne.s32.totalorder %s19, %s22
      %p28 = scmp.eq.s32.totalorder %s9, 0
      %p29 = por %p27, %p28
      %p30 = scmp.ne.s32.totalorder %s19, %s22
      %p31 = scmp.eq.s32.totalorder %s14, 1
      %p32 = por %p30, %p31
      %p33 = scmp.ne.s32.totalorder %s22, %s23
      %p34 = scmp.eq.s32.totalorder %s14, 0
      %p35 = por %p33, %p34
      %p36 = scmp.ne.s32.totalorder %s22, %s23
      %p37 = scmp.eq.s32.totalorder %s15, 1
      %p38 = por %p36, %p37
      %p40 = scmp.ne.s32.totalorder %s23, %s39
      %p41 = scmp.eq.s32.totalorder %s15, 0
      %p42 = por %p40, %p41
      %s44 = sadd.s32 %s43, 1
      %p47 = scmp.eq.s32.totalorder %s9, 1
      %p48 = scmp.ne.s32.totalorder %s43, %s45
      %p49 = scmp.eq.s32.totalorder %s9, 0
      %p50 = por %p48, %p49
      %p51 = scmp.ne.s32.totalorder %s43, %s45
      %p52 = scmp.eq.s32.totalorder %s14, 1
      %p53 = por %p51, %p52
      %p54 = scmp.ne.s32.totalorder %s45, %s46
      %p55 = scmp.eq.s32.totalorder %s14, 0
      %p56 = por %p54, %p55
      %p57 = scmp.ne.s32.totalorder %s45, %s46
      %p58 = scmp.eq.s32.totalorder %s15, 1
      %p59 = por %p57, %p58
      %p61 = scmp.ne.s32.totalorder %s46, %s60
      %p62 = scmp.eq.s32.totalorder %s15, 0
      %p63 = por %p61, %p62
      %s65 = sadd.s32 %s64, 1
      %p68 = scmp.eq.s32.totalorder %s9, 1
      %p69 = scmp.ne.s32.totalorder %s64, %s66
      %p70 = scmp.eq.s32.totalorder %s9, 0
      %p71 = por %p69, %p70
      %p72 = scmp.ne.s32.totalorder %s64, %s66
      %p73 = scmp.eq.s32.totalorder %s14, 1
      %p74 = por %p72, %p73
      %p75 = scmp.ne.s32.totalorder %s66, %s67
      %p76 = scmp.eq.s32.totalorder %s14, 0
      %p77 = por %p75, %p76
      %p78 = scmp.ne.s32.totalorder %s66, %s67
      %p79 = scmp.eq.s32.totalorder %s15, 1
      %p80 = por %p78, %p79
      %p82 = scmp.ne.s32.totalorder %s67, %s81
      %p83 = scmp.eq.s32.totalorder %s15, 0
      %p84 = por %p82, %p83
      %s85 = ssub.s32 %s9, %s16
      %p86 = scmp.eq.s32.totalorder %s85, 0
      %s88 = sadd.s32 %s87, 1
      %s89 = scalar_select %p86, %s87, %s88
      %p92 = pneg %p86
      %p93 = scmp.eq.s32.totalorder %s9, 1
      %p94 = por %p92, %p93
      %p95 = scmp.ne.s32.totalorder %s87, %s90
      %p96 = scmp.eq.s32.totalorder %s9, 0
      %p97 = por %p95, %p96
      %p98 = scmp.ne.s32.totalorder %s87, %s90
      %p99 = scmp.eq.s32.totalorder %s14, 1
      %p100 = por %p98, %p99
      %p101 = scmp.ne.s32.totalorder %s90, %s91
      %p102 = scmp.eq.s32.totalorder %s14, 0
      %p103 = por %p101, %p102
      %p104 = scmp.ne.s32.totalorder %s90, %s91
      %p105 = scmp.eq.s32.totalorder %s15, 1
      %p106 = por %p104, %p105
      %p108 = scmp.ne.s32.totalorder %s91, %s107
      %p109 = scmp.eq.s32.totalorder %s15, 0
      %p110 = por %p108, %p109
      %p111 = scmp.le.s32.totalorder 1, %s9
      %p112 = scmp.lt.s32.totalorder %s9, 3
      %p113 = pnand %p111, %p112
      %p114 = pneg %p113
      // Predicated region
      $region9: #{forward.2} parent=5 // pred_check
        _
      $region10: #{forward.2} parent=5 // pred_check_branch
        %116 = sbr.rel (%p113) target = $region12
      $region11: #{forward.2} parent=5 // pred_region
        %s117 = ssub.s32 %s9, 1
        // Predicated region
        $region13: #{forward.2} parent=11 // pred_check
          %p118 = pneg %p56
        $region14: #{forward.2} parent=11 // pred_check_branch
          %120 = sbr.rel (%p118) target = $region16
        $region15: #{forward.2} parent=11 // pred_region
          _
        $region16: #{forward.2} parent=11 // pred_fallthru
          _
        // Predicated region
        $region17: #{forward.2} parent=11 // pred_check
          %p121 = pneg %p77
        $region18: #{forward.2} parent=11 // pred_check_branch
          %123 = sbr.rel (%p121) target = $region20
        $region19: #{forward.2} parent=11 // pred_region
          _
        $region20: #{forward.2} parent=11 // pred_fallthru
          _
      $region12: #{forward.2} parent=5 // pred_fallthru
        _
      %p124 = scmp.lt.s32.totalorder %s9, 2
      // Predicated region
      $region21: #{forward.2} parent=5 // pred_check
        %p125 = pneg %p124
      $region22: #{forward.2} parent=5 // pred_check_branch
        %127 = sbr.rel (%p125) target = $region24
      $region23: #{forward.2} parent=5 // pred_region
        // Predicated region
        $region25: #{forward.2} parent=23 // pred_check
          %p128 = pneg %p29
        $region26: #{forward.2} parent=23 // pred_check_branch
          %130 = sbr.rel (%p128) target = $region28
        $region27: #{forward.2} parent=23 // pred_region
          %s131 = smul.u32 64, %s9
          %s132 = ssub.s32 88, %s131
          %p133 = scmp.lt.s32.totalorder %s132, 64
          %s134 = scalar_select %p133, %s132, 64
          %s135 = smul.u32 64, %s134
          %p136 = scmp.lt.s32.totalorder %s131, 87
          %s137 = scalar_select %p136, %s131, 87
          %s138 = smul.addr %s137, 4
          %s139 = scalar_lea.vmem %s0, %s138
          %s140 = smul.u32 64, %s9
          %s141 = ssub.s32 88, %s140
          %p142 = scmp.lt.s32.totalorder %s141, 64
          %s143 = scalar_select %p142, %s141, 64
          %s144 = smul.u32 64, %s143
        $region28: #{forward.2} parent=23 // pred_fallthru
          _
      $region24: #{forward.2} parent=5 // pred_fallthru
        _
      %p145 = scmp.le.s32.totalorder 1, %s9
      %p146 = scmp.lt.s32.totalorder %s9, 3
      %p147 = pnand %p145, %p146
      %p148 = pneg %p147
      // Predicated region
      $region29: #{forward.2} parent=5 // pred_check
        _
      $region30: #{forward.2} parent=5 // pred_check_branch
        %150 = sbr.rel (%p147) target = $region32
      $region31: #{forward.2} parent=5 // pred_region
        %s151 = ssub.s32 %s9, 1
        %s152 = smul.u32 64, %s14
        %s153 = ssub.s32 88, %s152
        %p154 = scmp.lt.s32.totalorder %s153, 64
        %s155 = scalar_select %p154, %s153, 64
        %s156 = smul.u32 64, %s155
        %p157 = scmp.lt.s32.totalorder %s152, 87
        %s158 = scalar_select %p157, %s152, 87
        %s159 = smul.addr %s158, 4
        %s160 = scalar_lea.vmem %s0, %s159
        %p161 = pneg %p35
        %p162 = pneg %p32
        %p163 = pneg %p56
        %p164 = pneg %p53
        %p165 = pneg %p77
        %p166 = pneg %p74
        %p167 = pneg %p103
        %p168 = pneg %p100
        %s169 = sand.u32 %s90, 1
        %s170 = sand.u32 %s90, 1
        %s171 = smul.addr %s170, 256
        %s172 = scalar_lea.vmem [#allocation2], %s171
        %s173 = smul.u32 64, %s14
        %s174 = ssub.s32 88, %s173
        %p175 = scmp.lt.s32.totalorder %s174, 64
        %s176 = scalar_select %p175, %s174, 64
        %s177 = smul.u32 64, %s176
        %p178 = scmp.lt.s32.totalorder %s173, 87
        %s179 = scalar_select %p178, %s173, 87
        %s180 = smul.addr %s179, 4
        %s181 = scalar_lea.vmem %s0, %s180
        %s182 = smul.u32 64, %s14
        %s183 = ssub.s32 88, %s182
        %p184 = scmp.lt.s32.totalorder %s183, 64
        %s185 = scalar_select %p184, %s183, 64
        %s186 = smul.u32 64, %s185
        %s187 = smul.u32 64, %s14
        %s188 = ssub.s32 88, %s187
        %p189 = scmp.lt.s32.totalorder %s188, 64
        %s190 = scalar_select %p189, %s188, 64
        %s191 = smul.u32 64, %s190
        %v193 = vld [vmem:[%s181] sm:$0xf]
        %v194 = vld [vmem:[%s181 + $0x4] sm:$0xf]
        %v195 = vld [vmem:[%s181 + $0x8] sm:$0xf]
        %v196 = vld [vmem:[%s181 + $0xc] sm:$0xf]
        %v197 = vld [vmem:[%s181 + $0x10] sm:$0xf]
        %v198 = vld [vmem:[%s181 + $0x14] sm:$0xf]
        %v199 = vld [vmem:[%s181 + $0x18] sm:$0xf]
        %v200 = vld [vmem:[%s181 + $0x1c] sm:$0xf]
        %v201 = vld [vmem:[%s181 + $0x20] sm:$0xf]
        %v202 = vld [vmem:[%s181 + $0x24] sm:$0xf]
        %v203 = vld [vmem:[%s181 + $0x28] sm:$0xf]
        %v204 = vld [vmem:[%s181 + $0x2c] sm:$0xf]
        %v205 = vld [vmem:[%s181 + $0x30] sm:$0xf]
        %v206 = vld [vmem:[%s181 + $0x34] sm:$0xf]
        %v207 = vld [vmem:[%s181 + $0x38] sm:$0xf]
        %v208 = vld [vmem:[%s181 + $0x3c] sm:$0xf]
        %v209 = vld [vmem:[%s181 + $0x40] sm:$0xf]
        %v210 = vld [vmem:[%s181 + $0x44] sm:$0xf]
        %v211 = vld [vmem:[%s181 + $0x48] sm:$0xf]
        %v212 = vld [vmem:[%s181 + $0x4c] sm:$0xf]
        %v213 = vld [vmem:[%s181 + $0x50] sm:$0xf]
        %v214 = vld [vmem:[%s181 + $0x54] sm:$0xf]
        %v215 = vld [vmem:[%s181 + $0x58] sm:$0xf]
        %v216 = vld [vmem:[%s181 + $0x5c] sm:$0xf]
        %v217 = vld [vmem:[%s181 + $0x60] sm:$0xf]
        %v218 = vld [vmem:[%s181 + $0x64] sm:$0xf]
        %v219 = vld [vmem:[%s181 + $0x68] sm:$0xf]
        %v220 = vld [vmem:[%s181 + $0x6c] sm:$0xf]
        %v221 = vld [vmem:[%s181 + $0x70] sm:$0xf]
        %v222 = vld [vmem:[%s181 + $0x74] sm:$0xf]
        %v223 = vld [vmem:[%s181 + $0x78] sm:$0xf]
        %v224 = vld [vmem:[%s181 + $0x7c] sm:$0xf]
        %v225 = vld [vmem:[%s181 + $0x80] sm:$0xf]
        %v226 = vld [vmem:[%s181 + $0x84] sm:$0xf]
        %v227 = vld [vmem:[%s181 + $0x88] sm:$0xf]
        %v228 = vld [vmem:[%s181 + $0x8c] sm:$0xf]
        %v229 = vld [vmem:[%s181 + $0x90] sm:$0xf]
        %v230 = vld [vmem:[%s181 + $0x94] sm:$0xf]
        %v231 = vld [vmem:[%s181 + $0x98] sm:$0xf]
        %v232 = vld [vmem:[%s181 + $0x9c] sm:$0xf]
        %v233 = vld [vmem:[%s181 + $0xa0] sm:$0xf]
        %v234 = vld [vmem:[%s181 + $0xa4] sm:$0xf]
        %v235 = vld [vmem:[%s181 + $0xa8] sm:$0xf]
        %v236 = vld [vmem:[%s181 + $0xac] sm:$0xf]
        %v237 = vld [vmem:[%s181 + $0xb0] sm:$0xf]
        %v238 = vld [vmem:[%s181 + $0xb4] sm:$0xf]
        %v239 = vld [vmem:[%s181 + $0xb8] sm:$0xf]
        %v240 = vld [vmem:[%s181 + $0xbc] sm:$0xf]
        %v241 = vld [vmem:[%s181 + $0xc0] sm:$0xf]
        %v242 = vld [vmem:[%s181 + $0xc4] sm:$0xf]
        %v243 = vld [vmem:[%s181 + $0xc8] sm:$0xf]
        %v244 = vld [vmem:[%s181 + $0xcc] sm:$0xf]
        %v245 = vld [vmem:[%s181 + $0xd0] sm:$0xf]
        %v246 = vld [vmem:[%s181 + $0xd4] sm:$0xf]
        %v247 = vld [vmem:[%s181 + $0xd8] sm:$0xf]
        %v248 = vld [vmem:[%s181 + $0xdc] sm:$0xf]
        %v249 = vld [vmem:[%s181 + $0xe0] sm:$0xf]
        %v250 = vld [vmem:[%s181 + $0xe4] sm:$0xf]
        %v251 = vld [vmem:[%s181 + $0xe8] sm:$0xf]
        %v252 = vld [vmem:[%s181 + $0xec] sm:$0xf]
        %v253 = vld [vmem:[%s181 + $0xf0] sm:$0xf]
        %v254 = vld [vmem:[%s181 + $0xf4] sm:$0xf]
        %v255 = vld [vmem:[%s181 + $0xf8] sm:$0xf]
        %v256 = vld [vmem:[%s181 + $0xfc] sm:$0xf]
        %v257 = vld [vmem:[%s1] sm:$0xf]
        %v258 = vld [vmem:[%s1 + $0x4] sm:$0xf]
        %v259 = vld [vmem:[%s1 + $0x8] sm:$0xf]
        %v260 = vld [vmem:[%s1 + $0xc] sm:$0x3]
        %v261 = vld [vmem:[%s2] sm:$0x1]
        %v263 = vlaneseq
        %v264 = vshrl.u32 %v263, 7
        %v265 = vsub.s32 0, %v264
        %v266 = vrot.slane %v261, %v265
        %v332 = vunpack.c.l.b16 %v193
        %v333 = vunpack.c.l.b16 %v194
        %v334 = vunpack.c.l.b16 %v195
        %v335 = vunpack.c.l.b16 %v196
        %v336 = vunpack.c.l.b16 %v197
        %v337 = vunpack.c.l.b16 %v198
        %v338 = vunpack.c.l.b16 %v199
        %v339 = vunpack.c.l.b16 %v200
        %v340 = vunpack.c.l.b16 %v201
        %v341 = vunpack.c.l.b16 %v202
        %v342 = vunpack.c.l.b16 %v203
        %v343 = vunpack.c.l.b16 %v204
        %v344 = vunpack.c.l.b16 %v205
        %v345 = vunpack.c.l.b16 %v206
        %v346 = vunpack.c.l.b16 %v207
        %v347 = vunpack.c.l.b16 %v208
        %v348 = vunpack.c.l.b16 %v209
        %v349 = vunpack.c.l.b16 %v210
        %v350 = vunpack.c.l.b16 %v211
        %v351 = vunpack.c.l.b16 %v212
        %v352 = vunpack.c.l.b16 %v213
        %v353 = vunpack.c.l.b16 %v214
        %v354 = vunpack.c.l.b16 %v215
        %v355 = vunpack.c.l.b16 %v216
        %v356 = vunpack.c.l.b16 %v217
        %v357 = vunpack.c.l.b16 %v218
        %v358 = vunpack.c.l.b16 %v219
        %v359 = vunpack.c.l.b16 %v220
        %v360 = vunpack.c.l.b16 %v221
        %v361 = vunpack.c.l.b16 %v222
        %v362 = vunpack.c.l.b16 %v223
        %v363 = vunpack.c.l.b16 %v224
        %v364 = vunpack.c.l.b16 %v225
        %v365 = vunpack.c.l.b16 %v226
        %v366 = vunpack.c.l.b16 %v227
        %v367 = vunpack.c.l.b16 %v228
        %v368 = vunpack.c.l.b16 %v229
        %v369 = vunpack.c.l.b16 %v230
        %v370 = vunpack.c.l.b16 %v231
        %v371 = vunpack.c.l.b16 %v232
        %v372 = vunpack.c.l.b16 %v233
        %v373 = vunpack.c.l.b16 %v234
        %v374 = vunpack.c.l.b16 %v235
        %v375 = vunpack.c.l.b16 %v236
        %v376 = vunpack.c.l.b16 %v237
        %v377 = vunpack.c.l.b16 %v238
        %v378 = vunpack.c.l.b16 %v239
        %v379 = vunpack.c.l.b16 %v240
        %v380 = vunpack.c.l.b16 %v241
        %v381 = vunpack.c.l.b16 %v242
        %v382 = vunpack.c.l.b16 %v243
        %v383 = vunpack.c.l.b16 %v244
        %v384 = vunpack.c.l.b16 %v245
        %v385 = vunpack.c.l.b16 %v246
        %v386 = vunpack.c.l.b16 %v247
        %v387 = vunpack.c.l.b16 %v248
        %v388 = vunpack.c.l.b16 %v249
        %v389 = vunpack.c.l.b16 %v250
        %v390 = vunpack.c.l.b16 %v251
        %v391 = vunpack.c.l.b16 %v252
        %v392 = vunpack.c.l.b16 %v253
        %v393 = vunpack.c.l.b16 %v254
        %v394 = vunpack.c.l.b16 %v255
        %v395 = vunpack.c.l.b16 %v256
        %v396 = vpack.c.b16 %v333, %v332
        %v397 = vpack.c.b16 %v335, %v334
        %v398 = vpack.c.b16 %v337, %v336
        %v399 = vpack.c.b16 %v339, %v338
        %v400 = vpack.c.b16 %v341, %v340
        %v401 = vpack.c.b16 %v343, %v342
        %v402 = vpack.c.b16 %v345, %v344
        %v403 = vpack.c.b16 %v347, %v346
        %v404 = vpack.c.b16 %v349, %v348
        %v405 = vpack.c.b16 %v351, %v350
        %v406 = vpack.c.b16 %v353, %v352
        %v407 = vpack.c.b16 %v355, %v354
        %v408 = vpack.c.b16 %v357, %v356
        %v409 = vpack.c.b16 %v359, %v358
        %v410 = vpack.c.b16 %v361, %v360
        %v411 = vpack.c.b16 %v363, %v362
        %v412 = vpack.c.b16 %v365, %v364
        %v413 = vpack.c.b16 %v367, %v366
        %v414 = vpack.c.b16 %v369, %v368
        %v415 = vpack.c.b16 %v371, %v370
        %v416 = vpack.c.b16 %v373, %v372
        %v417 = vpack.c.b16 %v375, %v374
        %v418 = vpack.c.b16 %v377, %v376
        %v419 = vpack.c.b16 %v379, %v378
        %v420 = vpack.c.b16 %v381, %v380
        %v421 = vpack.c.b16 %v383, %v382
        %v422 = vpack.c.b16 %v385, %v384
        %v423 = vpack.c.b16 %v387, %v386
        %v424 = vpack.c.b16 %v389, %v388
        %v425 = vpack.c.b16 %v391, %v390
        %v426 = vpack.c.b16 %v393, %v392
        %v427 = vpack.c.b16 %v395, %v394
        %v432 = vunpack.c.l.b16 %v257
        %v433 = vunpack.c.l.b16 %v258
        %v434 = vunpack.c.l.b16 %v259
        %v435 = vunpack.c.l.b16 %v260
        %v436 = vpack.c.b16 %v433, %v432
        %v437 = vpack.c.b16 %v435, %v434
        %vm439 = vcmask 220160
        %v441 = vsel %vm439, %v396, 0
        %v444 = vsel %vm439, %v397, 0
        %v447 = vsel %vm439, %v398, 0
        %v450 = vsel %vm439, %v399, 0
        %v453 = vsel %vm439, %v400, 0
        %v456 = vsel %vm439, %v401, 0
        %v459 = vsel %vm439, %v402, 0
        %v462 = vsel %vm439, %v403, 0
        %v465 = vsel %vm439, %v404, 0
        %v468 = vsel %vm439, %v405, 0
        %v471 = vsel %vm439, %v406, 0
        %v474 = vsel %vm439, %v407, 0
        %v477 = vsel %vm439, %v408, 0
        %v480 = vsel %vm439, %v409, 0
        %v483 = vsel %vm439, %v410, 0
        %v486 = vsel %vm439, %v411, 0
        %v489 = vsel %vm439, %v412, 0
        %v492 = vsel %vm439, %v413, 0
        %v495 = vsel %vm439, %v414, 0
        %v498 = vsel %vm439, %v415, 0
        %v501 = vsel %vm439, %v416, 0
        %v504 = vsel %vm439, %v417, 0
        %v507 = vsel %vm439, %v418, 0
        %v510 = vsel %vm439, %v419, 0
        %v513 = vsel %vm439, %v420, 0
        %v516 = vsel %vm439, %v421, 0
        %v519 = vsel %vm439, %v422, 0
        %v522 = vsel %vm439, %v423, 0
        %v525 = vsel %vm439, %v424, 0
        %v528 = vsel %vm439, %v425, 0
        %v531 = vsel %vm439, %v426, 0
        %v534 = vsel %vm439, %v427, 0
        %vm536 = vcmask 1044480
        %vm537 = vcmask 1045504
        %v538 = vsel %vm536, 4294967295, 65535
        %v539 = vsel %vm537, %v538, 0
        %v541 = vand.u32 %v437, %v539
        %543 = vmatprep.subr.bf16.mxu0 0
        %544 = vmatpush1.bf16.msra.mxu0 %v436
        %545 = vmatprep.subr.bf16.mxu0 0
        %546 = vmatpush1.bf16.msra.mxu0 %v541
        %547 = vmatprep.subr.bf16.mxu0 0
        %548 = vmatpush1.bf16.msra.mxu0 0
        %549 = vmatprep.subr.bf16.mxu0 0
        %550 = vmatpush1.bf16.msra.mxu0 0
        %551 = vmatprep.subr.bf16.mxu0 0
        %552 = vmatpush1.bf16.msra.mxu0 0
        %553 = vmatprep.subr.bf16.mxu0 0
        %554 = vmatpush1.bf16.msra.mxu0 0
        %555 = vmatprep.subr.bf16.mxu0 0
        %556 = vmatpush1.bf16.msra.mxu0 0
        %557 = vmatprep.subr.bf16.mxu0 0
        %558 = vmatpush1.bf16.msra.mxu0 0
        %559 = vmatprep.subr.bf16.mxu0 0
        %560 = vmatpush1.bf16.msra.mxu0 0
        %561 = vmatprep.subr.bf16.mxu0 0
        %562 = vmatpush1.bf16.msra.mxu0 0
        %563 = vmatprep.subr.bf16.mxu0 0
        %564 = vmatpush1.bf16.msra.mxu0 0
        %565 = vmatprep.subr.bf16.mxu0 0
        %566 = vmatpush1.bf16.msra.mxu0 0
        %567 = vmatprep.subr.bf16.mxu0 0
        %568 = vmatpush1.bf16.msra.mxu0 0
        %569 = vmatprep.subr.bf16.mxu0 0
        %570 = vmatpush1.bf16.msra.mxu0 0
        %571 = vmatprep.subr.bf16.mxu0 0
        %572 = vmatpush1.bf16.msra.mxu0 0
        %573 = vmatprep.subr.bf16.mxu0 0
        %574 = vmatpush1.bf16.msra.mxu0 0
        %575 = vmatprep.mubr.bf16.mxu0 0
        %576 = vmatmul.mubr.bf16.gmra.mrb[0].mxu0 %v441
        %v577 = vpop.f32.mrb[0].mxu0
        %v578 = vadd.f32 %v266, %v577
        %v579 = vpop.f32.mrb[0].mxu0
        %v580 = vpop.f32.mrb[0].mxu0
        %v581 = vadd.f32 %v266, %v580
        %v582 = vpop.f32.mrb[0].mxu0
        %583 = vmatprep.mubr.bf16.mxu0 0
        %584 = vmatmul.mubr.bf16.gmra.mrb[0].mxu0 %v444
        %v585 = vpop.f32.mrb[0].mxu0
        %v586 = vadd.f32 %v266, %v585
        %v587 = vpop.f32.mrb[0].mxu0
        %v588 = vpop.f32.mrb[0].mxu0
        %v589 = vadd.f32 %v266, %v588
        %v590 = vpop.f32.mrb[0].mxu0
        %591 = vmatprep.mubr.bf16.mxu0 0
        %592 = vmatmul.mubr.bf16.gmra.mrb[0].mxu0 %v447
        %v593 = vpop.f32.mrb[0].mxu0
        %v594 = vadd.f32 %v266, %v593
        %v595 = vpop.f32.mrb[0].mxu0
        %v596 = vpop.f32.mrb[0].mxu0
        %v597 = vadd.f32 %v266, %v596
        %v598 = vpop.f32.mrb[0].mxu0
        %599 = vmatprep.mubr.bf16.mxu0 0
        %600 = vmatmul.mubr.bf16.gmra.mrb[0].mxu0 %v450
        %v601 = vpop.f32.mrb[0].mxu0
        %v602 = vadd.f32 %v266, %v601
        %v603 = vpop.f32.mrb[0].mxu0
        %v604 = vpop.f32.mrb[0].mxu0
        %v605 = vadd.f32 %v266, %v604
        %v606 = vpop.f32.mrb[0].mxu0
        %607 = vmatprep.mubr.bf16.mxu0 0
        %608 = vmatmul.mubr.bf16.gmra.mrb[0].mxu0 %v453
        %v609 = vpop.f32.mrb[0].mxu0
        %v610 = vadd.f32 %v266, %v609
        %v611 = vpop.f32.mrb[0].mxu0
        %v612 = vpop.f32.mrb[0].mxu0
        %v613 = vadd.f32 %v266, %v612
        %v614 = vpop.f32.mrb[0].mxu0
        %615 = vmatprep.mubr.bf16.mxu0 0
        %616 = vmatmul.mubr.bf16.gmra.mrb[0].mxu0 %v456
        %v617 = vpop.f32.mrb[0].mxu0
        %v618 = vadd.f32 %v266, %v617
        %v619 = vpop.f32.mrb[0].mxu0
        %v620 = vpop.f32.mrb[0].mxu0
        %v621 = vadd.f32 %v266, %v620
        %v622 = vpop.f32.mrb[0].mxu0
        %623 = vmatprep.mubr.bf16.mxu0 0
        %624 = vmatmul.mubr.bf16.gmra.mrb[0].mxu0 %v459
        %v625 = vpop.f32.mrb[0].mxu0
        %v626 = vadd.f32 %v266, %v625
        %v627 = vpop.f32.mrb[0].mxu0
        %v628 = vpop.f32.mrb[0].mxu0
        %v629 = vadd.f32 %v266, %v628
        %v630 = vpop.f32.mrb[0].mxu0
        %631 = vmatprep.mubr.bf16.mxu0 0
        %632 = vmatmul.mubr.bf16.gmra.mrb[0].mxu0 %v462
        %v633 = vpop.f32.mrb[0].mxu0
        %v634 = vadd.f32 %v266, %v633
        %v635 = vpop.f32.mrb[0].mxu0
        %v636 = vpop.f32.mrb[0].mxu0
        %v637 = vadd.f32 %v266, %v636
        %v638 = vpop.f32.mrb[0].mxu0
        %639 = vmatprep.mubr.bf16.mxu0 0
        %640 = vmatmul.mubr.bf16.gmra.mrb[0].mxu0 %v465
        %v641 = vpop.f32.mrb[0].mxu0
        %v642 = vadd.f32 %v266, %v641
        %v643 = vpop.f32.mrb[0].mxu0
        %v644 = vpop.f32.mrb[0].mxu0
        %v645 = vadd.f32 %v266, %v644
        %v646 = vpop.f32.mrb[0].mxu0
        %647 = vmatprep.mubr.bf16.mxu0 0
        %648 = vmatmul.mubr.bf16.gmra.mrb[0].mxu0 %v468
        %v649 = vpop.f32.mrb[0].mxu0
        %v650 = vadd.f32 %v266, %v649
        %v651 = vpop.f32.mrb[0].mxu0
        %v652 = vpop.f32.mrb[0].mxu0
        %v653 = vadd.f32 %v266, %v652
        %v654 = vpop.f32.mrb[0].mxu0
        %655 = vmatprep.mubr.bf16.mxu0 0
        %656 = vmatmul.mubr.bf16.gmra.mrb[0].mxu0 %v471
        %v657 = vpop.f32.mrb[0].mxu0
        %v658 = vadd.f32 %v266, %v657
        %v659 = vpop.f32.mrb[0].mxu0
        %v660 = vpop.f32.mrb[0].mxu0
        %v661 = vadd.f32 %v266, %v660
        %v662 = vpop.f32.mrb[0].mxu0
        %663 = vmatprep.mubr.bf16.mxu0 0
        %664 = vmatmul.mubr.bf16.gmra.mrb[0].mxu0 %v474
        %v665 = vpop.f32.mrb[0].mxu0
        %v666 = vadd.f32 %v266, %v665
        %v667 = vpop.f32.mrb[0].mxu0
        %v668 = vpop.f32.mrb[0].mxu0
        %v669 = vadd.f32 %v266, %v668
        %v670 = vpop.f32.mrb[0].mxu0
        %671 = vmatprep.mubr.bf16.mxu0 0
        %672 = vmatmul.mubr.bf16.gmra.mrb[0].mxu0 %v477
        %v673 = vpop.f32.mrb[0].mxu0
        %v674 = vadd.f32 %v266, %v673
        %v675 = vpop.f32.mrb[0].mxu0
        %v676 = vpop.f32.mrb[0].mxu0
        %v677 = vadd.f32 %v266, %v676
        %v678 = vpop.f32.mrb[0].mxu0
        %679 = vmatprep.mubr.bf16.mxu0 0
        %680 = vmatmul.mubr.bf16.gmra.mrb[0].mxu0 %v480
        %v681 = vpop.f32.mrb[0].mxu0
        %v682 = vadd.f32 %v266, %v681
        %v683 = vpop.f32.mrb[0].mxu0
        %v684 = vpop.f32.mrb[0].mxu0
        %v685 = vadd.f32 %v266, %v684
        %v686 = vpop.f32.mrb[0].mxu0
        %687 = vmatprep.mubr.bf16.mxu0 0
        %688 = vmatmul.mubr.bf16.gmra.mrb[0].mxu0 %v483
        %v689 = vpop.f32.mrb[0].mxu0
        %v690 = vadd.f32 %v266, %v689
        %v691 = vpop.f32.mrb[0].mxu0
        %v692 = vpop.f32.mrb[0].mxu0
        %v693 = vadd.f32 %v266, %v692
        %v694 = vpop.f32.mrb[0].mxu0
        %695 = vmatprep.mubr.bf16.mxu0 0
        %696 = vmatmul.mubr.bf16.gmra.mrb[0].mxu0 %v486
        %v697 = vpop.f32.mrb[0].mxu0
        %v698 = vadd.f32 %v266, %v697
        %v699 = vpop.f32.mrb[0].mxu0
        %v700 = vpop.f32.mrb[0].mxu0
        %v701 = vadd.f32 %v266, %v700
        %v702 = vpop.f32.mrb[0].mxu0
        %703 = vmatprep.mubr.bf16.mxu0 0
        %704 = vmatmul.mubr.bf16.gmra.mrb[0].mxu0 %v489
        %v705 = vpop.f32.mrb[0].mxu0
        %v706 = vadd.f32 %v266, %v705
        %v707 = vpop.f32.mrb[0].mxu0
        %v708 = vpop.f32.mrb[0].mxu0
        %v709 = vadd.f32 %v266, %v708
        %v710 = vpop.f32.mrb[0].mxu0
        %711 = vmatprep.mubr.bf16.mxu0 0
        %712 = vmatmul.mubr.bf16.gmra.mrb[0].mxu0 %v492
        %v713 = vpop.f32.mrb[0].mxu0
        %v714 = vadd.f32 %v266, %v713
        %v715 = vpop.f32.mrb[0].mxu0
        %v716 = vpop.f32.mrb[0].mxu0
        %v717 = vadd.f32 %v266, %v716
        %v718 = vpop.f32.mrb[0].mxu0
        %719 = vmatprep.mubr.bf16.mxu0 0
        %720 = vmatmul.mubr.bf16.gmra.mrb[0].mxu0 %v495
        %v721 = vpop.f32.mrb[0].mxu0
        %v722 = vadd.f32 %v266, %v721
        %v723 = vpop.f32.mrb[0].mxu0
        %v724 = vpop.f32.mrb[0].mxu0
        %v725 = vadd.f32 %v266, %v724
        %v726 = vpop.f32.mrb[0].mxu0
        %727 = vmatprep.mubr.bf16.mxu0 0
        %728 = vmatmul.mubr.bf16.gmra.mrb[0].mxu0 %v498
        %v729 = vpop.f32.mrb[0].mxu0
        %v730 = vadd.f32 %v266, %v729
        %v731 = vpop.f32.mrb[0].mxu0
        %v732 = vpop.f32.mrb[0].mxu0
        %v733 = vadd.f32 %v266, %v732
        %v734 = vpop.f32.mrb[0].mxu0
        %735 = vmatprep.mubr.bf16.mxu0 0
        %736 = vmatmul.mubr.bf16.gmra.mrb[0].mxu0 %v501
        %v737 = vpop.f32.mrb[0].mxu0
        %v738 = vadd.f32 %v266, %v737
        %v739 = vpop.f32.mrb[0].mxu0
        %v740 = vpop.f32.mrb[0].mxu0
        %v741 = vadd.f32 %v266, %v740
        %v742 = vpop.f32.mrb[0].mxu0
        %743 = vmatprep.mubr.bf16.mxu0 0
        %744 = vmatmul.mubr.bf16.gmra.mrb[0].mxu0 %v504
        %v745 = vpop.f32.mrb[0].mxu0
        %v746 = vadd.f32 %v266, %v745
        %v747 = vpop.f32.mrb[0].mxu0
        %v748 = vpop.f32.mrb[0].mxu0
        %v749 = vadd.f32 %v266, %v748
        %v750 = vpop.f32.mrb[0].mxu0
        %751 = vmatprep.mubr.bf16.mxu0 0
        %752 = vmatmul.mubr.bf16.gmra.mrb[0].mxu0 %v507
        %v753 = vpop.f32.mrb[0].mxu0
        %v754 = vadd.f32 %v266, %v753
        %v755 = vpop.f32.mrb[0].mxu0
        %v756 = vpop.f32.mrb[0].mxu0
        %v757 = vadd.f32 %v266, %v756
        %v758 = vpop.f32.mrb[0].mxu0
        %759 = vmatprep.mubr.bf16.mxu0 0
        %760 = vmatmul.mubr.bf16.gmra.mrb[0].mxu0 %v510
        %v761 = vpop.f32.mrb[0].mxu0
        %v762 = vadd.f32 %v266, %v761
        %v763 = vpop.f32.mrb[0].mxu0
        %v764 = vpop.f32.mrb[0].mxu0
        %v765 = vadd.f32 %v266, %v764
        %v766 = vpop.f32.mrb[0].mxu0
        %767 = vmatprep.mubr.bf16.mxu0 0
        %768 = vmatmul.mubr.bf16.gmra.mrb[0].mxu0 %v513
        %v769 = vpop.f32.mrb[0].mxu0
        %v770 = vadd.f32 %v266, %v769
        %v771 = vpop.f32.mrb[0].mxu0
        %v772 = vpop.f32.mrb[0].mxu0
        %v773 = vadd.f32 %v266, %v772
        %v774 = vpop.f32.mrb[0].mxu0
        %775 = vmatprep.mubr.bf16.mxu0 0
        %776 = vmatmul.mubr.bf16.gmra.mrb[0].mxu0 %v516
        %v777 = vpop.f32.mrb[0].mxu0
        %v778 = vadd.f32 %v266, %v777
        %v779 = vpop.f32.mrb[0].mxu0
        %v780 = vpop.f32.mrb[0].mxu0
        %v781 = vadd.f32 %v266, %v780
        %v782 = vpop.f32.mrb[0].mxu0
        %783 = vmatprep.mubr.bf16.mxu0 0
        %784 = vmatmul.mubr.bf16.gmra.mrb[0].mxu0 %v519
        %v785 = vpop.f32.mrb[0].mxu0
        %v786 = vadd.f32 %v266, %v785
        %v787 = vpop.f32.mrb[0].mxu0
        %v788 = vpop.f32.mrb[0].mxu0
        %v789 = vadd.f32 %v266, %v788
        %v790 = vpop.f32.mrb[0].mxu0
        %791 = vmatprep.mubr.bf16.mxu0 0
        %792 = vmatmul.mubr.bf16.gmra.mrb[0].mxu0 %v522
        %v793 = vpop.f32.mrb[0].mxu0
        %v794 = vadd.f32 %v266, %v793
        %v795 = vpop.f32.mrb[0].mxu0
        %v796 = vpop.f32.mrb[0].mxu0
        %v797 = vadd.f32 %v266, %v796
        %v798 = vpop.f32.mrb[0].mxu0
        %799 = vmatprep.mubr.bf16.mxu0 0
        %800 = vmatmul.mubr.bf16.gmra.mrb[0].mxu0 %v525
        %v801 = vpop.f32.mrb[0].mxu0
        %v802 = vadd.f32 %v266, %v801
        %v803 = vpop.f32.mrb[0].mxu0
        %v804 = vpop.f32.mrb[0].mxu0
        %v805 = vadd.f32 %v266, %v804
        %v806 = vpop.f32.mrb[0].mxu0
        %807 = vmatprep.mubr.bf16.mxu0 0
        %808 = vmatmul.mubr.bf16.gmra.mrb[0].mxu0 %v528
        %v809 = vpop.f32.mrb[0].mxu0
        %v810 = vadd.f32 %v266, %v809
        %v811 = vpop.f32.mrb[0].mxu0
        %v812 = vpop.f32.mrb[0].mxu0
        %v813 = vadd.f32 %v266, %v812
        %v814 = vpop.f32.mrb[0].mxu0
        %815 = vmatprep.mubr.bf16.mxu0 0
        %816 = vmatmul.mubr.bf16.gmra.mrb[0].mxu0 %v531
        %v817 = vpop.f32.mrb[0].mxu0
        %v818 = vadd.f32 %v266, %v817
        %v819 = vpop.f32.mrb[0].mxu0
        %v820 = vpop.f32.mrb[0].mxu0
        %v821 = vadd.f32 %v266, %v820
        %v822 = vpop.f32.mrb[0].mxu0
        %823 = vmatprep.mubr.bf16.mxu0 0
        %824 = vmatmul.mubr.bf16.gmra.mrb[0].mxu0 %v534
        %v825 = vpop.f32.mrb[0].mxu0
        %v826 = vadd.f32 %v266, %v825
        %v827 = vpop.f32.mrb[0].mxu0
        %v828 = vpop.f32.mrb[0].mxu0
        %v829 = vadd.f32 %v266, %v828
        %v830 = vpop.f32.mrb[0].mxu0
        %831 = vdwg.mxu0
        %v832 = vtanh.pop %v578
        %v833 = vtanh.pop %v581
        %v834 = vtanh.pop %v586
        %v835 = vtanh.pop %v589
        %v836 = vtanh.pop %v594
        %v837 = vtanh.pop %v597
        %v838 = vtanh.pop %v602
        %v839 = vtanh.pop %v605
        %v840 = vtanh.pop %v610
        %v841 = vtanh.pop %v613
        %v842 = vtanh.pop %v618
        %v843 = vtanh.pop %v621
        %v844 = vtanh.pop %v626
        %v845 = vtanh.pop %v629
        %v846 = vtanh.pop %v634
        %v847 = vtanh.pop %v637
        %v848 = vtanh.pop %v642
        %v849 = vtanh.pop %v645
        %v850 = vtanh.pop %v650
        %v851 = vtanh.pop %v653
        %v852 = vtanh.pop %v658
        %v853 = vtanh.pop %v661
        %v854 = vtanh.pop %v666
        %v855 = vtanh.pop %v669
        %v856 = vtanh.pop %v674
        %v857 = vtanh.pop %v677
        %v858 = vtanh.pop %v682
        %v859 = vtanh.pop %v685
        %v860 = vtanh.pop %v690
        %v861 = vtanh.pop %v693
        %v862 = vtanh.pop %v698
        %v863 = vtanh.pop %v701
        %v864 = vtanh.pop %v706
        %v865 = vtanh.pop %v709
        %v866 = vtanh.pop %v714
        %v867 = vtanh.pop %v717
        %v868 = vtanh.pop %v722
        %v869 = vtanh.pop %v725
        %v870 = vtanh.pop %v730
        %v871 = vtanh.pop %v733
        %v872 = vtanh.pop %v738
        %v873 = vtanh.pop %v741
        %v874 = vtanh.pop %v746
        %v875 = vtanh.pop %v749
        %v876 = vtanh.pop %v754
        %v877 = vtanh.pop %v757
        %v878 = vtanh.pop %v762
        %v879 = vtanh.pop %v765
        %v880 = vtanh.pop %v770
        %v881 = vtanh.pop %v773
        %v882 = vtanh.pop %v778
        %v883 = vtanh.pop %v781
        %v884 = vtanh.pop %v786
        %v885 = vtanh.pop %v789
        %v886 = vtanh.pop %v794
        %v887 = vtanh.pop %v797
        %v888 = vtanh.pop %v802
        %v889 = vtanh.pop %v805
        %v890 = vtanh.pop %v810
        %v891 = vtanh.pop %v813
        %v892 = vtanh.pop %v818
        %v893 = vtanh.pop %v821
        %v894 = vtanh.pop %v826
        %v895 = vtanh.pop %v829
        %v896 = vpack.c.bf16 %v833, %v832
        %v897 = vpack.c.bf16 %v835, %v834
        %v898 = vpack.c.bf16 %v837, %v836
        %v899 = vpack.c.bf16 %v839, %v838
        %v900 = vpack.c.bf16 %v841, %v840
        %v901 = vpack.c.bf16 %v843, %v842
        %v902 = vpack.c.bf16 %v845, %v844
        %v903 = vpack.c.bf16 %v847, %v846
        %v904 = vpack.c.bf16 %v849, %v848
        %v905 = vpack.c.bf16 %v851, %v850
        %v906 = vpack.c.bf16 %v853, %v852
        %v907 = vpack.c.bf16 %v855, %v854
        %v908 = vpack.c.bf16 %v857, %v856
        %v909 = vpack.c.bf16 %v859, %v858
        %v910 = vpack.c.bf16 %v861, %v860
        %v911 = vpack.c.bf16 %v863, %v862
        %v912 = vpack.c.bf16 %v865, %v864
        %v913 = vpack.c.bf16 %v867, %v866
        %v914 = vpack.c.bf16 %v869, %v868
        %v915 = vpack.c.bf16 %v871, %v870
        %v916 = vpack.c.bf16 %v873, %v872
        %v917 = vpack.c.bf16 %v875, %v874
        %v918 = vpack.c.bf16 %v877, %v876
        %v919 = vpack.c.bf16 %v879, %v878
        %v920 = vpack.c.bf16 %v881, %v880
        %v921 = vpack.c.bf16 %v883, %v882
        %v922 = vpack.c.bf16 %v885, %v884
        %v923 = vpack.c.bf16 %v887, %v886
        %v924 = vpack.c.bf16 %v889, %v888
        %v925 = vpack.c.bf16 %v891, %v890
        %v926 = vpack.c.bf16 %v893, %v892
        %v927 = vpack.c.bf16 %v895, %v894
        %v960 = vunpack.c.l.b16 %v896
        %v961 = vunpack.c.h.b16 %v896
        %v962 = vunpack.c.l.b16 %v897
        %v963 = vunpack.c.h.b16 %v897
        %v964 = vunpack.c.l.b16 %v898
        %v965 = vunpack.c.h.b16 %v898
        %v966 = vunpack.c.l.b16 %v899
        %v967 = vunpack.c.h.b16 %v899
        %v968 = vunpack.c.l.b16 %v900
        %v969 = vunpack.c.h.b16 %v900
        %v970 = vunpack.c.l.b16 %v901
        %v971 = vunpack.c.h.b16 %v901
        %v972 = vunpack.c.l.b16 %v902
        %v973 = vunpack.c.h.b16 %v902
        %v974 = vunpack.c.l.b16 %v903
        %v975 = vunpack.c.h.b16 %v903
        %v976 = vunpack.c.l.b16 %v904
        %v977 = vunpack.c.h.b16 %v904
        %v978 = vunpack.c.l.b16 %v905
        %v979 = vunpack.c.h.b16 %v905
        %v980 = vunpack.c.l.b16 %v906
        %v981 = vunpack.c.h.b16 %v906
        %v982 = vunpack.c.l.b16 %v907
        %v983 = vunpack.c.h.b16 %v907
        %v984 = vunpack.c.l.b16 %v908
        %v985 = vunpack.c.h.b16 %v908
        %v986 = vunpack.c.l.b16 %v909
        %v987 = vunpack.c.h.b16 %v909
        %v988 = vunpack.c.l.b16 %v910
        %v989 = vunpack.c.h.b16 %v910
        %v990 = vunpack.c.l.b16 %v911
        %v991 = vunpack.c.h.b16 %v911
        %v992 = vunpack.c.l.b16 %v912
        %v993 = vunpack.c.h.b16 %v912
        %v994 = vunpack.c.l.b16 %v913
        %v995 = vunpack.c.h.b16 %v913
        %v996 = vunpack.c.l.b16 %v914
        %v997 = vunpack.c.h.b16 %v914
        %v998 = vunpack.c.l.b16 %v915
        %v999 = vunpack.c.h.b16 %v915
        %v1000 = vunpack.c.l.b16 %v916
        %v1001 = vunpack.c.h.b16 %v916
        %v1002 = vunpack.c.l.b16 %v917
        %v1003 = vunpack.c.h.b16 %v917
        %v1004 = vunpack.c.l.b16 %v918
        %v1005 = vunpack.c.h.b16 %v918
        %v1006 = vunpack.c.l.b16 %v919
        %v1007 = vunpack.c.h.b16 %v919
        %v1008 = vunpack.c.l.b16 %v920
        %v1009 = vunpack.c.h.b16 %v920
        %v1010 = vunpack.c.l.b16 %v921
        %v1011 = vunpack.c.h.b16 %v921
        %v1012 = vunpack.c.l.b16 %v922
        %v1013 = vunpack.c.h.b16 %v922
        %v1014 = vunpack.c.l.b16 %v923
        %v1015 = vunpack.c.h.b16 %v923
        %v1016 = vunpack.c.l.b16 %v924
        %v1017 = vunpack.c.h.b16 %v924
        %v1018 = vunpack.c.l.b16 %v925
        %v1019 = vunpack.c.h.b16 %v925
        %v1020 = vunpack.c.l.b16 %v926
        %v1021 = vunpack.c.h.b16 %v926
        %v1022 = vunpack.c.l.b16 %v927
        %v1023 = vunpack.c.h.b16 %v927
        %v1024 = vpack.c.b16 %v960, %v960
        %v1025 = vpack.c.b16 %v961, %v961
        %v1026 = vpack.c.b16 %v962, %v962
        %v1027 = vpack.c.b16 %v963, %v963
        %v1028 = vpack.c.b16 %v964, %v964
        %v1029 = vpack.c.b16 %v965, %v965
        %v1030 = vpack.c.b16 %v966, %v966
        %v1031 = vpack.c.b16 %v967, %v967
        %v1032 = vpack.c.b16 %v968, %v968
        %v1033 = vpack.c.b16 %v969, %v969
        %v1034 = vpack.c.b16 %v970, %v970
        %v1035 = vpack.c.b16 %v971, %v971
        %v1036 = vpack.c.b16 %v972, %v972
        %v1037 = vpack.c.b16 %v973, %v973
        %v1038 = vpack.c.b16 %v974, %v974
        %v1039 = vpack.c.b16 %v975, %v975
        %v1040 = vpack.c.b16 %v976, %v976
        %v1041 = vpack.c.b16 %v977, %v977
        %v1042 = vpack.c.b16 %v978, %v978
        %v1043 = vpack.c.b16 %v979, %v979
        %v1044 = vpack.c.b16 %v980, %v980
        %v1045 = vpack.c.b16 %v981, %v981
        %v1046 = vpack.c.b16 %v982, %v982
        %v1047 = vpack.c.b16 %v983, %v983
        %v1048 = vpack.c.b16 %v984, %v984
        %v1049 = vpack.c.b16 %v985, %v985
        %v1050 = vpack.c.b16 %v986, %v986
        %v1051 = vpack.c.b16 %v987, %v987
        %v1052 = vpack.c.b16 %v988, %v988
        %v1053 = vpack.c.b16 %v989, %v989
        %v1054 = vpack.c.b16 %v990, %v990
        %v1055 = vpack.c.b16 %v991, %v991
        %v1056 = vpack.c.b16 %v992, %v992
        %v1057 = vpack.c.b16 %v993, %v993
        %v1058 = vpack.c.b16 %v994, %v994
        %v1059 = vpack.c.b16 %v995, %v995
        %v1060 = vpack.c.b16 %v996, %v996
        %v1061 = vpack.c.b16 %v997, %v997
        %v1062 = vpack.c.b16 %v998, %v998
        %v1063 = vpack.c.b16 %v999, %v999
        %v1064 = vpack.c.b16 %v1000, %v1000
        %v1065 = vpack.c.b16 %v1001, %v1001
        %v1066 = vpack.c.b16 %v1002, %v1002
        %v1067 = vpack.c.b16 %v1003, %v1003
        %v1068 = vpack.c.b16 %v1004, %v1004
        %v1069 = vpack.c.b16 %v1005, %v1005
        %v1070 = vpack.c.b16 %v1006, %v1006
        %v1071 = vpack.c.b16 %v1007, %v1007
        %v1072 = vpack.c.b16 %v1008, %v1008
        %v1073 = vpack.c.b16 %v1009, %v1009
        %v1074 = vpack.c.b16 %v1010, %v1010
        %v1075 = vpack.c.b16 %v1011, %v1011
        %v1076 = vpack.c.b16 %v1012, %v1012
        %v1077 = vpack.c.b16 %v1013, %v1013
        %v1078 = vpack.c.b16 %v1014, %v1014
        %v1079 = vpack.c.b16 %v1015, %v1015
        %v1080 = vpack.c.b16 %v1016, %v1016
        %v1081 = vpack.c.b16 %v1017, %v1017
        %v1082 = vpack.c.b16 %v1018, %v1018
        %v1083 = vpack.c.b16 %v1019, %v1019
        %v1084 = vpack.c.b16 %v1020, %v1020
        %v1085 = vpack.c.b16 %v1021, %v1021
        %v1086 = vpack.c.b16 %v1022, %v1022
        %v1087 = vpack.c.b16 %v1023, %v1023
        %vm1152 = vcmask 175104
        %1153 = vst.msk [vmem:[%s172] sm:$0xf] %vm1152, %v1024
        %1154 = vst.msk [vmem:[%s172 + $0x4] sm:$0xf] %vm1152, %v1025
        %1155 = vst.msk [vmem:[%s172 + $0x8] sm:$0xf] %vm1152, %v1026
        %1156 = vst.msk [vmem:[%s172 + $0xc] sm:$0xf] %vm1152, %v1027
        %1157 = vst.msk [vmem:[%s172 + $0x10] sm:$0xf] %vm1152, %v1028
        %1158 = vst.msk [vmem:[%s172 + $0x14] sm:$0xf] %vm1152, %v1029
        %1159 = vst.msk [vmem:[%s172 + $0x18] sm:$0xf] %vm1152, %v1030
        %1160 = vst.msk [vmem:[%s172 + $0x1c] sm:$0xf] %vm1152, %v1031
        %1161 = vst.msk [vmem:[%s172 + $0x20] sm:$0xf] %vm1152, %v1032
        %1162 = vst.msk [vmem:[%s172 + $0x24] sm:$0xf] %vm1152, %v1033
        %1163 = vst.msk [vmem:[%s172 + $0x28] sm:$0xf] %vm1152, %v1034
        %1164 = vst.msk [vmem:[%s172 + $0x2c] sm:$0xf] %vm1152, %v1035
        %1165 = vst.msk [vmem:[%s172 + $0x30] sm:$0xf] %vm1152, %v1036
        %1166 = vst.msk [vmem:[%s172 + $0x34] sm:$0xf] %vm1152, %v1037
        %1167 = vst.msk [vmem:[%s172 + $0x38] sm:$0xf] %vm1152, %v1038
        %1168 = vst.msk [vmem:[%s172 + $0x3c] sm:$0xf] %vm1152, %v1039
        %1169 = vst.msk [vmem:[%s172 + $0x40] sm:$0xf] %vm1152, %v1040
        %1170 = vst.msk [vmem:[%s172 + $0x44] sm:$0xf] %vm1152, %v1041
        %1171 = vst.msk [vmem:[%s172 + $0x48] sm:$0xf] %vm1152, %v1042
        %1172 = vst.msk [vmem:[%s172 + $0x4c] sm:$0xf] %vm1152, %v1043
        %1173 = vst.msk [vmem:[%s172 + $0x50] sm:$0xf] %vm1152, %v1044
        %1174 = vst.msk [vmem:[%s172 + $0x54] sm:$0xf] %vm1152, %v1045
        %1175 = vst.msk [vmem:[%s172 + $0x58] sm:$0xf] %vm1152, %v1046
        %1176 = vst.msk [vmem:[%s172 + $0x5c] sm:$0xf] %vm1152, %v1047
        %1177 = vst.msk [vmem:[%s172 + $0x60] sm:$0xf] %vm1152, %v1048
        %1178 = vst.msk [vmem:[%s172 + $0x64] sm:$0xf] %vm1152, %v1049
        %1179 = vst.msk [vmem:[%s172 + $0x68] sm:$0xf] %vm1152, %v1050
        %1180 = vst.msk [vmem:[%s172 + $0x6c] sm:$0xf] %vm1152, %v1051
        %1181 = vst.msk [vmem:[%s172 + $0x70] sm:$0xf] %vm1152, %v1052
        %1182 = vst.msk [vmem:[%s172 + $0x74] sm:$0xf] %vm1152, %v1053
        %1183 = vst.msk [vmem:[%s172 + $0x78] sm:$0xf] %vm1152, %v1054
        %1184 = vst.msk [vmem:[%s172 + $0x7c] sm:$0xf] %vm1152, %v1055
        %1185 = vst.msk [vmem:[%s172 + $0x80] sm:$0xf] %vm1152, %v1056
        %1186 = vst.msk [vmem:[%s172 + $0x84] sm:$0xf] %vm1152, %v1057
        %1187 = vst.msk [vmem:[%s172 + $0x88] sm:$0xf] %vm1152, %v1058
        %1188 = vst.msk [vmem:[%s172 + $0x8c] sm:$0xf] %vm1152, %v1059
        %1189 = vst.msk [vmem:[%s172 + $0x90] sm:$0xf] %vm1152, %v1060
        %1190 = vst.msk [vmem:[%s172 + $0x94] sm:$0xf] %vm1152, %v1061
        %1191 = vst.msk [vmem:[%s172 + $0x98] sm:$0xf] %vm1152, %v1062
        %1192 = vst.msk [vmem:[%s172 + $0x9c] sm:$0xf] %vm1152, %v1063
        %1193 = vst.msk [vmem:[%s172 + $0xa0] sm:$0xf] %vm1152, %v1064
        %1194 = vst.msk [vmem:[%s172 + $0xa4] sm:$0xf] %vm1152, %v1065
        %1195 = vst.msk [vmem:[%s172 + $0xa8] sm:$0xf] %vm1152, %v1066
        %1196 = vst.msk [vmem:[%s172 + $0xac] sm:$0xf] %vm1152, %v1067
        %1197 = vst.msk [vmem:[%s172 + $0xb0] sm:$0xf] %vm1152, %v1068
        %1198 = vst.msk [vmem:[%s172 + $0xb4] sm:$0xf] %vm1152, %v1069
        %1199 = vst.msk [vmem:[%s172 + $0xb8] sm:$0xf] %vm1152, %v1070
        %1200 = vst.msk [vmem:[%s172 + $0xbc] sm:$0xf] %vm1152, %v1071
        %1201 = vst.msk [vmem:[%s172 + $0xc0] sm:$0xf] %vm1152, %v1072
        %1202 = vst.msk [vmem:[%s172 + $0xc4] sm:$0xf] %vm1152, %v1073
        %1203 = vst.msk [vmem:[%s172 + $0xc8] sm:$0xf] %vm1152, %v1074
        %1204 = vst.msk [vmem:[%s172 + $0xcc] sm:$0xf] %vm1152, %v1075
        %1205 = vst.msk [vmem:[%s172 + $0xd0] sm:$0xf] %vm1152, %v1076
        %1206 = vst.msk [vmem:[%s172 + $0xd4] sm:$0xf] %vm1152, %v1077
        %1207 = vst.msk [vmem:[%s172 + $0xd8] sm:$0xf] %vm1152, %v1078
        %1208 = vst.msk [vmem:[%s172 + $0xdc] sm:$0xf] %vm1152, %v1079
        %1209 = vst.msk [vmem:[%s172 + $0xe0] sm:$0xf] %vm1152, %v1080
        %1210 = vst.msk [vmem:[%s172 + $0xe4] sm:$0xf] %vm1152, %v1081
        %1211 = vst.msk [vmem:[%s172 + $0xe8] sm:$0xf] %vm1152, %v1082
        %1212 = vst.msk [vmem:[%s172 + $0xec] sm:$0xf] %vm1152, %v1083
        %1213 = vst.msk [vmem:[%s172 + $0xf0] sm:$0xf] %vm1152, %v1084
        %1214 = vst.msk [vmem:[%s172 + $0xf4] sm:$0xf] %vm1152, %v1085
        %1215 = vst.msk [vmem:[%s172 + $0xf8] sm:$0xf] %vm1152, %v1086
        %1216 = vst.msk [vmem:[%s172 + $0xfc] sm:$0xf] %vm1152, %v1087
        %s1217 = sand.u32 %s90, 1
        %s1218 = sand.u32 %s90, 1
        %s1219 = smul.addr %s1218, 256
        %s1220 = scalar_lea.vmem [#allocation2], %s1219
        // Predicated region
        $region33: #{forward.2} parent=31 // pred_check
          %p1221 = pneg %p100
        $region34: #{forward.2} parent=31 // pred_check_branch
          %1223 = sbr.rel (%p1221) target = $region36
        $region35: #{forward.2} parent=31 // pred_region
          %s1224 = smul.u32 64, %s14
          %s1225 = ssub.s32 88, %s1224
          %p1226 = scmp.lt.s32.totalorder %s1225, 64
          %s1227 = scalar_select %p1226, %s1225, 64
          %s1228 = smul.u32 64, %s1227
          %p1229 = scmp.ne.s32.totalorder 0, %s1228
          %s1230 = smul.addr %s1224, 4
          %s1231 = scalar_lea.vmem %s3, %s1230
          // Predicated region
          $region37: #{forward.2} parent=35 // pred_check
            %p1232 = pneg %p1229
          $region38: #{forward.2} parent=35 // pred_check_branch
            %1234 = sbr.rel (%p1232) target = $region40
          $region39: #{forward.2} parent=35 // pred_region
            // Predicated region
            $region41: #{forward.2} parent=39 // pred_check
              _
            $region42: #{forward.2} parent=39 // pred_check_branch
              %1236 = sbr.rel target = $region44
            $region43: #{forward.2} parent=39 // pred_region
              // Predicated region
              $region63: #{forward.2} parent=43 // pred_check
                _
              $region64: #{forward.2} parent=43 // pred_check_branch
                %1411 = sbr.rel (0) target = $region66
              $region65: #{forward.2} parent=43 // pred_region
                %s1413 = sshrl.u32 %s1227, 6
                // While loop
                $region67: #{forward.2} parent=65 // loop_pre_header
                  _
                $region68: #{forward.2} parent=65 // loop_header
                  %s1415 = sphi 0, %s1417
                  %p1416 = scmp.ge.s32.totalorder %s1415, %s1413
                  %s1420 = sphi 0, %s1553
                  %s1421 = sphi %s1220, %s1556
                  %s1422 = sphi %s1231, %s1557
                $region69: #{forward.2} parent=65 // loop_header_branch
                  %1419 = sbr.rel (%p1416) target = $region73
                $region70: #{forward.2} parent=65 // loop_body
                  %v1423 = vld [vmem:[%s1421] sm:$0xf]
                  %1424 = vst [vmem:[%s1422] sm:$0xf] %v1423
                  %v1425 = vld [vmem:[%s1421 + $0x4] sm:$0xf]
                  %1426 = vst [vmem:[%s1422 + $0x4] sm:$0xf] %v1425
                  %v1427 = vld [vmem:[%s1421 + $0x8] sm:$0xf]
                  %1428 = vst [vmem:[%s1422 + $0x8] sm:$0xf] %v1427
                  %v1429 = vld [vmem:[%s1421 + $0xc] sm:$0xf]
                  %1430 = vst [vmem:[%s1422 + $0xc] sm:$0xf] %v1429
                  %v1431 = vld [vmem:[%s1421 + $0x10] sm:$0xf]
                  %1432 = vst [vmem:[%s1422 + $0x10] sm:$0xf] %v1431
                  %v1433 = vld [vmem:[%s1421 + $0x14] sm:$0xf]
                  %1434 = vst [vmem:[%s1422 + $0x14] sm:$0xf] %v1433
                  %v1435 = vld [vmem:[%s1421 + $0x18] sm:$0xf]
                  %1436 = vst [vmem:[%s1422 + $0x18] sm:$0xf] %v1435
                  %v1437 = vld [vmem:[%s1421 + $0x1c] sm:$0xf]
                  %1438 = vst [vmem:[%s1422 + $0x1c] sm:$0xf] %v1437
                  %v1439 = vld [vmem:[%s1421 + $0x20] sm:$0xf]
                  %1440 = vst [vmem:[%s1422 + $0x20] sm:$0xf] %v1439
                  %v1441 = vld [vmem:[%s1421 + $0x24] sm:$0xf]
                  %1442 = vst [vmem:[%s1422 + $0x24] sm:$0xf] %v1441
                  %v1443 = vld [vmem:[%s1421 + $0x28] sm:$0xf]
                  %1444 = vst [vmem:[%s1422 + $0x28] sm:$0xf] %v1443
                  %v1445 = vld [vmem:[%s1421 + $0x2c] sm:$0xf]
                  %1446 = vst [vmem:[%s1422 + $0x2c] sm:$0xf] %v1445
                  %v1447 = vld [vmem:[%s1421 + $0x30] sm:$0xf]
                  %1448 = vst [vmem:[%s1422 + $0x30] sm:$0xf] %v1447
                  %v1449 = vld [vmem:[%s1421 + $0x34] sm:$0xf]
                  %1450 = vst [vmem:[%s1422 + $0x34] sm:$0xf] %v1449
                  %v1451 = vld [vmem:[%s1421 + $0x38] sm:$0xf]
                  %1452 = vst [vmem:[%s1422 + $0x38] sm:$0xf] %v1451
                  %v1453 = vld [vmem:[%s1421 + $0x3c] sm:$0xf]
                  %1454 = vst [vmem:[%s1422 + $0x3c] sm:$0xf] %v1453
                  %v1455 = vld [vmem:[%s1421 + $0x40] sm:$0xf]
                  %1456 = vst [vmem:[%s1422 + $0x40] sm:$0xf] %v1455
                  %v1457 = vld [vmem:[%s1421 + $0x44] sm:$0xf]
                  %1458 = vst [vmem:[%s1422 + $0x44] sm:$0xf] %v1457
                  %v1459 = vld [vmem:[%s1421 + $0x48] sm:$0xf]
                  %1460 = vst [vmem:[%s1422 + $0x48] sm:$0xf] %v1459
                  %v1461 = vld [vmem:[%s1421 + $0x4c] sm:$0xf]
                  %1462 = vst [vmem:[%s1422 + $0x4c] sm:$0xf] %v1461
                  %v1463 = vld [vmem:[%s1421 + $0x50] sm:$0xf]
                  %1464 = vst [vmem:[%s1422 + $0x50] sm:$0xf] %v1463
                  %v1465 = vld [vmem:[%s1421 + $0x54] sm:$0xf]
                  %1466 = vst [vmem:[%s1422 + $0x54] sm:$0xf] %v1465
                  %v1467 = vld [vmem:[%s1421 + $0x58] sm:$0xf]
                  %1468 = vst [vmem:[%s1422 + $0x58] sm:$0xf] %v1467
                  %v1469 = vld [vmem:[%s1421 + $0x5c] sm:$0xf]
                  %1470 = vst [vmem:[%s1422 + $0x5c] sm:$0xf] %v1469
                  %v1471 = vld [vmem:[%s1421 + $0x60] sm:$0xf]
                  %1472 = vst [vmem:[%s1422 + $0x60] sm:$0xf] %v1471
                  %v1473 = vld [vmem:[%s1421 + $0x64] sm:$0xf]
                  %1474 = vst [vmem:[%s1422 + $0x64] sm:$0xf] %v1473
                  %v1475 = vld [vmem:[%s1421 + $0x68] sm:$0xf]
                  %1476 = vst [vmem:[%s1422 + $0x68] sm:$0xf] %v1475
                  %v1477 = vld [vmem:[%s1421 + $0x6c] sm:$0xf]
                  %1478 = vst [vmem:[%s1422 + $0x6c] sm:$0xf] %v1477
                  %v1479 = vld [vmem:[%s1421 + $0x70] sm:$0xf]
                  %1480 = vst [vmem:[%s1422 + $0x70] sm:$0xf] %v1479
                  %v1481 = vld [vmem:[%s1421 + $0x74] sm:$0xf]
                  %1482 = vst [vmem:[%s1422 + $0x74] sm:$0xf] %v1481
                  %v1483 = vld [vmem:[%s1421 + $0x78] sm:$0xf]
                  %1484 = vst [vmem:[%s1422 + $0x78] sm:$0xf] %v1483
                  %v1485 = vld [vmem:[%s1421 + $0x7c] sm:$0xf]
                  %1486 = vst [vmem:[%s1422 + $0x7c] sm:$0xf] %v1485
                  %v1487 = vld [vmem:[%s1421 + $0x80] sm:$0xf]
                  %1488 = vst [vmem:[%s1422 + $0x80] sm:$0xf] %v1487
                  %v1489 = vld [vmem:[%s1421 + $0x84] sm:$0xf]
                  %1490 = vst [vmem:[%s1422 + $0x84] sm:$0xf] %v1489
                  %v1491 = vld [vmem:[%s1421 + $0x88] sm:$0xf]
                  %1492 = vst [vmem:[%s1422 + $0x88] sm:$0xf] %v1491
                  %v1493 = vld [vmem:[%s1421 + $0x8c] sm:$0xf]
                  %1494 = vst [vmem:[%s1422 + $0x8c] sm:$0xf] %v1493
                  %v1495 = vld [vmem:[%s1421 + $0x90] sm:$0xf]
                  %1496 = vst [vmem:[%s1422 + $0x90] sm:$0xf] %v1495
                  %v1497 = vld [vmem:[%s1421 + $0x94] sm:$0xf]
                  %1498 = vst [vmem:[%s1422 + $0x94] sm:$0xf] %v1497
                  %v1499 = vld [vmem:[%s1421 + $0x98] sm:$0xf]
                  %1500 = vst [vmem:[%s1422 + $0x98] sm:$0xf] %v1499
                  %v1501 = vld [vmem:[%s1421 + $0x9c] sm:$0xf]
                  %1502 = vst [vmem:[%s1422 + $0x9c] sm:$0xf] %v1501
                  %v1503 = vld [vmem:[%s1421 + $0xa0] sm:$0xf]
                  %1504 = vst [vmem:[%s1422 + $0xa0] sm:$0xf] %v1503
                  %v1505 = vld [vmem:[%s1421 + $0xa4] sm:$0xf]
                  %1506 = vst [vmem:[%s1422 + $0xa4] sm:$0xf] %v1505
                  %v1507 = vld [vmem:[%s1421 + $0xa8] sm:$0xf]
                  %1508 = vst [vmem:[%s1422 + $0xa8] sm:$0xf] %v1507
                  %v1509 = vld [vmem:[%s1421 + $0xac] sm:$0xf]
                  %1510 = vst [vmem:[%s1422 + $0xac] sm:$0xf] %v1509
                  %v1511 = vld [vmem:[%s1421 + $0xb0] sm:$0xf]
                  %1512 = vst [vmem:[%s1422 + $0xb0] sm:$0xf] %v1511
                  %v1513 = vld [vmem:[%s1421 + $0xb4] sm:$0xf]
                  %1514 = vst [vmem:[%s1422 + $0xb4] sm:$0xf] %v1513
                  %v1515 = vld [vmem:[%s1421 + $0xb8] sm:$0xf]
                  %1516 = vst [vmem:[%s1422 + $0xb8] sm:$0xf] %v1515
                  %v1517 = vld [vmem:[%s1421 + $0xbc] sm:$0xf]
                  %1518 = vst [vmem:[%s1422 + $0xbc] sm:$0xf] %v1517
                  %v1519 = vld [vmem:[%s1421 + $0xc0] sm:$0xf]
                  %1520 = vst [vmem:[%s1422 + $0xc0] sm:$0xf] %v1519
                  %v1521 = vld [vmem:[%s1421 + $0xc4] sm:$0xf]
                  %1522 = vst [vmem:[%s1422 + $0xc4] sm:$0xf] %v1521
                  %v1523 = vld [vmem:[%s1421 + $0xc8] sm:$0xf]
                  %1524 = vst [vmem:[%s1422 + $0xc8] sm:$0xf] %v1523
                  %v1525 = vld [vmem:[%s1421 + $0xcc] sm:$0xf]
                  %1526 = vst [vmem:[%s1422 + $0xcc] sm:$0xf] %v1525
                  %v1527 = vld [vmem:[%s1421 + $0xd0] sm:$0xf]
                  %1528 = vst [vmem:[%s1422 + $0xd0] sm:$0xf] %v1527
                  %v1529 = vld [vmem:[%s1421 + $0xd4] sm:$0xf]
                  %1530 = vst [vmem:[%s1422 + $0xd4] sm:$0xf] %v1529
                  %v1531 = vld [vmem:[%s1421 + $0xd8] sm:$0xf]
                  %1532 = vst [vmem:[%s1422 + $0xd8] sm:$0xf] %v1531
                  %v1533 = vld [vmem:[%s1421 + $0xdc] sm:$0xf]
                  %1534 = vst [vmem:[%s1422 + $0xdc] sm:$0xf] %v1533
                  %v1535 = vld [vmem:[%s1421 + $0xe0] sm:$0xf]
                  %1536 = vst [vmem:[%s1422 + $0xe0] sm:$0xf] %v1535
                  %v1537 = vld [vmem:[%s1421 + $0xe4] sm:$0xf]
                  %1538 = vst [vmem:[%s1422 + $0xe4] sm:$0xf] %v1537
                  %v1539 = vld [vmem:[%s1421 + $0xe8] sm:$0xf]
                  %1540 = vst [vmem:[%s1422 + $0xe8] sm:$0xf] %v1539
                  %v1541 = vld [vmem:[%s1421 + $0xec] sm:$0xf]
                  %1542 = vst [vmem:[%s1422 + $0xec] sm:$0xf] %v1541
                  %v1543 = vld [vmem:[%s1421 + $0xf0] sm:$0xf]
                  %1544 = vst [vmem:[%s1422 + $0xf0] sm:$0xf] %v1543
                  %v1545 = vld [vmem:[%s1421 + $0xf4] sm:$0xf]
                  %1546 = vst [vmem:[%s1422 + $0xf4] sm:$0xf] %v1545
                  %v1547 = vld [vmem:[%s1421 + $0xf8] sm:$0xf]
                  %1548 = vst [vmem:[%s1422 + $0xf8] sm:$0xf] %v1547
                  %v1549 = vld [vmem:[%s1421 + $0xfc] sm:$0xf]
                  %1550 = vst [vmem:[%s1422 + $0xfc] sm:$0xf] %v1549
                  %s1551 = sadd.s32 1, %s1420
                  %p1552 = scmp.ge.s32.totalorder %s1551, %s1413
                  %s1553 = scalar_select %p1552, 0, %s1551
                  %s1554 = smul.u32 %s1553, 256
                  %s1555 = smul.u32 %s1553, 256
                  %s1556 = scalar_lea.vmem %s1220, %s1554 [#allocation2]
                  %s1557 = scalar_lea.vmem %s1231, %s1555
                $region71: #{forward.2} parent=65 // loop_footer
                  %s1417 = sadd.s32 %s1415, 1
                $region72: #{forward.2} parent=65 // loop_footer_branch
                  %1414 = sbr.rel target = $region68
                $region73: #{forward.2} parent=65 // loop_exit
                  _
                %s1558 = sshrl.u32 %s1227, 6
                %s1559 = sand.u32 %s1227, 63
                %s1560 = smul.u32 %s1558, 64
                %s1561 = smul.u32 4, %s1560
                %s1562 = scalar_lea.vmem %s1220, %s1561 [#allocation2]
                %s1563 = smul.u32 4, %s1560
                %s1564 = scalar_lea.vmem %s1231, %s1563
                // While loop
                $region74: #{forward.2} parent=65 // loop_pre_header
                  _
                $region75: #{forward.2} parent=65 // loop_header
                  %s1566 = sphi 0, %s1568
                  %p1567 = scmp.ge.s32.totalorder %s1566, %s1559
                  %s1571 = sphi 0, %s1578
                  %s1572 = sphi %s1562, %s1581
                  %s1573 = sphi %s1564, %s1582
                $region76: #{forward.2} parent=65 // loop_header_branch
                  %1570 = sbr.rel (%p1567) target = $region80
                $region77: #{forward.2} parent=65 // loop_body
                  %v1574 = vld [vmem:[%s1572] sm:$0xf]
                  %1575 = vst [vmem:[%s1573] sm:$0xf] %v1574
                  %s1576 = sadd.s32 1, %s1571
                  %p1577 = scmp.ge.s32.totalorder %s1576, %s1559
                  %s1578 = scalar_select %p1577, 0, %s1576
                  %s1579 = smul.u32 %s1578, 4
                  %s1580 = smul.u32 %s1578, 4
                  %s1581 = scalar_lea.vmem %s1562, %s1579 [#allocation2]
                  %s1582 = scalar_lea.vmem %s1564, %s1580
                $region78: #{forward.2} parent=65 // loop_footer
                  %s1568 = sadd.s32 %s1566, 1
                $region79: #{forward.2} parent=65 // loop_footer_branch
                  %1565 = sbr.rel target = $region75
                $region80: #{forward.2} parent=65 // loop_exit
                  _
              $region66: #{forward.2} parent=43 // pred_fallthru
                _
            $region44: #{forward.2} parent=39 // pred_fallthru
              _
            // Predicated region
            $region45: #{forward.2} parent=39 // pred_check
              _
            $region46: #{forward.2} parent=39 // pred_check_branch
              %1238 = sbr.rel (0) target = $region48
            $region47: #{forward.2} parent=39 // pred_region
              %s1240 = sshrl.u32 %s1227, 6
              // While loop
              $region49: #{forward.2} parent=47 // loop_pre_header
                _
              $region50: #{forward.2} parent=47 // loop_header
                %s1242 = sphi 0, %s1244
                %p1243 = scmp.ge.s32.totalorder %s1242, %s1240
                %s1247 = sphi 0, %s1380
                %s1248 = sphi %s1220, %s1383
                %s1249 = sphi %s1231, %s1384
              $region51: #{forward.2} parent=47 // loop_header_branch
                %1246 = sbr.rel (%p1243) target = $region55
              $region52: #{forward.2} parent=47 // loop_body
                %v1250 = vld [vmem:[%s1248] sm:$0xf]
                %1251 = vst [vmem:[%s1249] sm:$0xf] %v1250
                %v1252 = vld [vmem:[%s1248 + $0x4] sm:$0xf]
                %1253 = vst [vmem:[%s1249 + $0x4] sm:$0xf] %v1252
                %v1254 = vld [vmem:[%s1248 + $0x8] sm:$0xf]
                %1255 = vst [vmem:[%s1249 + $0x8] sm:$0xf] %v1254
                %v1256 = vld [vmem:[%s1248 + $0xc] sm:$0xf]
                %1257 = vst [vmem:[%s1249 + $0xc] sm:$0xf] %v1256
                %v1258 = vld [vmem:[%s1248 + $0x10] sm:$0xf]
                %1259 = vst [vmem:[%s1249 + $0x10] sm:$0xf] %v1258
                %v1260 = vld [vmem:[%s1248 + $0x14] sm:$0xf]
                %1261 = vst [vmem:[%s1249 + $0x14] sm:$0xf] %v1260
                %v1262 = vld [vmem:[%s1248 + $0x18] sm:$0xf]
                %1263 = vst [vmem:[%s1249 + $0x18] sm:$0xf] %v1262
                %v1264 = vld [vmem:[%s1248 + $0x1c] sm:$0xf]
                %1265 = vst [vmem:[%s1249 + $0x1c] sm:$0xf] %v1264
                %v1266 = vld [vmem:[%s1248 + $0x20] sm:$0xf]
                %1267 = vst [vmem:[%s1249 + $0x20] sm:$0xf] %v1266
                %v1268 = vld [vmem:[%s1248 + $0x24] sm:$0xf]
                %1269 = vst [vmem:[%s1249 + $0x24] sm:$0xf] %v1268
                %v1270 = vld [vmem:[%s1248 + $0x28] sm:$0xf]
                %1271 = vst [vmem:[%s1249 + $0x28] sm:$0xf] %v1270
                %v1272 = vld [vmem:[%s1248 + $0x2c] sm:$0xf]
                %1273 = vst [vmem:[%s1249 + $0x2c] sm:$0xf] %v1272
                %v1274 = vld [vmem:[%s1248 + $0x30] sm:$0xf]
                %1275 = vst [vmem:[%s1249 + $0x30] sm:$0xf] %v1274
                %v1276 = vld [vmem:[%s1248 + $0x34] sm:$0xf]
                %1277 = vst [vmem:[%s1249 + $0x34] sm:$0xf] %v1276
                %v1278 = vld [vmem:[%s1248 + $0x38] sm:$0xf]
                %1279 = vst [vmem:[%s1249 + $0x38] sm:$0xf] %v1278
                %v1280 = vld [vmem:[%s1248 + $0x3c] sm:$0xf]
                %1281 = vst [vmem:[%s1249 + $0x3c] sm:$0xf] %v1280
                %v1282 = vld [vmem:[%s1248 + $0x40] sm:$0xf]
                %1283 = vst [vmem:[%s1249 + $0x40] sm:$0xf] %v1282
                %v1284 = vld [vmem:[%s1248 + $0x44] sm:$0xf]
                %1285 = vst [vmem:[%s1249 + $0x44] sm:$0xf] %v1284
                %v1286 = vld [vmem:[%s1248 + $0x48] sm:$0xf]
                %1287 = vst [vmem:[%s1249 + $0x48] sm:$0xf] %v1286
                %v1288 = vld [vmem:[%s1248 + $0x4c] sm:$0xf]
                %1289 = vst [vmem:[%s1249 + $0x4c] sm:$0xf] %v1288
                %v1290 = vld [vmem:[%s1248 + $0x50] sm:$0xf]
                %1291 = vst [vmem:[%s1249 + $0x50] sm:$0xf] %v1290
                %v1292 = vld [vmem:[%s1248 + $0x54] sm:$0xf]
                %1293 = vst [vmem:[%s1249 + $0x54] sm:$0xf] %v1292
                %v1294 = vld [vmem:[%s1248 + $0x58] sm:$0xf]
                %1295 = vst [vmem:[%s1249 + $0x58] sm:$0xf] %v1294
                %v1296 = vld [vmem:[%s1248 + $0x5c] sm:$0xf]
                %1297 = vst [vmem:[%s1249 + $0x5c] sm:$0xf] %v1296
                %v1298 = vld [vmem:[%s1248 + $0x60] sm:$0xf]
                %1299 = vst [vmem:[%s1249 + $0x60] sm:$0xf] %v1298
                %v1300 = vld [vmem:[%s1248 + $0x64] sm:$0xf]
                %1301 = vst [vmem:[%s1249 + $0x64] sm:$0xf] %v1300
                %v1302 = vld [vmem:[%s1248 + $0x68] sm:$0xf]
                %1303 = vst [vmem:[%s1249 + $0x68] sm:$0xf] %v1302
                %v1304 = vld [vmem:[%s1248 + $0x6c] sm:$0xf]
                %1305 = vst [vmem:[%s1249 + $0x6c] sm:$0xf] %v1304
                %v1306 = vld [vmem:[%s1248 + $0x70] sm:$0xf]
                %1307 = vst [vmem:[%s1249 + $0x70] sm:$0xf] %v1306
                %v1308 = vld [vmem:[%s1248 + $0x74] sm:$0xf]
                %1309 = vst [vmem:[%s1249 + $0x74] sm:$0xf] %v1308
                %v1310 = vld [vmem:[%s1248 + $0x78] sm:$0xf]
                %1311 = vst [vmem:[%s1249 + $0x78] sm:$0xf] %v1310
                %v1312 = vld [vmem:[%s1248 + $0x7c] sm:$0xf]
                %1313 = vst [vmem:[%s1249 + $0x7c] sm:$0xf] %v1312
                %v1314 = vld [vmem:[%s1248 + $0x80] sm:$0xf]
                %1315 = vst [vmem:[%s1249 + $0x80] sm:$0xf] %v1314
                %v1316 = vld [vmem:[%s1248 + $0x84] sm:$0xf]
                %1317 = vst [vmem:[%s1249 + $0x84] sm:$0xf] %v1316
                %v1318 = vld [vmem:[%s1248 + $0x88] sm:$0xf]
                %1319 = vst [vmem:[%s1249 + $0x88] sm:$0xf] %v1318
                %v1320 = vld [vmem:[%s1248 + $0x8c] sm:$0xf]
                %1321 = vst [vmem:[%s1249 + $0x8c] sm:$0xf] %v1320
                %v1322 = vld [vmem:[%s1248 + $0x90] sm:$0xf]
                %1323 = vst [vmem:[%s1249 + $0x90] sm:$0xf] %v1322
                %v1324 = vld [vmem:[%s1248 + $0x94] sm:$0xf]
                %1325 = vst [vmem:[%s1249 + $0x94] sm:$0xf] %v1324
                %v1326 = vld [vmem:[%s1248 + $0x98] sm:$0xf]
                %1327 = vst [vmem:[%s1249 + $0x98] sm:$0xf] %v1326
                %v1328 = vld [vmem:[%s1248 + $0x9c] sm:$0xf]
                %1329 = vst [vmem:[%s1249 + $0x9c] sm:$0xf] %v1328
                %v1330 = vld [vmem:[%s1248 + $0xa0] sm:$0xf]
                %1331 = vst [vmem:[%s1249 + $0xa0] sm:$0xf] %v1330
                %v1332 = vld [vmem:[%s1248 + $0xa4] sm:$0xf]
                %1333 = vst [vmem:[%s1249 + $0xa4] sm:$0xf] %v1332
                %v1334 = vld [vmem:[%s1248 + $0xa8] sm:$0xf]
                %1335 = vst [vmem:[%s1249 + $0xa8] sm:$0xf] %v1334
                %v1336 = vld [vmem:[%s1248 + $0xac] sm:$0xf]
                %1337 = vst [vmem:[%s1249 + $0xac] sm:$0xf] %v1336
                %v1338 = vld [vmem:[%s1248 + $0xb0] sm:$0xf]
                %1339 = vst [vmem:[%s1249 + $0xb0] sm:$0xf] %v1338
                %v1340 = vld [vmem:[%s1248 + $0xb4] sm:$0xf]
                %1341 = vst [vmem:[%s1249 + $0xb4] sm:$0xf] %v1340
                %v1342 = vld [vmem:[%s1248 + $0xb8] sm:$0xf]
                %1343 = vst [vmem:[%s1249 + $0xb8] sm:$0xf] %v1342
                %v1344 = vld [vmem:[%s1248 + $0xbc] sm:$0xf]
                %1345 = vst [vmem:[%s1249 + $0xbc] sm:$0xf] %v1344
                %v1346 = vld [vmem:[%s1248 + $0xc0] sm:$0xf]
                %1347 = vst [vmem:[%s1249 + $0xc0] sm:$0xf] %v1346
                %v1348 = vld [vmem:[%s1248 + $0xc4] sm:$0xf]
                %1349 = vst [vmem:[%s1249 + $0xc4] sm:$0xf] %v1348
                %v1350 = vld [vmem:[%s1248 + $0xc8] sm:$0xf]
                %1351 = vst [vmem:[%s1249 + $0xc8] sm:$0xf] %v1350
                %v1352 = vld [vmem:[%s1248 + $0xcc] sm:$0xf]
                %1353 = vst [vmem:[%s1249 + $0xcc] sm:$0xf] %v1352
                %v1354 = vld [vmem:[%s1248 + $0xd0] sm:$0xf]
                %1355 = vst [vmem:[%s1249 + $0xd0] sm:$0xf] %v1354
                %v1356 = vld [vmem:[%s1248 + $0xd4] sm:$0xf]
                %1357 = vst [vmem:[%s1249 + $0xd4] sm:$0xf] %v1356
                %v1358 = vld [vmem:[%s1248 + $0xd8] sm:$0xf]
                %1359 = vst [vmem:[%s1249 + $0xd8] sm:$0xf] %v1358
                %v1360 = vld [vmem:[%s1248 + $0xdc] sm:$0xf]
                %1361 = vst [vmem:[%s1249 + $0xdc] sm:$0xf] %v1360
                %v1362 = vld [vmem:[%s1248 + $0xe0] sm:$0xf]
                %1363 = vst [vmem:[%s1249 + $0xe0] sm:$0xf] %v1362
                %v1364 = vld [vmem:[%s1248 + $0xe4] sm:$0xf]
                %1365 = vst [vmem:[%s1249 + $0xe4] sm:$0xf] %v1364
                %v1366 = vld [vmem:[%s1248 + $0xe8] sm:$0xf]
                %1367 = vst [vmem:[%s1249 + $0xe8] sm:$0xf] %v1366
                %v1368 = vld [vmem:[%s1248 + $0xec] sm:$0xf]
                %1369 = vst [vmem:[%s1249 + $0xec] sm:$0xf] %v1368
                %v1370 = vld [vmem:[%s1248 + $0xf0] sm:$0xf]
                %1371 = vst [vmem:[%s1249 + $0xf0] sm:$0xf] %v1370
                %v1372 = vld [vmem:[%s1248 + $0xf4] sm:$0xf]
                %1373 = vst [vmem:[%s1249 + $0xf4] sm:$0xf] %v1372
                %v1374 = vld [vmem:[%s1248 + $0xf8] sm:$0xf]
                %1375 = vst [vmem:[%s1249 + $0xf8] sm:$0xf] %v1374
                %v1376 = vld [vmem:[%s1248 + $0xfc] sm:$0xf]
                %1377 = vst [vmem:[%s1249 + $0xfc] sm:$0xf] %v1376
                %s1378 = sadd.s32 1, %s1247
                %p1379 = scmp.ge.s32.totalorder %s1378, %s1240
                %s1380 = scalar_select %p1379, 0, %s1378
                %s1381 = smul.u32 %s1380, 256
                %s1382 = smul.u32 %s1380, 256
                %s1383 = scalar_lea.vmem %s1220, %s1381 [#allocation2]
                %s1384 = scalar_lea.vmem %s1231, %s1382
              $region53: #{forward.2} parent=47 // loop_footer
                %s1244 = sadd.s32 %s1242, 1
              $region54: #{forward.2} parent=47 // loop_footer_branch
                %1241 = sbr.rel target = $region50
              $region55: #{forward.2} parent=47 // loop_exit
                _
              %s1385 = sshrl.u32 %s1227, 6
              %s1386 = sand.u32 %s1227, 63
              %s1387 = smul.u32 %s1385, 64
              %s1388 = smul.u32 4, %s1387
              %s1389 = scalar_lea.vmem %s1220, %s1388 [#allocation2]
              %s1390 = smul.u32 4, %s1387
              %s1391 = scalar_lea.vmem %s1231, %s1390
              // While loop
              $region56: #{forward.2} parent=47 // loop_pre_header
                _
              $region57: #{forward.2} parent=47 // loop_header
                %s1393 = sphi 0, %s1395
                %p1394 = scmp.ge.s32.totalorder %s1393, %s1386
                %s1398 = sphi 0, %s1405
                %s1399 = sphi %s1389, %s1408
                %s1400 = sphi %s1391, %s1409
              $region58: #{forward.2} parent=47 // loop_header_branch
                %1397 = sbr.rel (%p1394) target = $region62
              $region59: #{forward.2} parent=47 // loop_body
                %v1401 = vld [vmem:[%s1399] sm:$0xf]
                %1402 = vst [vmem:[%s1400] sm:$0xf] %v1401
                %s1403 = sadd.s32 1, %s1398
                %p1404 = scmp.ge.s32.totalorder %s1403, %s1386
                %s1405 = scalar_select %p1404, 0, %s1403
                %s1406 = smul.u32 %s1405, 4
                %s1407 = smul.u32 %s1405, 4
                %s1408 = scalar_lea.vmem %s1389, %s1406 [#allocation2]
                %s1409 = scalar_lea.vmem %s1391, %s1407
              $region60: #{forward.2} parent=47 // loop_footer
                %s1395 = sadd.s32 %s1393, 1
              $region61: #{forward.2} parent=47 // loop_footer_branch
                %1392 = sbr.rel target = $region57
              $region62: #{forward.2} parent=47 // loop_exit
                _
            $region48: #{forward.2} parent=39 // pred_fallthru
              _
          $region40: #{forward.2} parent=35 // pred_fallthru
            _
          %1583 = vnop
        $region36: #{forward.2} parent=31 // pred_fallthru
          _
      $region32: #{forward.2} parent=5 // pred_fallthru
        _
      %p1584 = scmp.le.s32.totalorder 2, %s9
      // Predicated region
      $region81: #{forward.2} parent=5 // pred_check
        %p1585 = pneg %p1584
      $region82: #{forward.2} parent=5 // pred_check_branch
        %1587 = sbr.rel (%p1585) target = $region84
      $region83: #{forward.2} parent=5 // pred_region
        %s1588 = ssub.s32 %s9, 2
        // Predicated region
        $region85: #{forward.2} parent=83 // pred_check
          %p1589 = pneg %p106
        $region86: #{forward.2} parent=83 // pred_check_branch
          %1591 = sbr.rel (%p1589) target = $region88
        $region87: #{forward.2} parent=83 // pred_region
          %s1592 = sand.u32 %s91, 1
          %s1593 = sand.u32 %s91, 1
          %s1594 = smul.addr %s1593, 256
          %s1595 = scalar_lea.vmem [#allocation2], %s1594
        $region88: #{forward.2} parent=83 // pred_fallthru
          _
      $region84: #{forward.2} parent=5 // pred_fallthru
        _
    $region6: #{forward.2} parent=1 // loop_footer
      %s13 = sadd.s32 1, %s9
    $region7: #{forward.2} parent=1 // loop_footer_branch
      %8 = sbr.rel target = $region3
    $region8: #{forward.2} parent=1 // loop_exit
      _

// kernel: forward.3
$region0: #{forward.3}
  #allocation0 [shape = 'u32[]', space=smem, size = 0x4, offset = 0x4, fixed_abs, tag = 'smem constant byte address 0x4 - core index']
  #allocation1 [shape = 'u32[144,128]{1,0:T(1,128)}', space=vmem, size = 0x12000, scoped, tag = 'internal scratch']
  #allocation2 [shape = 'f32[2,10]{1,0:T(2,128)}', space=vmem, size = 0x400, scoped, tag = 'scratch operand']
  %s0 = inlined_call_operand.vmem [shape: bf16[44,2,1408], index: 0, kind: input, shape index: {}]
  %s1 = inlined_call_operand.vmem [shape: bf16[1408,55], index: 1, kind: input, shape index: {}]
  %s2 = inlined_call_operand.vmem [shape: f32[1,55], index: 2, kind: input, shape index: {}]
  %s3 = inlined_call_operand.vmem [shape: bf16[55,61], index: 3, kind: input, shape index: {}]
  %s4 = inlined_call_operand.vmem [shape: f32[1,61], index: 4, kind: input, shape index: {}]
  %s5 = inlined_call_operand.vmem [shape: bf16[44,61,10], index: 5, kind: input, shape index: {}]
  %s6 = inlined_call_operand.hbm [shape: f32[2,10], index: 6, kind: output, shape index: {}]
  %s7 = sld [smem:[#allocation0]]
  $region65: #{forward.3} parent=0
    _
  %s9 = ssub.s32 1, %s7
  %s10 = scalar_select 0, %s9, %s7
  $region1: #{forward.3} parent=0
    #allocation3 [shape = 'u8[1024]{0}', space=vmem, size = 0x400, scoped, tag = 'output window, operand 0, single buffered']
    #allocation4 [shape = 's32[2]{0}', space=sflag, size = 0x8, scoped, tag = 'scoped memory for forward.3']
    %11 = vsyncpa [#allocation4], 0
    loop: start=0, step=1, limit=13
    $region2: #{forward.3} parent=1 // loop_pre_header
      _
    $region3: #{forward.3} parent=1 // loop_header
      %s13 = sphi 0, %s17
      %p14 = scmp.ge.s32.totalorder %s13, 13
      %s20 = sphi 0, %s32
      %s21 = sphi 0, %s28
      %s22 = sphi 0, %s20
      %s23 = sphi 0, %s21
      %s24 = sphi 0, %s22
      %s25 = sphi 0, %s23
      %s37 = sphi 0, %s39
      %s40 = sphi 0, %s37
      %s41 = sphi 0, %s40
      %s57 = sphi 0, %s41
      %s61 = sphi 0, %s61
      %s63 = sphi 0, %s61
      %s64 = sphi 0, %s63
      %s78 = sphi 0, %s64
      %s82 = sphi 0, %s82
      %s84 = sphi 0, %s82
      %s85 = sphi 0, %s84
      %s99 = sphi 0, %s85
      %s103 = sphi 0, %s103
      %s105 = sphi 0, %s103
      %s106 = sphi 0, %s105
      %s120 = sphi 0, %s106
      %s124 = sphi 0, %s124
      %s126 = sphi 0, %s124
      %s127 = sphi 0, %s126
      %s141 = sphi 0, %s127
      %s147 = sphi 0, %s149
      %s150 = sphi 0, %s147
      %s151 = sphi 0, %s150
      %s167 = sphi 0, %s151
      %s173 = sphi 0, %s175
      %s176 = sphi 0, %s173
      %s177 = sphi 0, %s176
      %s193 = sphi 0, %s177
    $region4: #{forward.3} parent=1 // loop_header_branch
      %16 = sbr.rel (%p14) target = $region8
    $region5: #{forward.3} parent=1 // loop_body
      %s18 = ssub.s32 %s13, 1
      %s19 = ssub.s32 %s13, 2
      %s26 = sadd.s32 1, %s21
      %p27 = scmp.ge.s32.totalorder %s26, 11
      %s28 = scalar_select %p27, 0, %s26
      %s29 = sadd.s32 1, %s20
      %s30 = scalar_select %p27, %s29, %s20
      %p31 = scmp.ge.s32.totalorder %s30, 1
      %s32 = scalar_select %p31, 0, %s30
      %s33 = ssub.s32 %s21, %s28
      %s34 = ssub.s32 %s20, %s32
      %s35 = sor.u32 %s33, %s34
      %p36 = scmp.eq.s32.totalorder %s35, 0
      %s38 = sadd.s32 %s37, 1
      %s39 = scalar_select %p36, %s37, %s38
      %p42 = pneg %p36
      %p43 = scmp.eq.s32.totalorder %s13, 10
      %p44 = por %p42, %p43
      %p45 = scmp.ne.s32.totalorder %s37, %s40
      %p46 = scmp.eq.s32.totalorder %s13, 0
      %p47 = por %p45, %p46
      %p48 = scmp.ne.s32.totalorder %s37, %s40
      %p49 = scmp.eq.s32.totalorder %s18, 10
      %p50 = por %p48, %p49
      %p51 = scmp.ne.s32.totalorder %s40, %s41
      %p52 = scmp.eq.s32.totalorder %s18, 0
      %p53 = por %p51, %p52
      %p54 = scmp.ne.s32.totalorder %s40, %s41
      %p55 = scmp.eq.s32.totalorder %s19, 10
      %p56 = por %p54, %p55
      %p58 = scmp.ne.s32.totalorder %s41, %s57
      %p59 = scmp.eq.s32.totalorder %s19, 0
      %p60 = por %p58, %p59
      %s62 = sadd.s32 %s61, 1
      %p65 = scmp.eq.s32.totalorder %s13, 10
      %p66 = scmp.ne.s32.totalorder %s61, %s63
      %p67 = scmp.eq.s32.totalorder %s13, 0
      %p68 = por %p66, %p67
      %p69 = scmp.ne.s32.totalorder %s61, %s63
      %p70 = scmp.eq.s32.totalorder %s18, 10
      %p71 = por %p69, %p70
      %p72 = scmp.ne.s32.totalorder %s63, %s64
      %p73 = scmp.eq.s32.totalorder %s18, 0
      %p74 = por %p72, %p73
      %p75 = scmp.ne.s32.totalorder %s63, %s64
      %p76 = scmp.eq.s32.totalorder %s19, 10
      %p77 = por %p75, %p76
      %p79 = scmp.ne.s32.totalorder %s64, %s78
      %p80 = scmp.eq.s32.totalorder %s19, 0
      %p81 = por %p79, %p80
      %s83 = sadd.s32 %s82, 1
      %p86 = scmp.eq.s32.totalorder %s13, 10
      %p87 = scmp.ne.s32.totalorder %s82, %s84
      %p88 = scmp.eq.s32.totalorder %s13, 0
      %p89 = por %p87, %p88
      %p90 = scmp.ne.s32.totalorder %s82, %s84
      %p91 = scmp.eq.s32.totalorder %s18, 10
      %p92 = por %p90, %p91
      %p93 = scmp.ne.s32.totalorder %s84, %s85
      %p94 = scmp.eq.s32.totalorder %s18, 0
      %p95 = por %p93, %p94
      %p96 = scmp.ne.s32.totalorder %s84, %s85
      %p97 = scmp.eq.s32.totalorder %s19, 10
      %p98 = por %p96, %p97
      %p100 = scmp.ne.s32.totalorder %s85, %s99
      %p101 = scmp.eq.s32.totalorder %s19, 0
      %p102 = por %p100, %p101
      %s104 = sadd.s32 %s103, 1
      %p107 = scmp.eq.s32.totalorder %s13, 10
      %p108 = scmp.ne.s32.totalorder %s103, %s105
      %p109 = scmp.eq.s32.totalorder %s13, 0
      %p110 = por %p108, %p109
      %p111 = scmp.ne.s32.totalorder %s103, %s105
      %p112 = scmp.eq.s32.totalorder %s18, 10
      %p113 = por %p111, %p112
      %p114 = scmp.ne.s32.totalorder %s105, %s106
      %p115 = scmp.eq.s32.totalorder %s18, 0
      %p116 = por %p114, %p115
      %p117 = scmp.ne.s32.totalorder %s105, %s106
      %p118 = scmp.eq.s32.totalorder %s19, 10
      %p119 = por %p117, %p118
      %p121 = scmp.ne.s32.totalorder %s106, %s120
      %p122 = scmp.eq.s32.totalorder %s19, 0
      %p123 = por %p121, %p122
      %s125 = sadd.s32 %s124, 1
      %p128 = scmp.eq.s32.totalorder %s13, 10
      %p129 = scmp.ne.s32.totalorder %s124, %s126
      %p130 = scmp.eq.s32.totalorder %s13, 0
      %p131 = por %p129, %p130
      %p132 = scmp.ne.s32.totalorder %s124, %s126
      %p133 = scmp.eq.s32.totalorder %s18, 10
      %p134 = por %p132, %p133
      %p135 = scmp.ne.s32.totalorder %s126, %s127
      %p136 = scmp.eq.s32.totalorder %s18, 0
      %p137 = por %p135, %p136
      %p138 = scmp.ne.s32.totalorder %s126, %s127
      %p139 = scmp.eq.s32.totalorder %s19, 10
      %p140 = por %p138, %p139
      %p142 = scmp.ne.s32.totalorder %s127, %s141
      %p143 = scmp.eq.s32.totalorder %s19, 0
      %p144 = por %p142, %p143
      %s145 = ssub.s32 %s21, %s28
      %p146 = scmp.eq.s32.totalorder %s145, 0
      %s148 = sadd.s32 %s147, 1
      %s149 = scalar_select %p146, %s147, %s148
      %p152 = pneg %p146
      %p153 = scmp.eq.s32.totalorder %s13, 10
      %p154 = por %p152, %p153
      %p155 = scmp.ne.s32.totalorder %s147, %s150
      %p156 = scmp.eq.s32.totalorder %s13, 0
      %p157 = por %p155, %p156
      %p158 = scmp.ne.s32.totalorder %s147, %s150
      %p159 = scmp.eq.s32.totalorder %s18, 10
      %p160 = por %p158, %p159
      %p161 = scmp.ne.s32.totalorder %s150, %s151
      %p162 = scmp.eq.s32.totalorder %s18, 0
      %p163 = por %p161, %p162
      %p164 = scmp.ne.s32.totalorder %s150, %s151
      %p165 = scmp.eq.s32.totalorder %s19, 10
      %p166 = por %p164, %p165
      %p168 = scmp.ne.s32.totalorder %s151, %s167
      %p169 = scmp.eq.s32.totalorder %s19, 0
      %p170 = por %p168, %p169
      %s171 = ssub.s32 %s20, %s32
      %p172 = scmp.eq.s32.totalorder %s171, 0
      %s174 = sadd.s32 %s173, 1
      %s175 = scalar_select %p172, %s173, %s174
      %p178 = pneg %p172
      %p179 = scmp.eq.s32.totalorder %s13, 10
      %p180 = por %p178, %p179
      %p181 = scmp.ne.s32.totalorder %s173, %s176
      %p182 = scmp.eq.s32.totalorder %s13, 0
      %p183 = por %p181, %p182
      %p184 = scmp.ne.s32.totalorder %s173, %s176
      %p185 = scmp.eq.s32.totalorder %s18, 10
      %p186 = por %p184, %p185
      %p187 = scmp.ne.s32.totalorder %s176, %s177
      %p188 = scmp.eq.s32.totalorder %s18, 0
      %p189 = por %p187, %p188
      %p190 = scmp.ne.s32.totalorder %s176, %s177
      %p191 = scmp.eq.s32.totalorder %s19, 10
      %p192 = por %p190, %p191
      %p194 = scmp.ne.s32.totalorder %s177, %s193
      %p195 = scmp.eq.s32.totalorder %s19, 0
      %p196 = por %p194, %p195
      %p197 = scmp.le.s32.totalorder 1, %s13
      %p198 = scmp.lt.s32.totalorder %s13, 12
      %p199 = pnand %p197, %p198
      %p200 = pneg %p199
      // Predicated region
      $region9: #{forward.3} parent=5 // pred_check
        _
      $region10: #{forward.3} parent=5 // pred_check_branch
        %202 = sbr.rel (%p199) target = $region12
      $region11: #{forward.3} parent=5 // pred_region
        %s203 = ssub.s32 %s13, 1
        // Predicated region
        $region13: #{forward.3} parent=11 // pred_check
          %p204 = pneg %p74
        $region14: #{forward.3} parent=11 // pred_check_branch
          %206 = sbr.rel (%p204) target = $region16
        $region15: #{forward.3} parent=11 // pred_region
          _
        $region16: #{forward.3} parent=11 // pred_fallthru
          _
        // Predicated region
        $region17: #{forward.3} parent=11 // pred_check
          %p207 = pneg %p95
        $region18: #{forward.3} parent=11 // pred_check_branch
          %209 = sbr.rel (%p207) target = $region20
        $region19: #{forward.3} parent=11 // pred_region
          _
        $region20: #{forward.3} parent=11 // pred_fallthru
          _
        // Predicated region
        $region21: #{forward.3} parent=11 // pred_check
          %p210 = pneg %p116
        $region22: #{forward.3} parent=11 // pred_check_branch
          %212 = sbr.rel (%p210) target = $region24
        $region23: #{forward.3} parent=11 // pred_region
          _
        $region24: #{forward.3} parent=11 // pred_fallthru
          _
        // Predicated region
        $region25: #{forward.3} parent=11 // pred_check
          %p213 = pneg %p137
        $region26: #{forward.3} parent=11 // pred_check_branch
          %215 = sbr.rel (%p213) target = $region28
        $region27: #{forward.3} parent=11 // pred_region
          _
        $region28: #{forward.3} parent=11 // pred_fallthru
          _
      $region12: #{forward.3} parent=5 // pred_fallthru
        _
      %p216 = scmp.lt.s32.totalorder %s13, 11
      // Predicated region
      $region29: #{forward.3} parent=5 // pred_check
        %p217 = pneg %p216
      $region30: #{forward.3} parent=5 // pred_check_branch
        %219 = sbr.rel (%p217) target = $region32
      $region31: #{forward.3} parent=5 // pred_region
        // Predicated region
        $region33: #{forward.3} parent=31 // pred_check
          %p220 = pneg %p47
        $region34: #{forward.3} parent=31 // pred_check_branch
          %222 = sbr.rel (%p220) target = $region36
        $region35: #{forward.3} parent=31 // pred_region
          %s223 = smul.u32 4, %s21
          %p224 = scmp.lt.s32.totalorder %s223, 43
          %s225 = scalar_select %p224, %s223, 43
          %p226 = scmp.lt.s32.totalorder %s20, 0
          %s227 = scalar_select %p226, %s20, 0
          %s228 = smul.addr %s227, 11
          %s229 = smul.addr %s225, 11
          %s230 = sadd.s32 %s228, %s229
          %s231 = scalar_lea.vmem %s0, %s230
          %s232 = smul.u32 4, %s21
        $region36: #{forward.3} parent=31 // pred_fallthru
          _
        // Predicated region
        $region37: #{forward.3} parent=31 // pred_check
          %p233 = pneg %p157
        $region38: #{forward.3} parent=31 // pred_check_branch
          %235 = sbr.rel (%p233) target = $region40
        $region39: #{forward.3} parent=31 // pred_region
          %s236 = smul.u32 4, %s21
          %p237 = scmp.lt.s32.totalorder %s236, 43
          %s238 = scalar_select %p237, %s236, 43
          %s239 = smul.addr %s238, 8
          %s240 = smul.addr %s239, 4
          %s241 = scalar_lea.vmem %s5, %s240
          %s242 = smul.u32 4, %s21
        $region40: #{forward.3} parent=31 // pred_fallthru
          _
      $region32: #{forward.3} parent=5 // pred_fallthru
        _
      %p243 = scmp.le.s32.totalorder 1, %s13
      %p244 = scmp.lt.s32.totalorder %s13, 12
      %p245 = pnand %p243, %p244
      %p246 = pneg %p245
      // Predicated region
      $region41: #{forward.3} parent=5 // pred_check
        _
      $region42: #{forward.3} parent=5 // pred_check_branch
        %248 = sbr.rel (%p245) target = $region44
      $region43: #{forward.3} parent=5 // pred_region
        %s249 = ssub.s32 %s13, 1
        %s250 = smul.u32 4, %s23
        %p251 = scmp.lt.s32.totalorder %s250, 43
        %s252 = scalar_select %p251, %s250, 43
        %p253 = scmp.lt.s32.totalorder %s22, 0
        %s254 = scalar_select %p253, %s22, 0
        %s255 = smul.addr %s254, 11
        %s256 = smul.addr %s252, 11
        %s257 = sadd.s32 %s255, %s256
        %s258 = scalar_lea.vmem %s0, %s257
        %p259 = pneg %p53
        %p260 = pneg %p50
        %p261 = pneg %p74
        %p262 = pneg %p71
        %p263 = pneg %p95
        %p264 = pneg %p92
        %p265 = pneg %p116
        %p266 = pneg %p113
        %p267 = pneg %p137
        %p268 = pneg %p134
        %s269 = smul.u32 4, %s23
        %p270 = scmp.lt.s32.totalorder %s269, 43
        %s271 = scalar_select %p270, %s269, 43
        %s272 = smul.addr %s271, 8
        %s273 = smul.addr %s272, 4
        %s274 = scalar_lea.vmem %s5, %s273
        %p275 = pneg %p163
        %p276 = pneg %p160
        %p277 = pneg %p189
        %p278 = pneg %p186
        %s279 = smul.u32 4, %s23
        %p280 = scmp.lt.s32.totalorder %s279, 43
        %s281 = scalar_select %p280, %s279, 43
        %p282 = scmp.lt.s32.totalorder %s22, 0
        %s283 = scalar_select %p282, %s22, 0
        %s284 = smul.addr %s283, 11
        %s285 = smul.addr %s281, 11
        %s286 = sadd.s32 %s284, %s285
        %s287 = scalar_lea.vmem %s0, %s286
        %s288 = smul.u32 4, %s23
        %s289 = smul.u32 4, %s23
        %p290 = scmp.lt.s32.totalorder %s289, 43
        %s291 = scalar_select %p290, %s289, 43
        %s292 = smul.addr %s291, 8
        %s293 = smul.addr %s292, 4
        %s294 = scalar_lea.vmem %s5, %s293
        %s295 = smul.u32 4, %s23
        %p297 = scmp.eq.s32.totalorder %s23, 0
        // Predicated region
        $region45: #{forward.3} parent=43 // pred_check
          %p298 = pneg %p297
        $region46: #{forward.3} parent=43 // pred_check_branch
          %300 = sbr.rel (%p298) target = $region48
        $region47: #{forward.3} parent=43 // pred_region
          %vm301 = vcmask 74752
          %302 = vst.msk [vmem:[#allocation2] sm:$0x3] %vm301, 0.0
        $region48: #{forward.3} parent=43 // pred_fallthru
          _
        %v303 = vld [vmem:[%s287] sm:$0xff]
        %v304 = vld [vmem:[%s287 + $0x8] sm:$0x7]
        %v305 = vld [vmem:[%s1] sm:$0xf]
        %v306 = vld [vmem:[%s1 + $0x4] sm:$0xf]
        %v307 = vld [vmem:[%s1 + $0x8] sm:$0xf]
        %v308 = vld [vmem:[%s1 + $0xc] sm:$0xf]
        %v309 = vld [vmem:[%s1 + $0x10] sm:$0xf]
        %v310 = vld [vmem:[%s1 + $0x14] sm:$0xf]
        %v311 = vld [vmem:[%s1 + $0x18] sm:$0xf]
        %v312 = vld [vmem:[%s1 + $0x1c] sm:$0xf]
        %v313 = vld [vmem:[%s1 + $0x20] sm:$0xf]
        %v314 = vld [vmem:[%s1 + $0x24] sm:$0xf]
        %v315 = vld [vmem:[%s1 + $0x28] sm:$0xf]
        %v316 = vld [vmem:[%s1 + $0x2c] sm:$0xf]
        %v317 = vld [vmem:[%s1 + $0x30] sm:$0xf]
        %v318 = vld [vmem:[%s1 + $0x34] sm:$0xf]
        %v319 = vld [vmem:[%s1 + $0x38] sm:$0xf]
        %v320 = vld [vmem:[%s1 + $0x3c] sm:$0xf]
        %v321 = vld [vmem:[%s1 + $0x40] sm:$0xf]
        %v322 = vld [vmem:[%s1 + $0x44] sm:$0xf]
        %v323 = vld [vmem:[%s1 + $0x48] sm:$0xf]
        %v324 = vld [vmem:[%s1 + $0x4c] sm:$0xf]
        %v325 = vld [vmem:[%s1 + $0x50] sm:$0xf]
        %v326 = vld [vmem:[%s1 + $0x54] sm:$0xf]
        %v327 = vld [vmem:[%s1 + $0x58] sm:$0xf]
        %v328 = vld [vmem:[%s1 + $0x5c] sm:$0xf]
        %v329 = vld [vmem:[%s1 + $0x60] sm:$0xf]
        %v330 = vld [vmem:[%s1 + $0x64] sm:$0xf]
        %v331 = vld [vmem:[%s1 + $0x68] sm:$0xf]
        %v332 = vld [vmem:[%s1 + $0x6c] sm:$0xf]
        %v333 = vld [vmem:[%s1 + $0x70] sm:$0xf]
        %v334 = vld [vmem:[%s1 + $0x74] sm:$0xf]
        %v335 = vld [vmem:[%s1 + $0x78] sm:$0xf]
        %v336 = vld [vmem:[%s1 + $0x7c] sm:$0xf]
        %v337 = vld [vmem:[%s1 + $0x80] sm:$0xf]
        %v338 = vld [vmem:[%s1 + $0x84] sm:$0xf]
        %v339 = vld [vmem:[%s1 + $0x88] sm:$0xf]
        %v340 = vld [vmem:[%s1 + $0x8c] sm:$0xf]
        %v341 = vld [vmem:[%s1 + $0x90] sm:$0xf]
        %v342 = vld [vmem:[%s1 + $0x94] sm:$0xf]
        %v343 = vld [vmem:[%s1 + $0x98] sm:$0xf]
        %v344 = vld [vmem:[%s1 + $0x9c] sm:$0xf]
        %v345 = vld [vmem:[%s1 + $0xa0] sm:$0xf]
        %v346 = vld [vmem:[%s1 + $0xa4] sm:$0xf]
        %v347 = vld [vmem:[%s1 + $0xa8] sm:$0xf]
        %v348 = vld [vmem:[%s1 + $0xac] sm:$0xf]
        %v349 = vld [vmem:[%s1 + $0xb0] sm:$0xf]
        %v350 = vld [vmem:[%s1 + $0xb4] sm:$0xf]
        %v351 = vld [vmem:[%s1 + $0xb8] sm:$0xf]
        %v352 = vld [vmem:[%s1 + $0xbc] sm:$0xf]
        %v353 = vld [vmem:[%s1 + $0xc0] sm:$0xf]
        %v354 = vld [vmem:[%s1 + $0xc4] sm:$0xf]
        %v355 = vld [vmem:[%s1 + $0xc8] sm:$0xf]
        %v356 = vld [vmem:[%s1 + $0xcc] sm:$0xf]
        %v357 = vld [vmem:[%s1 + $0xd0] sm:$0xf]
        %v358 = vld [vmem:[%s1 + $0xd4] sm:$0xf]
        %v359 = vld [vmem:[%s1 + $0xd8] sm:$0xf]
        %v360 = vld [vmem:[%s1 + $0xdc] sm:$0xf]
        %v361 = vld [vmem:[%s1 + $0xe0] sm:$0xf]
        %v362 = vld [vmem:[%s1 + $0xe4] sm:$0xf]
        %v363 = vld [vmem:[%s1 + $0xe8] sm:$0xf]
        %v364 = vld [vmem:[%s1 + $0xec] sm:$0xf]
        %v365 = vld [vmem:[%s1 + $0xf0] sm:$0xf]
        %v366 = vld [vmem:[%s1 + $0xf4] sm:$0xf]
        %v367 = vld [vmem:[%s1 + $0xf8] sm:$0xf]
        %v368 = vld [vmem:[%s1 + $0xfc] sm:$0xf]
        %v369 = vld [vmem:[%s1 + $0x100] sm:$0xf]
        %v370 = vld [vmem:[%s1 + $0x104] sm:$0xf]
        %v371 = vld [vmem:[%s1 + $0x108] sm:$0xf]
        %v372 = vld [vmem:[%s1 + $0x10c] sm:$0xf]
        %v373 = vld [vmem:[%s1 + $0x110] sm:$0xf]
        %v374 = vld [vmem:[%s1 + $0x114] sm:$0xf]
        %v375 = vld [vmem:[%s1 + $0x118] sm:$0xf]
        %v376 = vld [vmem:[%s1 + $0x11c] sm:$0xf]
        %v377 = vld [vmem:[%s1 + $0x120] sm:$0xf]
        %v378 = vld [vmem:[%s1 + $0x124] sm:$0xf]
        %v379 = vld [vmem:[%s1 + $0x128] sm:$0xf]
        %v380 = vld [vmem:[%s1 + $0x12c] sm:$0xf]
        %v381 = vld [vmem:[%s1 + $0x130] sm:$0xf]
        %v382 = vld [vmem:[%s1 + $0x134] sm:$0xf]
        %v383 = vld [vmem:[%s1 + $0x138] sm:$0xf]
        %v384 = vld [vmem:[%s1 + $0x13c] sm:$0xf]
        %v385 = vld [vmem:[%s1 + $0x140] sm:$0xf]
        %v386 = vld [vmem:[%s1 + $0x144] sm:$0xf]
        %v387 = vld [vmem:[%s1 + $0x148] sm:$0xf]
        %v388 = vld [vmem:[%s1 + $0x14c] sm:$0xf]
        %v389 = vld [vmem:[%s1 + $0x150] sm:$0xf]
        %v390 = vld [vmem:[%s1 + $0x154] sm:$0xf]
        %v391 = vld [vmem:[%s1 + $0x158] sm:$0xf]
        %v392 = vld [vmem:[%s1 + $0x15c] sm:$0xf]
        %v393 = vld [vmem:[%s1 + $0x160] sm:$0xf]
        %v394 = vld [vmem:[%s1 + $0x164] sm:$0xf]
        %v395 = vld [vmem:[%s1 + $0x168] sm:$0xf]
        %v396 = vld [vmem:[%s1 + $0x16c] sm:$0xf]
        %v397 = vld [vmem:[%s1 + $0x170] sm:$0xf]
        %v398 = vld [vmem:[%s1 + $0x174] sm:$0xf]
        %v399 = vld [vmem:[%s1 + $0x178] sm:$0xf]
        %v400 = vld [vmem:[%s1 + $0x17c] sm:$0xf]
        %v401 = vld [vmem:[%s1 + $0x180] sm:$0xf]
        %v402 = vld [vmem:[%s1 + $0x184] sm:$0xf]
        %v403 = vld [vmem:[%s1 + $0x188] sm:$0xf]
        %v404 = vld [vmem:[%s1 + $0x18c] sm:$0xf]
        %v405 = vld [vmem:[%s1 + $0x190] sm:$0xf]
        %v406 = vld [vmem:[%s1 + $0x194] sm:$0xf]
        %v407 = vld [vmem:[%s1 + $0x198] sm:$0xf]
        %v408 = vld [vmem:[%s1 + $0x19c] sm:$0xf]
        %v409 = vld [vmem:[%s1 + $0x1a0] sm:$0xf]
        %v410 = vld [vmem:[%s1 + $0x1a4] sm:$0xf]
        %v411 = vld [vmem:[%s1 + $0x1a8] sm:$0xf]
        %v412 = vld [vmem:[%s1 + $0x1ac] sm:$0xf]
        %v413 = vld [vmem:[%s1 + $0x1b0] sm:$0xf]
        %v414 = vld [vmem:[%s1 + $0x1b4] sm:$0xf]
        %v415 = vld [vmem:[%s1 + $0x1b8] sm:$0xf]
        %v416 = vld [vmem:[%s1 + $0x1bc] sm:$0xf]
        %v417 = vld [vmem:[%s1 + $0x1c0] sm:$0xf]
        %v418 = vld [vmem:[%s1 + $0x1c4] sm:$0xf]
        %v419 = vld [vmem:[%s1 + $0x1c8] sm:$0xf]
        %v420 = vld [vmem:[%s1 + $0x1cc] sm:$0xf]
        %v421 = vld [vmem:[%s1 + $0x1d0] sm:$0xf]
        %v422 = vld [vmem:[%s1 + $0x1d4] sm:$0xf]
        %v423 = vld [vmem:[%s1 + $0x1d8] sm:$0xf]
        %v424 = vld [vmem:[%s1 + $0x1dc] sm:$0xf]
        %v425 = vld [vmem:[%s1 + $0x1e0] sm:$0xf]
        %v426 = vld [vmem:[%s1 + $0x1e4] sm:$0xf]
        %v427 = vld [vmem:[%s1 + $0x1e8] sm:$0xf]
        %v428 = vld [vmem:[%s1 + $0x1ec] sm:$0xf]
        %v429 = vld [vmem:[%s1 + $0x1f0] sm:$0xf]
        %v430 = vld [vmem:[%s1 + $0x1f4] sm:$0xf]
        %v431 = vld [vmem:[%s1 + $0x1f8] sm:$0xf]
        %v432 = vld [vmem:[%s1 + $0x1fc] sm:$0xf]
        %v433 = vld [vmem:[%s1 + $0x200] sm:$0xf]
        %v434 = vld [vmem:[%s1 + $0x204] sm:$0xf]
        %v435 = vld [vmem:[%s1 + $0x208] sm:$0xf]
        %v436 = vld [vmem:[%s1 + $0x20c] sm:$0xf]
        %v437 = vld [vmem:[%s1 + $0x210] sm:$0xf]
        %v438 = vld [vmem:[%s1 + $0x214] sm:$0xf]
        %v439 = vld [vmem:[%s1 + $0x218] sm:$0xf]
        %v440 = vld [vmem:[%s1 + $0x21c] sm:$0xf]
        %v441 = vld [vmem:[%s1 + $0x220] sm:$0xf]
        %v442 = vld [vmem:[%s1 + $0x224] sm:$0xf]
        %v443 = vld [vmem:[%s1 + $0x228] sm:$0xf]
        %v444 = vld [vmem:[%s1 + $0x22c] sm:$0xf]
        %v445 = vld [vmem:[%s1 + $0x230] sm:$0xf]
        %v446 = vld [vmem:[%s1 + $0x234] sm:$0xf]
        %v447 = vld [vmem:[%s1 + $0x238] sm:$0xf]
        %v448 = vld [vmem:[%s1 + $0x23c] sm:$0xf]
        %v449 = vld [vmem:[%s1 + $0x240] sm:$0xf]
        %v450 = vld [vmem:[%s1 + $0x244] sm:$0xf]
        %v451 = vld [vmem:[%s1 + $0x248] sm:$0xf]
        %v452 = vld [vmem:[%s1 + $0x24c] sm:$0xf]
        %v453 = vld [vmem:[%s1 + $0x250] sm:$0xf]
        %v454 = vld [vmem:[%s1 + $0x254] sm:$0xf]
        %v455 = vld [vmem:[%s1 + $0x258] sm:$0xf]
        %v456 = vld [vmem:[%s1 + $0x25c] sm:$0xf]
        %v457 = vld [vmem:[%s1 + $0x260] sm:$0xf]
        %v458 = vld [vmem:[%s1 + $0x264] sm:$0xf]
        %v459 = vld [vmem:[%s1 + $0x268] sm:$0xf]
        %v460 = vld [vmem:[%s1 + $0x26c] sm:$0xf]
        %v461 = vld [vmem:[%s1 + $0x270] sm:$0xf]
        %v462 = vld [vmem:[%s1 + $0x274] sm:$0xf]
        %v463 = vld [vmem:[%s1 + $0x278] sm:$0xf]
        %v464 = vld [vmem:[%s1 + $0x27c] sm:$0xf]
        %v465 = vld [vmem:[%s1 + $0x280] sm:$0xf]
        %v466 = vld [vmem:[%s1 + $0x284] sm:$0xf]
        %v467 = vld [vmem:[%s1 + $0x288] sm:$0xf]
        %v468 = vld [vmem:[%s1 + $0x28c] sm:$0xf]
        %v469 = vld [vmem:[%s1 + $0x290] sm:$0xf]
        %v470 = vld [vmem:[%s1 + $0x294] sm:$0xf]
        %v471 = vld [vmem:[%s1 + $0x298] sm:$0xf]
        %v472 = vld [vmem:[%s1 + $0x29c] sm:$0xf]
        %v473 = vld [vmem:[%s1 + $0x2a0] sm:$0xf]
        %v474 = vld [vmem:[%s1 + $0x2a4] sm:$0xf]
        %v475 = vld [vmem:[%s1 + $0x2a8] sm:$0xf]
        %v476 = vld [vmem:[%s1 + $0x2ac] sm:$0xf]
        %v477 = vld [vmem:[%s1 + $0x2b0] sm:$0xf]
        %v478 = vld [vmem:[%s1 + $0x2b4] sm:$0xf]
        %v479 = vld [vmem:[%s1 + $0x2b8] sm:$0xf]
        %v480 = vld [vmem:[%s1 + $0x2bc] sm:$0xf]
        %v481 = vld [vmem:[%s2] sm:$0x1]
        %v483 = vlaneseq
        %v484 = vshrl.u32 %v483, 7
        %v485 = vsub.s32 0, %v484
        %v486 = vrot.slane %v481, %v485
        %v490 = vcombine.high %v303, %v303
        %v492 = vunpack.c.l.s4 1966171168
        %v493 = vunpack.c.0.s8 %v492
        %v494 = vlaneseq
        %v495 = vshrl.u32 %v494, 7
        %v496 = vsub.s32 %v493, %v495
        %v497 = vrot.slane %v303, %v496
        %v499 = vunpack.c.l.s4 1966171168
        %v500 = vunpack.c.0.s8 %v499
        %v501 = vlaneseq
        %v502 = vshrl.u32 %v501, 7
        %v503 = vsub.s32 %v500, %v502
        %v504 = vrot.slane %v490, %v503
        %v505 = vcombine.high %v497, %v497
        %v506 = vcombine.high %v504, %v504
        %v508 = vunpack.c.l.s4 1966171168
        %v509 = vunpack.c.0.s8 %v508
        %v510 = vlaneseq
        %v511 = vshrl.u32 %v510, 7
        %v512 = vsub.s32 %v509, %v511
        %v513 = vrot.slane %v497, %v512
        %v515 = vunpack.c.l.s4 1966171168
        %v516 = vunpack.c.0.s8 %v515
        %v517 = vlaneseq
        %v518 = vshrl.u32 %v517, 7
        %v519 = vsub.s32 %v516, %v518
        %v520 = vrot.slane %v504, %v519
        %v522 = vunpack.c.l.s4 1966171168
        %v523 = vunpack.c.0.s8 %v522
        %v524 = vlaneseq
        %v525 = vshrl.u32 %v524, 7
        %v526 = vsub.s32 %v523, %v525
        %v527 = vrot.slane %v505, %v526
        %v529 = vunpack.c.l.s4 1966171168
        %v530 = vunpack.c.0.s8 %v529
        %v531 = vlaneseq
        %v532 = vshrl.u32 %v531, 7
        %v533 = vsub.s32 %v530, %v532
        %v534 = vrot.slane %v506, %v533
        %v535 = vcombine.high %v513, %v513
        %v536 = vcombine.high %v520, %v520
        %v537 = vcombine.high %v527, %v527
        %v538 = vcombine.high %v534, %v534
        %v540 = vunpack.c.l.s4 1966171168
        %v541 = vunpack.c.0.s8 %v540
        %v542 = vlaneseq
        %v543 = vshrl.u32 %v542, 7
        %v544 = vsub.s32 %v541, %v543
        %v545 = vrot.slane %v304, %v544
        %v546 = vcombine.high %v545, %v545
        %v548 = vunpack.c.l.s4 1966171168
        %v549 = vunpack.c.0.s8 %v548
        %v550 = vlaneseq
        %v551 = vshrl.u32 %v550, 7
        %v552 = vsub.s32 %v549, %v551
        %v553 = vrot.slane %v545, %v552
        %v555 = vunpack.c.l.s4 1966171168
        %v556 = vunpack.c.0.s8 %v555
        %v557 = vlaneseq
        %v558 = vshrl.u32 %v557, 7
        %v559 = vsub.s32 %v556, %v558
        %v560 = vrot.slane %v546, %v559
        %v561 = vcombine.high %v553, %v553
        %v749 = vunpack.c.l.b16 %v305
        %v750 = vunpack.c.l.b16 %v306
        %v751 = vunpack.c.l.b16 %v307
        %v752 = vunpack.c.l.b16 %v308
        %v753 = vunpack.c.l.b16 %v309
        %v754 = vunpack.c.l.b16 %v310
        %v755 = vunpack.c.l.b16 %v311
        %v756 = vunpack.c.l.b16 %v312
        %v757 = vunpack.c.l.b16 %v313
        %v758 = vunpack.c.l.b16 %v314
        %v759 = vunpack.c.l.b16 %v315
        %v760 = vunpack.c.l.b16 %v316
        %v761 = vunpack.c.l.b16 %v317
        %v762 = vunpack.c.l.b16 %v318
        %v763 = vunpack.c.l.b16 %v319
        %v764 = vunpack.c.l.b16 %v320
        %v765 = vunpack.c.l.b16 %v321
        %v766 = vunpack.c.l.b16 %v322
        %v767 = vunpack.c.l.b16 %v323
        %v768 = vunpack.c.l.b16 %v324
        %v769 = vunpack.c.l.b16 %v325
        %v770 = vunpack.c.l.b16 %v326
        %v771 = vunpack.c.l.b16 %v327
        %v772 = vunpack.c.l.b16 %v328
        %v773 = vunpack.c.l.b16 %v329
        %v774 = vunpack.c.l.b16 %v330
        %v775 = vunpack.c.l.b16 %v331
        %v776 = vunpack.c.l.b16 %v332
        %v777 = vunpack.c.l.b16 %v333
        %v778 = vunpack.c.l.b16 %v334
        %v779 = vunpack.c.l.b16 %v335
        %v780 = vunpack.c.l.b16 %v336
        %v781 = vunpack.c.l.b16 %v337
        %v782 = vunpack.c.l.b16 %v338
        %v783 = vunpack.c.l.b16 %v339
        %v784 = vunpack.c.l.b16 %v340
        %v785 = vunpack.c.l.b16 %v341
        %v786 = vunpack.c.l.b16 %v342
        %v787 = vunpack.c.l.b16 %v343
        %v788 = vunpack.c.l.b16 %v344
        %v789 = vunpack.c.l.b16 %v345
        %v790 = vunpack.c.l.b16 %v346
        %v791 = vunpack.c.l.b16 %v347
        %v792 = vunpack.c.l.b16 %v348
        %v793 = vunpack.c.l.b16 %v349
        %v794 = vunpack.c.l.b16 %v350
        %v795 = vunpack.c.l.b16 %v351
        %v796 = vunpack.c.l.b16 %v352
        %v797 = vunpack.c.l.b16 %v353
        %v798 = vunpack.c.l.b16 %v354
        %v799 = vunpack.c.l.b16 %v355
        %v800 = vunpack.c.l.b16 %v356
        %v801 = vunpack.c.l.b16 %v357
        %v802 = vunpack.c.l.b16 %v358
        %v803 = vunpack.c.l.b16 %v359
        %v804 = vunpack.c.l.b16 %v360
        %v805 = vunpack.c.l.b16 %v361
        %v806 = vunpack.c.l.b16 %v362
        %v807 = vunpack.c.l.b16 %v363
        %v808 = vunpack.c.l.b16 %v364
        %v809 = vunpack.c.l.b16 %v365
        %v810 = vunpack.c.l.b16 %v366
        %v811 = vunpack.c.l.b16 %v367
        %v812 = vunpack.c.l.b16 %v368
        %v813 = vunpack.c.l.b16 %v369
        %v814 = vunpack.c.l.b16 %v370
        %v815 = vunpack.c.l.b16 %v371
        %v816 = vunpack.c.l.b16 %v372
        %v817 = vunpack.c.l.b16 %v373
        %v818 = vunpack.c.l.b16 %v374
        %v819 = vunpack.c.l.b16 %v375
        %v820 = vunpack.c.l.b16 %v376
        %v821 = vunpack.c.l.b16 %v377
        %v822 = vunpack.c.l.b16 %v378
        %v823 = vunpack.c.l.b16 %v379
        %v824 = vunpack.c.l.b16 %v380
        %v825 = vunpack.c.l.b16 %v381
        %v826 = vunpack.c.l.b16 %v382
        %v827 = vunpack.c.l.b16 %v383
        %v828 = vunpack.c.l.b16 %v384
        %v829 = vunpack.c.l.b16 %v385
        %v830 = vunpack.c.l.b16 %v386
        %v831 = vunpack.c.l.b16 %v387
        %v832 = vunpack.c.l.b16 %v388
        %v833 = vunpack.c.l.b16 %v389
        %v834 = vunpack.c.l.b16 %v390
        %v835 = vunpack.c.l.b16 %v391
        %v836 = vunpack.c.l.b16 %v392
        %v837 = vunpack.c.l.b16 %v393
        %v838 = vunpack.c.l.b16 %v394
        %v839 = vunpack.c.l.b16 %v395
        %v840 = vunpack.c.l.b16 %v396
        %v841 = vunpack.c.l.b16 %v397
        %v842 = vunpack.c.l.b16 %v398
        %v843 = vunpack.c.l.b16 %v399
        %v844 = vunpack.c.l.b16 %v400
        %v845 = vunpack.c.l.b16 %v401
        %v846 = vunpack.c.l.b16 %v402
        %v847 = vunpack.c.l.b16 %v403
        %v848 = vunpack.c.l.b16 %v404
        %v849 = vunpack.c.l.b16 %v405
        %v850 = vunpack.c.l.b16 %v406
        %v851 = vunpack.c.l.b16 %v407
        %v852 = vunpack.c.l.b16 %v408
        %v853 = vunpack.c.l.b16 %v409
        %v854 = vunpack.c.l.b16 %v410
        %v855 = vunpack.c.l.b16 %v411
        %v856 = vunpack.c.l.b16 %v412
        %v857 = vunpack.c.l.b16 %v413
        %v858 = vunpack.c.l.b16 %v414
        %v859 = vunpack.c.l.b16 %v415
        %v860 = vunpack.c.l.b16 %v416
        %v861 = vunpack.c.l.b16 %v417
        %v862 = vunpack.c.l.b16 %v418
        %v863 = vunpack.c.l.b16 %v419
        %v864 = vunpack.c.l.b16 %v420
        %v865 = vunpack.c.l.b16 %v421
        %v866 = vunpack.c.l.b16 %v422
        %v867 = vunpack.c.l.b16 %v423
        %v868 = vunpack.c.l.b16 %v424
        %v869 = vunpack.c.l.b16 %v425
        %v870 = vunpack.c.l.b16 %v426
        %v871 = vunpack.c.l.b16 %v427
        %v872 = vunpack.c.l.b16 %v428
        %v873 = vunpack.c.l.b16 %v429
        %v874 = vunpack.c.l.b16 %v430
        %v875 = vunpack.c.l.b16 %v431
        %v876 = vunpack.c.l.b16 %v432
        %v877 = vunpack.c.l.b16 %v433
        %v878 = vunpack.c.l.b16 %v434
        %v879 = vunpack.c.l.b16 %v435
        %v880 = vunpack.c.l.b16 %v436
        %v881 = vunpack.c.l.b16 %v437
        %v882 = vunpack.c.l.b16 %v438
        %v883 = vunpack.c.l.b16 %v439
        %v884 = vunpack.c.l.b16 %v440
        %v885 = vunpack.c.l.b16 %v441
        %v886 = vunpack.c.l.b16 %v442
        %v887 = vunpack.c.l.b16 %v443
        %v888 = vunpack.c.l.b16 %v444
        %v889 = vunpack.c.l.b16 %v445
        %v890 = vunpack.c.l.b16 %v446
        %v891 = vunpack.c.l.b16 %v447
        %v892 = vunpack.c.l.b16 %v448
        %v893 = vunpack.c.l.b16 %v449
        %v894 = vunpack.c.l.b16 %v450
        %v895 = vunpack.c.l.b16 %v451
        %v896 = vunpack.c.l.b16 %v452
        %v897 = vunpack.c.l.b16 %v453
        %v898 = vunpack.c.l.b16 %v454
        %v899 = vunpack.c.l.b16 %v455
        %v900 = vunpack.c.l.b16 %v456
        %v901 = vunpack.c.l.b16 %v457
        %v902 = vunpack.c.l.b16 %v458
        %v903 = vunpack.c.l.b16 %v459
        %v904 = vunpack.c.l.b16 %v460
        %v905 = vunpack.c.l.b16 %v461
        %v906 = vunpack.c.l.b16 %v462
        %v907 = vunpack.c.l.b16 %v463
        %v908 = vunpack.c.l.b16 %v464
        %v909 = vunpack.c.l.b16 %v465
        %v910 = vunpack.c.l.b16 %v466
        %v911 = vunpack.c.l.b16 %v467
        %v912 = vunpack.c.l.b16 %v468
        %v913 = vunpack.c.l.b16 %v469
        %v914 = vunpack.c.l.b16 %v470
        %v915 = vunpack.c.l.b16 %v471
        %v916 = vunpack.c.l.b16 %v472
        %v917 = vunpack.c.l.b16 %v473
        %v918 = vunpack.c.l.b16 %v474
        %v919 = vunpack.c.l.b16 %v475
        %v920 = vunpack.c.l.b16 %v476
        %v921 = vunpack.c.l.b16 %v477
        %v922 = vunpack.c.l.b16 %v478
        %v923 = vunpack.c.l.b16 %v479
        %v924 = vunpack.c.l.b16 %v480
        %v925 = vpack.c.b16 %v750, %v749
        %v926 = vpack.c.b16 %v752, %v751
        %v927 = vpack.c.b16 %v754, %v753
        %v928 = vpack.c.b16 %v756, %v755
        %v929 = vpack.c.b16 %v758, %v757
        %v930 = vpack.c.b16 %v760, %v759
        %v931 = vpack.c.b16 %v762, %v761
        %v932 = vpack.c.b16 %v764, %v763
        %v933 = vpack.c.b16 %v766, %v765
        %v934 = vpack.c.b16 %v768, %v767
        %v935 = vpack.c.b16 %v770, %v769
        %v936 = vpack.c.b16 %v772, %v771
        %v937 = vpack.c.b16 %v774, %v773
        %v938 = vpack.c.b16 %v776, %v775
        %v939 = vpack.c.b16 %v778, %v777
        %v940 = vpack.c.b16 %v780, %v779
        %v941 = vpack.c.b16 %v782, %v781
        %v942 = vpack.c.b16 %v784, %v783
        %v943 = vpack.c.b16 %v786, %v785
        %v944 = vpack.c.b16 %v788, %v787
        %v945 = vpack.c.b16 %v790, %v789
        %v946 = vpack.c.b16 %v792, %v791
        %v947 = vpack.c.b16 %v794, %v793
        %v948 = vpack.c.b16 %v796, %v795
        %v949 = vpack.c.b16 %v798, %v797
        %v950 = vpack.c.b16 %v800, %v799
        %v951 = vpack.c.b16 %v802, %v801
        %v952 = vpack.c.b16 %v804, %v803
        %v953 = vpack.c.b16 %v806, %v805
        %v954 = vpack.c.b16 %v808, %v807
        %v955 = vpack.c.b16 %v810, %v809
        %v956 = vpack.c.b16 %v812, %v811
        %v957 = vpack.c.b16 %v814, %v813
        %v958 = vpack.c.b16 %v816, %v815
        %v959 = vpack.c.b16 %v818, %v817
        %v960 = vpack.c.b16 %v820, %v819
        %v961 = vpack.c.b16 %v822, %v821
        %v962 = vpack.c.b16 %v824, %v823
        %v963 = vpack.c.b16 %v826, %v825
        %v964 = vpack.c.b16 %v828, %v827
        %v965 = vpack.c.b16 %v830, %v829
        %v966 = vpack.c.b16 %v832, %v831
        %v967 = vpack.c.b16 %v834, %v833
        %v968 = vpack.c.b16 %v836, %v835
        %v969 = vpack.c.b16 %v838, %v837
        %v970 = vpack.c.b16 %v840, %v839
        %v971 = vpack.c.b16 %v842, %v841
        %v972 = vpack.c.b16 %v844, %v843
        %v973 = vpack.c.b16 %v846, %v845
        %v974 = vpack.c.b16 %v848, %v847
        %v975 = vpack.c.b16 %v850, %v849
        %v976 = vpack.c.b16 %v852, %v851
        %v977 = vpack.c.b16 %v854, %v853
        %v978 = vpack.c.b16 %v856, %v855
        %v979 = vpack.c.b16 %v858, %v857
        %v980 = vpack.c.b16 %v860, %v859
        %v981 = vpack.c.b16 %v862, %v861
        %v982 = vpack.c.b16 %v864, %v863
        %v983 = vpack.c.b16 %v866, %v865
        %v984 = vpack.c.b16 %v868, %v867
        %v985 = vpack.c.b16 %v870, %v869
        %v986 = vpack.c.b16 %v872, %v871
        %v987 = vpack.c.b16 %v874, %v873
        %v988 = vpack.c.b16 %v876, %v875
        %v989 = vpack.c.b16 %v878, %v877
        %v990 = vpack.c.b16 %v880, %v879
        %v991 = vpack.c.b16 %v882, %v881
        %v992 = vpack.c.b16 %v884, %v883
        %v993 = vpack.c.b16 %v886, %v885
        %v994 = vpack.c.b16 %v888, %v887
        %v995 = vpack.c.b16 %v890, %v889
        %v996 = vpack.c.b16 %v892, %v891
        %v997 = vpack.c.b16 %v894, %v893
        %v998 = vpack.c.b16 %v896, %v895
        %v999 = vpack.c.b16 %v898, %v897
        %v1000 = vpack.c.b16 %v900, %v899
        %v1001 = vpack.c.b16 %v902, %v901
        %v1002 = vpack.c.b16 %v904, %v903
        %v1003 = vpack.c.b16 %v906, %v905
        %v1004 = vpack.c.b16 %v908, %v907
        %v1005 = vpack.c.b16 %v910, %v909
        %v1006 = vpack.c.b16 %v912, %v911
        %v1007 = vpack.c.b16 %v914, %v913
        %v1008 = vpack.c.b16 %v916, %v915
        %v1009 = vpack.c.b16 %v918, %v917
        %v1010 = vpack.c.b16 %v920, %v919
        %v1011 = vpack.c.b16 %v922, %v921
        %v1012 = vpack.c.b16 %v924, %v923
        %1101 = vmatprep.subr.bf16.mxu0 0
        %1102 = vmatpush1.bf16.msra.mxu0 %v925
        %1103 = vmatprep.subr.bf16.mxu0 0
        %1104 = vmatpush1.bf16.msra.mxu0 %v926
        %1105 = vmatprep.subr.bf16.mxu0 0
        %1106 = vmatpush1.bf16.msra.mxu0 %v927
        %1107 = vmatprep.subr.bf16.mxu0 0
        %1108 = vmatpush1.bf16.msra.mxu0 %v928
        %1109 = vmatprep.subr.bf16.mxu0 0
        %1110 = vmatpush1.bf16.msra.mxu0 %v929
        %1111 = vmatprep.subr.bf16.mxu0 0
        %1112 = vmatpush1.bf16.msra.mxu0 %v930
        %1113 = vmatprep.subr.bf16.mxu0 0
        %1114 = vmatpush1.bf16.msra.mxu0 %v931
        %1115 = vmatprep.subr.bf16.mxu0 0
        %1116 = vmatpush1.bf16.msra.mxu0 %v932
        %1117 = vmatprep.subr.bf16.mxu0 0
        %1118 = vmatpush1.bf16.msra.mxu0 %v933
        %1119 = vmatprep.subr.bf16.mxu0 0
        %1120 = vmatpush1.bf16.msra.mxu0 %v934
        %1121 = vmatprep.subr.bf16.mxu0 0
        %1122 = vmatpush1.bf16.msra.mxu0 %v935
        %1123 = vmatprep.subr.bf16.mxu0 0
        %1124 = vmatpush1.bf16.msra.mxu0 %v936
        %1125 = vmatprep.subr.bf16.mxu0 0
        %1126 = vmatpush1.bf16.msra.mxu0 %v937
        %1127 = vmatprep.subr.bf16.mxu0 0
        %1128 = vmatpush1.bf16.msra.mxu0 %v938
        %1129 = vmatprep.subr.bf16.mxu0 0
        %1130 = vmatpush1.bf16.msra.mxu0 %v939
        %1131 = vmatprep.subr.bf16.mxu0 0
        %1132 = vmatpush1.bf16.msra.mxu0 %v940
        %1133 = vmatprep.mubr.bf16.mxu0 %v527
        %1134 = vmatmul.mubr.bf16.gmra.mrb[0].mxu0 %v513
        %v1135 = vpop.f32.mrb[0].mxu0
        %v1136 = vadd.f32 %v486, %v1135
        %v1137 = vpop.f32.mrb[0].mxu0
        %v1138 = vpop.f32.mrb[0].mxu0
        %v1139 = vpop.f32.mrb[0].mxu0
        %1140 = vdwg.mxu0
        %1141 = vmatprep.subr.bf16.mxu0 0
        %1142 = vmatpush1.bf16.msra.mxu0 %v941
        %1143 = vmatprep.subr.bf16.mxu0 0
        %1144 = vmatpush1.bf16.msra.mxu0 %v942
        %1145 = vmatprep.subr.bf16.mxu0 0
        %1146 = vmatpush1.bf16.msra.mxu0 %v943
        %1147 = vmatprep.subr.bf16.mxu0 0
        %1148 = vmatpush1.bf16.msra.mxu0 %v944
        %1149 = vmatprep.subr.bf16.mxu0 0
        %1150 = vmatpush1.bf16.msra.mxu0 %v945
        %1151 = vmatprep.subr.bf16.mxu0 0
        %1152 = vmatpush1.bf16.msra.mxu0 %v946
        %1153 = vmatprep.subr.bf16.mxu0 0
        %1154 = vmatpush1.bf16.msra.mxu0 %v947
        %1155 = vmatprep.subr.bf16.mxu0 0
        %1156 = vmatpush1.bf16.msra.mxu0 %v948
        %1157 = vmatprep.subr.bf16.mxu0 0
        %1158 = vmatpush1.bf16.msra.mxu0 %v949
        %1159 = vmatprep.subr.bf16.mxu0 0
        %1160 = vmatpush1.bf16.msra.mxu0 %v950
        %1161 = vmatprep.subr.bf16.mxu0 0
        %1162 = vmatpush1.bf16.msra.mxu0 %v951
        %1163 = vmatprep.subr.bf16.mxu0 0
        %1164 = vmatpush1.bf16.msra.mxu0 %v952
        %1165 = vmatprep.subr.bf16.mxu0 0
        %1166 = vmatpush1.bf16.msra.mxu0 %v953
        %1167 = vmatprep.subr.bf16.mxu0 0
        %1168 = vmatpush1.bf16.msra.mxu0 %v954
        %1169 = vmatprep.subr.bf16.mxu0 0
        %1170 = vmatpush1.bf16.msra.mxu0 %v955
        %1171 = vmatprep.subr.bf16.mxu0 0
        %1172 = vmatpush1.bf16.msra.mxu0 %v956
        %1173 = vmatprep.mubr.bf16.mxu0 %v537
        %1174 = vmatmul.mubr.bf16.gmra.mrb[0].mxu0 %v535
        %v1175 = vpop.f32.mrb[0].mxu0
        %v1176 = vadd.f32 %v1136, %v1175
        %v1177 = vpop.f32.mrb[0].mxu0
        %v1178 = vpop.f32.mrb[0].mxu0
        %v1179 = vpop.f32.mrb[0].mxu0
        %1180 = vdwg.mxu0
        %1181 = vmatprep.subr.bf16.mxu0 0
        %1182 = vmatpush1.bf16.msra.mxu0 %v957
        %1183 = vmatprep.subr.bf16.mxu0 0
        %1184 = vmatpush1.bf16.msra.mxu0 %v958
        %1185 = vmatprep.subr.bf16.mxu0 0
        %1186 = vmatpush1.bf16.msra.mxu0 %v959
        %1187 = vmatprep.subr.bf16.mxu0 0
        %1188 = vmatpush1.bf16.msra.mxu0 %v960
        %1189 = vmatprep.subr.bf16.mxu0 0
        %1190 = vmatpush1.bf16.msra.mxu0 %v961
        %1191 = vmatprep.subr.bf16.mxu0 0
        %1192 = vmatpush1.bf16.msra.mxu0 %v962
        %1193 = vmatprep.subr.bf16.mxu0 0
        %1194 = vmatpush1.bf16.msra.mxu0 %v963
        %1195 = vmatprep.subr.bf16.mxu0 0
        %1196 = vmatpush1.bf16.msra.mxu0 %v964
        %1197 = vmatprep.subr.bf16.mxu0 0
        %1198 = vmatpush1.bf16.msra.mxu0 %v965
        %1199 = vmatprep.subr.bf16.mxu0 0
        %1200 = vmatpush1.bf16.msra.mxu0 %v966
        %1201 = vmatprep.subr.bf16.mxu0 0
        %1202 = vmatpush1.bf16.msra.mxu0 %v967
        %1203 = vmatprep.subr.bf16.mxu0 0
        %1204 = vmatpush1.bf16.msra.mxu0 %v968
        %1205 = vmatprep.subr.bf16.mxu0 0
        %1206 = vmatpush1.bf16.msra.mxu0 %v969
        %1207 = vmatprep.subr.bf16.mxu0 0
        %1208 = vmatpush1.bf16.msra.mxu0 %v970
        %1209 = vmatprep.subr.bf16.mxu0 0
        %1210 = vmatpush1.bf16.msra.mxu0 %v971
        %1211 = vmatprep.subr.bf16.mxu0 0
        %1212 = vmatpush1.bf16.msra.mxu0 %v972
        %1213 = vmatprep.mubr.bf16.mxu0 %v534
        %1214 = vmatmul.mubr.bf16.gmra.mrb[0].mxu0 %v520
        %v1215 = vpop.f32.mrb[0].mxu0
        %v1216 = vadd.f32 %v1176, %v1215
        %v1217 = vpop.f32.mrb[0].mxu0
        %v1218 = vpop.f32.mrb[0].mxu0
        %v1219 = vpop.f32.mrb[0].mxu0
        %1220 = vdwg.mxu0
        %1221 = vmatprep.subr.bf16.mxu0 0
        %1222 = vmatpush1.bf16.msra.mxu0 %v973
        %1223 = vmatprep.subr.bf16.mxu0 0
        %1224 = vmatpush1.bf16.msra.mxu0 %v974
        %1225 = vmatprep.subr.bf16.mxu0 0
        %1226 = vmatpush1.bf16.msra.mxu0 %v975
        %1227 = vmatprep.subr.bf16.mxu0 0
        %1228 = vmatpush1.bf16.msra.mxu0 %v976
        %1229 = vmatprep.subr.bf16.mxu0 0
        %1230 = vmatpush1.bf16.msra.mxu0 %v977
        %1231 = vmatprep.subr.bf16.mxu0 0
        %1232 = vmatpush1.bf16.msra.mxu0 %v978
        %1233 = vmatprep.subr.bf16.mxu0 0
        %1234 = vmatpush1.bf16.msra.mxu0 %v979
        %1235 = vmatprep.subr.bf16.mxu0 0
        %1236 = vmatpush1.bf16.msra.mxu0 %v980
        %1237 = vmatprep.subr.bf16.mxu0 0
        %1238 = vmatpush1.bf16.msra.mxu0 %v981
        %1239 = vmatprep.subr.bf16.mxu0 0
        %1240 = vmatpush1.bf16.msra.mxu0 %v982
        %1241 = vmatprep.subr.bf16.mxu0 0
        %1242 = vmatpush1.bf16.msra.mxu0 %v983
        %1243 = vmatprep.subr.bf16.mxu0 0
        %1244 = vmatpush1.bf16.msra.mxu0 %v984
        %1245 = vmatprep.subr.bf16.mxu0 0
        %1246 = vmatpush1.bf16.msra.mxu0 %v985
        %1247 = vmatprep.subr.bf16.mxu0 0
        %1248 = vmatpush1.bf16.msra.mxu0 %v986
        %1249 = vmatprep.subr.bf16.mxu0 0
        %1250 = vmatpush1.bf16.msra.mxu0 %v987
        %1251 = vmatprep.subr.bf16.mxu0 0
        %1252 = vmatpush1.bf16.msra.mxu0 %v988
        %1253 = vmatprep.mubr.bf16.mxu0 %v538
        %1254 = vmatmul.mubr.bf16.gmra.mrb[0].mxu0 %v536
        %v1255 = vpop.f32.mrb[0].mxu0
        %v1256 = vadd.f32 %v1216, %v1255
        %v1257 = vpop.f32.mrb[0].mxu0
        %v1258 = vpop.f32.mrb[0].mxu0
        %v1259 = vpop.f32.mrb[0].mxu0
        %1260 = vdwg.mxu0
        %1261 = vmatprep.subr.bf16.mxu0 0
        %1262 = vmatpush1.bf16.msra.mxu0 %v989
        %1263 = vmatprep.subr.bf16.mxu0 0
        %1264 = vmatpush1.bf16.msra.mxu0 %v990
        %1265 = vmatprep.subr.bf16.mxu0 0
        %1266 = vmatpush1.bf16.msra.mxu0 %v991
        %1267 = vmatprep.subr.bf16.mxu0 0
        %1268 = vmatpush1.bf16.msra.mxu0 %v992
        %1269 = vmatprep.subr.bf16.mxu0 0
        %1270 = vmatpush1.bf16.msra.mxu0 %v993
        %1271 = vmatprep.subr.bf16.mxu0 0
        %1272 = vmatpush1.bf16.msra.mxu0 %v994
        %1273 = vmatprep.subr.bf16.mxu0 0
        %1274 = vmatpush1.bf16.msra.mxu0 %v995
        %1275 = vmatprep.subr.bf16.mxu0 0
        %1276 = vmatpush1.bf16.msra.mxu0 %v996
        %1277 = vmatprep.subr.bf16.mxu0 0
        %1278 = vmatpush1.bf16.msra.mxu0 %v997
        %1279 = vmatprep.subr.bf16.mxu0 0
        %1280 = vmatpush1.bf16.msra.mxu0 %v998
        %1281 = vmatprep.subr.bf16.mxu0 0
        %1282 = vmatpush1.bf16.msra.mxu0 %v999
        %1283 = vmatprep.subr.bf16.mxu0 0
        %1284 = vmatpush1.bf16.msra.mxu0 %v1000
        %1285 = vmatprep.subr.bf16.mxu0 0
        %1286 = vmatpush1.bf16.msra.mxu0 %v1001
        %1287 = vmatprep.subr.bf16.mxu0 0
        %1288 = vmatpush1.bf16.msra.mxu0 %v1002
        %1289 = vmatprep.subr.bf16.mxu0 0
        %1290 = vmatpush1.bf16.msra.mxu0 %v1003
        %1291 = vmatprep.subr.bf16.mxu0 0
        %1292 = vmatpush1.bf16.msra.mxu0 %v1004
        %1293 = vmatprep.mubr.bf16.mxu0 %v560
        %1294 = vmatmul.mubr.bf16.gmra.mrb[0].mxu0 %v553
        %v1295 = vpop.f32.mrb[0].mxu0
        %v1296 = vadd.f32 %v1256, %v1295
        %v1297 = vpop.f32.mrb[0].mxu0
        %v1298 = vpop.f32.mrb[0].mxu0
        %v1299 = vpop.f32.mrb[0].mxu0
        %1300 = vdwg.mxu0
        %1301 = vmatprep.subr.bf16.mxu0 0
        %1302 = vmatpush1.bf16.msra.mxu0 %v1005
        %1303 = vmatprep.subr.bf16.mxu0 0
        %1304 = vmatpush1.bf16.msra.mxu0 %v1006
        %1305 = vmatprep.subr.bf16.mxu0 0
        %1306 = vmatpush1.bf16.msra.mxu0 %v1007
        %1307 = vmatprep.subr.bf16.mxu0 0
        %1308 = vmatpush1.bf16.msra.mxu0 %v1008
        %1309 = vmatprep.subr.bf16.mxu0 0
        %1310 = vmatpush1.bf16.msra.mxu0 %v1009
        %1311 = vmatprep.subr.bf16.mxu0 0
        %1312 = vmatpush1.bf16.msra.mxu0 %v1010
        %1313 = vmatprep.subr.bf16.mxu0 0
        %1314 = vmatpush1.bf16.msra.mxu0 %v1011
        %1315 = vmatprep.subr.bf16.mxu0 0
        %1316 = vmatpush1.bf16.msra.mxu0 %v1012
        %1317 = vmatprep.subr.bf16.mxu0 0
        %1318 = vmatpush1.bf16.msra.mxu0 0
        %1319 = vmatprep.subr.bf16.mxu0 0
        %1320 = vmatpush1.bf16.msra.mxu0 0
        %1321 = vmatprep.subr.bf16.mxu0 0
        %1322 = vmatpush1.bf16.msra.mxu0 0
        %1323 = vmatprep.subr.bf16.mxu0 0
        %1324 = vmatpush1.bf16.msra.mxu0 0
        %1325 = vmatprep.subr.bf16.mxu0 0
        %1326 = vmatpush1.bf16.msra.mxu0 0
        %1327 = vmatprep.subr.bf16.mxu0 0
        %1328 = vmatpush1.bf16.msra.mxu0 0
        %1329 = vmatprep.subr.bf16.mxu0 0
        %1330 = vmatpush1.bf16.msra.mxu0 0
        %1331 = vmatprep.subr.bf16.mxu0 0
        %1332 = vmatpush1.bf16.msra.mxu0 0
        %1333 = vmatprep.mubr.bf16.mxu0 0
        %1334 = vmatmul.mubr.bf16.gmra.mrb[0].mxu0 %v561
        %v1335 = vpop.f32.mrb[0].mxu0
        %v1336 = vadd.f32 %v1296, %v1335
        %v1337 = vpop.f32.mrb[0].mxu0
        %v1338 = vpop.f32.mrb[0].mxu0
        %v1339 = vpop.f32.mrb[0].mxu0
        %1340 = vdwg.mxu0
        %v1341 = vtanh.pop %v1336
        %v1342 = vpack.c.bf16 %v1341, %v1341
        %v1343 = vld [vmem:[%s3] sm:$0xf]
        %v1344 = vld [vmem:[%s3 + $0x4] sm:$0xf]
        %v1345 = vld [vmem:[%s3 + $0x8] sm:$0xf]
        %v1346 = vld [vmem:[%s3 + $0xc] sm:$0xf]
        %v1347 = vld [vmem:[%s3 + $0x10] sm:$0xf]
        %v1348 = vld [vmem:[%s3 + $0x14] sm:$0xf]
        %v1349 = vld [vmem:[%s3 + $0x18] sm:$0xf]
        %v1350 = vld [vmem:[%s4] sm:$0x1]
        %v1352 = vlaneseq
        %v1353 = vshrl.u32 %v1352, 7
        %v1354 = vsub.s32 0, %v1353
        %v1355 = vrot.slane %v1350, %v1354
        %v1364 = vunpack.c.l.b16 %v1343
        %v1365 = vunpack.c.l.b16 %v1344
        %v1366 = vunpack.c.l.b16 %v1345
        %v1367 = vunpack.c.l.b16 %v1346
        %v1368 = vunpack.c.l.b16 %v1347
        %v1369 = vunpack.c.l.b16 %v1348
        %v1370 = vunpack.c.l.b16 %v1349
        %v1371 = vpack.c.b16 %v1365, %v1364
        %v1372 = vpack.c.b16 %v1367, %v1366
        %v1373 = vpack.c.b16 %v1369, %v1368
        %v1374 = vpack.c.b16 %v1370, %v1370
        %vm1378 = vcmask 449536
        %v1380 = vsel %vm1378, %v1342, 0
        %vm1382 = vcmask 1042432
        %vm1383 = vcmask 1043456
        %v1384 = vsel %vm1382, 4294967295, 65535
        %v1385 = vsel %vm1383, %v1384, 0
        %v1387 = vand.u32 %v1374, %v1385
        %1389 = vmatprep.subr.bf16.mxu0 0
        %1390 = vmatpush1.bf16.msra.mxu0 %v1371
        %1391 = vmatprep.subr.bf16.mxu0 0
        %1392 = vmatpush1.bf16.msra.mxu0 %v1372
        %1393 = vmatprep.subr.bf16.mxu0 0
        %1394 = vmatpush1.bf16.msra.mxu0 %v1373
        %1395 = vmatprep.subr.bf16.mxu0 0
        %1396 = vmatpush1.bf16.msra.mxu0 %v1387
        %1397 = vmatprep.subr.bf16.mxu0 0
        %1398 = vmatpush1.bf16.msra.mxu0 0
        %1399 = vmatprep.subr.bf16.mxu0 0
        %1400 = vmatpush1.bf16.msra.mxu0 0
        %1401 = vmatprep.subr.bf16.mxu0 0
        %1402 = vmatpush1.bf16.msra.mxu0 0
        %1403 = vmatprep.subr.bf16.mxu0 0
        %1404 = vmatpush1.bf16.msra.mxu0 0
        %1405 = vmatprep.subr.bf16.mxu0 0
        %1406 = vmatpush1.bf16.msra.mxu0 0
        %1407 = vmatprep.subr.bf16.mxu0 0
        %1408 = vmatpush1.bf16.msra.mxu0 0
        %1409 = vmatprep.subr.bf16.mxu0 0
        %1410 = vmatpush1.bf16.msra.mxu0 0
        %1411 = vmatprep.subr.bf16.mxu0 0
        %1412 = vmatpush1.bf16.msra.mxu0 0
        %1413 = vmatprep.subr.bf16.mxu0 0
        %1414 = vmatpush1.bf16.msra.mxu0 0
        %1415 = vmatprep.subr.bf16.mxu0 0
        %1416 = vmatpush1.bf16.msra.mxu0 0
        %1417 = vmatprep.subr.bf16.mxu0 0
        %1418 = vmatpush1.bf16.msra.mxu0 0
        %1419 = vmatprep.subr.bf16.mxu0 0
        %1420 = vmatpush1.bf16.msra.mxu0 0
        %1421 = vmatprep.mubr.bf16.mxu0 0
        %1422 = vmatmul.mubr.bf16.gmra.mrb[0].mxu0 %v1380
        %v1423 = vpop.f32.mrb[0].mxu0
        %v1424 = vadd.f32 %v1355, %v1423
        %v1425 = vpop.f32.mrb[0].mxu0
        %v1426 = vpop.f32.mrb[0].mxu0
        %v1427 = vpop.f32.mrb[0].mxu0
        %1428 = vdwg.mxu0
        %v1429 = vtanh.pop %v1424
        %v1430 = vld [vmem:[#allocation2] sm:$0x3]
        %v1431 = vpack.c.bf16 %v1429, %v1429
        %v1432 = vld [vmem:[%s294] sm:$0xf]
        %v1433 = vld [vmem:[%s294 + $0x4] sm:$0xf]
        %v1434 = vld [vmem:[%s294 + $0x8] sm:$0xf]
        %v1435 = vld [vmem:[%s294 + $0xc] sm:$0xf]
        %v1436 = vld [vmem:[%s294 + $0x10] sm:$0xf]
        %v1437 = vld [vmem:[%s294 + $0x14] sm:$0xf]
        %v1438 = vld [vmem:[%s294 + $0x18] sm:$0xf]
        %v1439 = vld [vmem:[%s294 + $0x1c] sm:$0x7]
        %v1448 = vunpack.c.l.b16 %v1432
        %v1449 = vunpack.c.l.b16 %v1433
        %v1450 = vunpack.c.l.b16 %v1434
        %v1451 = vunpack.c.l.b16 %v1435
        %v1452 = vunpack.c.l.b16 %v1436
        %v1453 = vunpack.c.l.b16 %v1437
        %v1454 = vunpack.c.l.b16 %v1438
        %v1455 = vunpack.c.l.b16 %v1439
        %v1456 = vpack.c.b16 %v1449, %v1448
        %v1457 = vpack.c.b16 %v1451, %v1450
        %v1458 = vpack.c.b16 %v1453, %v1452
        %v1459 = vpack.c.b16 %v1455, %v1454
        %vm1463 = vcmask 498688
        %v1465 = vsel %vm1463, %v1431, 0
        %vm1467 = vcmask 1045504
        %vm1468 = vcmask 1046528
        %v1469 = vsel %vm1467, 4294967295, 65535
        %v1470 = vsel %vm1468, %v1469, 0
        %v1472 = vand.u32 %v1459, %v1470
        %1474 = vmatprep.subr.bf16.mxu0 0
        %1475 = vmatpush1.bf16.msra.mxu0 %v1456
        %1476 = vmatprep.subr.bf16.mxu0 0
        %1477 = vmatpush1.bf16.msra.mxu0 %v1457
        %1478 = vmatprep.subr.bf16.mxu0 0
        %1479 = vmatpush1.bf16.msra.mxu0 %v1458
        %1480 = vmatprep.subr.bf16.mxu0 0
        %1481 = vmatpush1.bf16.msra.mxu0 %v1472
        %1482 = vmatprep.subr.bf16.mxu0 0
        %1483 = vmatpush1.bf16.msra.mxu0 0
        %1484 = vmatprep.subr.bf16.mxu0 0
        %1485 = vmatpush1.bf16.msra.mxu0 0
        %1486 = vmatprep.subr.bf16.mxu0 0
        %1487 = vmatpush1.bf16.msra.mxu0 0
        %1488 = vmatprep.subr.bf16.mxu0 0
        %1489 = vmatpush1.bf16.msra.mxu0 0
        %1490 = vmatprep.subr.bf16.mxu0 0
        %1491 = vmatpush1.bf16.msra.mxu0 0
        %1492 = vmatprep.subr.bf16.mxu0 0
        %1493 = vmatpush1.bf16.msra.mxu0 0
        %1494 = vmatprep.subr.bf16.mxu0 0
        %1495 = vmatpush1.bf16.msra.mxu0 0
        %1496 = vmatprep.subr.bf16.mxu0 0
        %1497 = vmatpush1.bf16.msra.mxu0 0
        %1498 = vmatprep.subr.bf16.mxu0 0
        %1499 = vmatpush1.bf16.msra.mxu0 0
        %1500 = vmatprep.subr.bf16.mxu0 0
        %1501 = vmatpush1.bf16.msra.mxu0 0
        %1502 = vmatprep.subr.bf16.mxu0 0
        %1503 = vmatpush1.bf16.msra.mxu0 0
        %1504 = vmatprep.subr.bf16.mxu0 0
        %1505 = vmatpush1.bf16.msra.mxu0 0
        %1506 = vmatprep.mubr.bf16.mxu0 0
        %1507 = vmatmul.mubr.bf16.gmra.mrb[0].mxu0 %v1465
        %v1508 = vpop.f32.mrb[0].mxu0
        %v1509 = vadd.f32 0.0, %v1508
        %v1510 = vpop.f32.mrb[0].mxu0
        %v1511 = vpop.f32.mrb[0].mxu0
        %v1512 = vpop.f32.mrb[0].mxu0
        %1513 = vdwg.mxu0
        %v1514 = vadd.f32 %v1430, %v1509
        %vm1515 = vcmask 74752
        %1516 = vst.msk [vmem:[#allocation2] sm:$0x3] %vm1515, %v1514
        %s1517 = scalar_lea.vmem %s287, 11
        %v1518 = vld [vmem:[%s1517] sm:$0xff]
        %v1519 = vld [vmem:[%s1517 + $0x8] sm:$0x7]
        %v1520 = vld [vmem:[%s1] sm:$0xf]
        %v1521 = vld [vmem:[%s1 + $0x4] sm:$0xf]
        %v1522 = vld [vmem:[%s1 + $0x8] sm:$0xf]
        %v1523 = vld [vmem:[%s1 + $0xc] sm:$0xf]
        %v1524 = vld [vmem:[%s1 + $0x10] sm:$0xf]
        %v1525 = vld [vmem:[%s1 + $0x14] sm:$0xf]
        %v1526 = vld [vmem:[%s1 + $0x18] sm:$0xf]
        %v1527 = vld [vmem:[%s1 + $0x1c] sm:$0xf]
        %v1528 = vld [vmem:[%s1 + $0x20] sm:$0xf]
        %v1529 = vld [vmem:[%s1 + $0x24] sm:$0xf]
        %v1530 = vld [vmem:[%s1 + $0x28] sm:$0xf]
        %v1531 = vld [vmem:[%s1 + $0x2c] sm:$0xf]
        %v1532 = vld [vmem:[%s1 + $0x30] sm:$0xf]
        %v1533 = vld [vmem:[%s1 + $0x34] sm:$0xf]
        %v1534 = vld [vmem:[%s1 + $0x38] sm:$0xf]
        %v1535 = vld [vmem:[%s1 + $0x3c] sm:$0xf]
        %v1536 = vld [vmem:[%s1 + $0x40] sm:$0xf]
        %v1537 = vld [vmem:[%s1 + $0x44] sm:$0xf]
        %v1538 = vld [vmem:[%s1 + $0x48] sm:$0xf]
        %v1539 = vld [vmem:[%s1 + $0x4c] sm:$0xf]
        %v1540 = vld [vmem:[%s1 + $0x50] sm:$0xf]
        %v1541 = vld [vmem:[%s1 + $0x54] sm:$0xf]
        %v1542 = vld [vmem:[%s1 + $0x58] sm:$0xf]
        %v1543 = vld [vmem:[%s1 + $0x5c] sm:$0xf]
        %v1544 = vld [vmem:[%s1 + $0x60] sm:$0xf]
        %v1545 = vld [vmem:[%s1 + $0x64] sm:$0xf]
        %v1546 = vld [vmem:[%s1 + $0x68] sm:$0xf]
        %v1547 = vld [vmem:[%s1 + $0x6c] sm:$0xf]
        %v1548 = vld [vmem:[%s1 + $0x70] sm:$0xf]
        %v1549 = vld [vmem:[%s1 + $0x74] sm:$0xf]
        %v1550 = vld [vmem:[%s1 + $0x78] sm:$0xf]
        %v1551 = vld [vmem:[%s1 + $0x7c] sm:$0xf]
        %v1552 = vld [vmem:[%s1 + $0x80] sm:$0xf]
        %v1553 = vld [vmem:[%s1 + $0x84] sm:$0xf]
        %v1554 = vld [vmem:[%s1 + $0x88] sm:$0xf]
        %v1555 = vld [vmem:[%s1 + $0x8c] sm:$0xf]
        %v1556 = vld [vmem:[%s1 + $0x90] sm:$0xf]
        %v1557 = vld [vmem:[%s1 + $0x94] sm:$0xf]
        %v1558 = vld [vmem:[%s1 + $0x98] sm:$0xf]
        %v1559 = vld [vmem:[%s1 + $0x9c] sm:$0xf]
        %v1560 = vld [vmem:[%s1 + $0xa0] sm:$0xf]
        %v1561 = vld [vmem:[%s1 + $0xa4] sm:$0xf]
        %v1562 = vld [vmem:[%s1 + $0xa8] sm:$0xf]
        %v1563 = vld [vmem:[%s1 + $0xac] sm:$0xf]
        %v1564 = vld [vmem:[%s1 + $0xb0] sm:$0xf]
        %v1565 = vld [vmem:[%s1 + $0xb4] sm:$0xf]
        %v1566 = vld [vmem:[%s1 + $0xb8] sm:$0xf]
        %v1567 = vld [vmem:[%s1 + $0xbc] sm:$0xf]
        %v1568 = vld [vmem:[%s1 + $0xc0] sm:$0xf]
        %v1569 = vld [vmem:[%s1 + $0xc4] sm:$0xf]
        %v1570 = vld [vmem:[%s1 + $0xc8] sm:$0xf]
        %v1571 = vld [vmem:[%s1 + $0xcc] sm:$0xf]
        %v1572 = vld [vmem:[%s1 + $0xd0] sm:$0xf]
        %v1573 = vld [vmem:[%s1 + $0xd4] sm:$0xf]
        %v1574 = vld [vmem:[%s1 + $0xd8] sm:$0xf]
        %v1575 = vld [vmem:[%s1 + $0xdc] sm:$0xf]
        %v1576 = vld [vmem:[%s1 + $0xe0] sm:$0xf]
        %v1577 = vld [vmem:[%s1 + $0xe4] sm:$0xf]
        %v1578 = vld [vmem:[%s1 + $0xe8] sm:$0xf]
        %v1579 = vld [vmem:[%s1 + $0xec] sm:$0xf]
        %v1580 = vld [vmem:[%s1 + $0xf0] sm:$0xf]
        %v1581 = vld [vmem:[%s1 + $0xf4] sm:$0xf]
        %v1582 = vld [vmem:[%s1 + $0xf8] sm:$0xf]
        %v1583 = vld [vmem:[%s1 + $0xfc] sm:$0xf]
        %v1584 = vld [vmem:[%s1 + $0x100] sm:$0xf]
        %v1585 = vld [vmem:[%s1 + $0x104] sm:$0xf]
        %v1586 = vld [vmem:[%s1 + $0x108] sm:$0xf]
        %v1587 = vld [vmem:[%s1 + $0x10c] sm:$0xf]
        %v1588 = vld [vmem:[%s1 + $0x110] sm:$0xf]
        %v1589 = vld [vmem:[%s1 + $0x114] sm:$0xf]
        %v1590 = vld [vmem:[%s1 + $0x118] sm:$0xf]
        %v1591 = vld [vmem:[%s1 + $0x11c] sm:$0xf]
        %v1592 = vld [vmem:[%s1 + $0x120] sm:$0xf]
        %v1593 = vld [vmem:[%s1 + $0x124] sm:$0xf]
        %v1594 = vld [vmem:[%s1 + $0x128] sm:$0xf]
        %v1595 = vld [vmem:[%s1 + $0x12c] sm:$0xf]
        %v1596 = vld [vmem:[%s1 + $0x130] sm:$0xf]
        %v1597 = vld [vmem:[%s1 + $0x134] sm:$0xf]
        %v1598 = vld [vmem:[%s1 + $0x138] sm:$0xf]
        %v1599 = vld [vmem:[%s1 + $0x13c] sm:$0xf]
        %v1600 = vld [vmem:[%s1 + $0x140] sm:$0xf]
        %v1601 = vld [vmem:[%s1 + $0x144] sm:$0xf]
        %v1602 = vld [vmem:[%s1 + $0x148] sm:$0xf]
        %v1603 = vld [vmem:[%s1 + $0x14c] sm:$0xf]
        %v1604 = vld [vmem:[%s1 + $0x150] sm:$0xf]
        %v1605 = vld [vmem:[%s1 + $0x154] sm:$0xf]
        %v1606 = vld [vmem:[%s1 + $0x158] sm:$0xf]
        %v1607 = vld [vmem:[%s1 + $0x15c] sm:$0xf]
        %v1608 = vld [vmem:[%s1 + $0x160] sm:$0xf]
        %v1609 = vld [vmem:[%s1 + $0x164] sm:$0xf]
        %v1610 = vld [vmem:[%s1 + $0x168] sm:$0xf]
        %v1611 = vld [vmem:[%s1 + $0x16c] sm:$0xf]
        %v1612 = vld [vmem:[%s1 + $0x170] sm:$0xf]
        %v1613 = vld [vmem:[%s1 + $0x174] sm:$0xf]
        %v1614 = vld [vmem:[%s1 + $0x178] sm:$0xf]
        %v1615 = vld [vmem:[%s1 + $0x17c] sm:$0xf]
        %v1616 = vld [vmem:[%s1 + $0x180] sm:$0xf]
        %v1617 = vld [vmem:[%s1 + $0x184] sm:$0xf]
        %v1618 = vld [vmem:[%s1 + $0x188] sm:$0xf]
        %v1619 = vld [vmem:[%s1 + $0x18c] sm:$0xf]
        %v1620 = vld [vmem:[%s1 + $0x190] sm:$0xf]
        %v1621 = vld [vmem:[%s1 + $0x194] sm:$0xf]
        %v1622 = vld [vmem:[%s1 + $0x198] sm:$0xf]
        %v1623 = vld [vmem:[%s1 + $0x19c] sm:$0xf]
        %v1624 = vld [vmem:[%s1 + $0x1a0] sm:$0xf]
        %v1625 = vld [vmem:[%s1 + $0x1a4] sm:$0xf]
        %v1626 = vld [vmem:[%s1 + $0x1a8] sm:$0xf]
        %v1627 = vld [vmem:[%s1 + $0x1ac] sm:$0xf]
        %v1628 = vld [vmem:[%s1 + $0x1b0] sm:$0xf]
        %v1629 = vld [vmem:[%s1 + $0x1b4] sm:$0xf]
        %v1630 = vld [vmem:[%s1 + $0x1b8] sm:$0xf]
        %v1631 = vld [vmem:[%s1 + $0x1bc] sm:$0xf]
        %v1632 = vld [vmem:[%s1 + $0x1c0] sm:$0xf]
        %v1633 = vld [vmem:[%s1 + $0x1c4] sm:$0xf]
        %v1634 = vld [vmem:[%s1 + $0x1c8] sm:$0xf]
        %v1635 = vld [vmem:[%s1 + $0x1cc] sm:$0xf]
        %v1636 = vld [vmem:[%s1 + $0x1d0] sm:$0xf]
        %v1637 = vld [vmem:[%s1 + $0x1d4] sm:$0xf]
        %v1638 = vld [vmem:[%s1 + $0x1d8] sm:$0xf]
        %v1639 = vld [vmem:[%s1 + $0x1dc] sm:$0xf]
        %v1640 = vld [vmem:[%s1 + $0x1e0] sm:$0xf]
        %v1641 = vld [vmem:[%s1 + $0x1e4] sm:$0xf]
        %v1642 = vld [vmem:[%s1 + $0x1e8] sm:$0xf]
        %v1643 = vld [vmem:[%s1 + $0x1ec] sm:$0xf]
        %v1644 = vld [vmem:[%s1 + $0x1f0] sm:$0xf]
        %v1645 = vld [vmem:[%s1 + $0x1f4] sm:$0xf]
        %v1646 = vld [vmem:[%s1 + $0x1f8] sm:$0xf]
        %v1647 = vld [vmem:[%s1 + $0x1fc] sm:$0xf]
        %v1648 = vld [vmem:[%s1 + $0x200] sm:$0xf]
        %v1649 = vld [vmem:[%s1 + $0x204] sm:$0xf]
        %v1650 = vld [vmem:[%s1 + $0x208] sm:$0xf]
        %v1651 = vld [vmem:[%s1 + $0x20c] sm:$0xf]
        %v1652 = vld [vmem:[%s1 + $0x210] sm:$0xf]
        %v1653 = vld [vmem:[%s1 + $0x214] sm:$0xf]
        %v1654 = vld [vmem:[%s1 + $0x218] sm:$0xf]
        %v1655 = vld [vmem:[%s1 + $0x21c] sm:$0xf]
        %v1656 = vld [vmem:[%s1 + $0x220] sm:$0xf]
        %v1657 = vld [vmem:[%s1 + $0x224] sm:$0xf]
        %v1658 = vld [vmem:[%s1 + $0x228] sm:$0xf]
        %v1659 = vld [vmem:[%s1 + $0x22c] sm:$0xf]
        %v1660 = vld [vmem:[%s1 + $0x230] sm:$0xf]
        %v1661 = vld [vmem:[%s1 + $0x234] sm:$0xf]
        %v1662 = vld [vmem:[%s1 + $0x238] sm:$0xf]
        %v1663 = vld [vmem:[%s1 + $0x23c] sm:$0xf]
        %v1664 = vld [vmem:[%s1 + $0x240] sm:$0xf]
        %v1665 = vld [vmem:[%s1 + $0x244] sm:$0xf]
        %v1666 = vld [vmem:[%s1 + $0x248] sm:$0xf]
        %v1667 = vld [vmem:[%s1 + $0x24c] sm:$0xf]
        %v1668 = vld [vmem:[%s1 + $0x250] sm:$0xf]
        %v1669 = vld [vmem:[%s1 + $0x254] sm:$0xf]
        %v1670 = vld [vmem:[%s1 + $0x258] sm:$0xf]
        %v1671 = vld [vmem:[%s1 + $0x25c] sm:$0xf]
        %v1672 = vld [vmem:[%s1 + $0x260] sm:$0xf]
        %v1673 = vld [vmem:[%s1 + $0x264] sm:$0xf]
        %v1674 = vld [vmem:[%s1 + $0x268] sm:$0xf]
        %v1675 = vld [vmem:[%s1 + $0x26c] sm:$0xf]
        %v1676 = vld [vmem:[%s1 + $0x270] sm:$0xf]
        %v1677 = vld [vmem:[%s1 + $0x274] sm:$0xf]
        %v1678 = vld [vmem:[%s1 + $0x278] sm:$0xf]
        %v1679 = vld [vmem:[%s1 + $0x27c] sm:$0xf]
        %v1680 = vld [vmem:[%s1 + $0x280] sm:$0xf]
        %v1681 = vld [vmem:[%s1 + $0x284] sm:$0xf]
        %v1682 = vld [vmem:[%s1 + $0x288] sm:$0xf]
        %v1683 = vld [vmem:[%s1 + $0x28c] sm:$0xf]
        %v1684 = vld [vmem:[%s1 + $0x290] sm:$0xf]
        %v1685 = vld [vmem:[%s1 + $0x294] sm:$0xf]
        %v1686 = vld [vmem:[%s1 + $0x298] sm:$0xf]
        %v1687 = vld [vmem:[%s1 + $0x29c] sm:$0xf]
        %v1688 = vld [vmem:[%s1 + $0x2a0] sm:$0xf]
        %v1689 = vld [vmem:[%s1 + $0x2a4] sm:$0xf]
        %v1690 = vld [vmem:[%s1 + $0x2a8] sm:$0xf]
        %v1691 = vld [vmem:[%s1 + $0x2ac] sm:$0xf]
        %v1692 = vld [vmem:[%s1 + $0x2b0] sm:$0xf]
        %v1693 = vld [vmem:[%s1 + $0x2b4] sm:$0xf]
        %v1694 = vld [vmem:[%s1 + $0x2b8] sm:$0xf]
        %v1695 = vld [vmem:[%s1 + $0x2bc] sm:$0xf]
        %v1696 = vld [vmem:[%s2] sm:$0x1]
        %v1698 = vlaneseq
        %v1699 = vshrl.u32 %v1698, 7
        %v1700 = vsub.s32 0, %v1699
        %v1701 = vrot.slane %v1696, %v1700
        %v1705 = vcombine.high %v1518, %v1518
        %v1707 = vunpack.c.l.s4 1966171168
        %v1708 = vunpack.c.0.s8 %v1707
        %v1709 = vlaneseq
        %v1710 = vshrl.u32 %v1709, 7
        %v1711 = vsub.s32 %v1708, %v1710
        %v1712 = vrot.slane %v1518, %v1711
        %v1714 = vunpack.c.l.s4 1966171168
        %v1715 = vunpack.c.0.s8 %v1714
        %v1716 = vlaneseq
        %v1717 = vshrl.u32 %v1716, 7
        %v1718 = vsub.s32 %v1715, %v1717
        %v1719 = vrot.slane %v1705, %v1718
        %v1720 = vcombine.high %v1712, %v1712
        %v1721 = vcombine.high %v1719, %v1719
        %v1723 = vunpack.c.l.s4 1966171168
        %v1724 = vunpack.c.0.s8 %v1723
        %v1725 = vlaneseq
        %v1726 = vshrl.u32 %v1725, 7
        %v1727 = vsub.s32 %v1724, %v1726
        %v1728 = vrot.slane %v1712, %v1727
        %v1730 = vunpack.c.l.s4 1966171168
        %v1731 = vunpack.c.0.s8 %v1730
        %v1732 = vlaneseq
        %v1733 = vshrl.u32 %v1732, 7
        %v1734 = vsub.s32 %v1731, %v1733
        %v1735 = vrot.slane %v1719, %v1734
        %v1737 = vunpack.c.l.s4 1966171168
        %v1738 = vunpack.c.0.s8 %v1737
        %v1739 = vlaneseq
        %v1740 = vshrl.u32 %v1739, 7
        %v1741 = vsub.s32 %v1738, %v1740
        %v1742 = vrot.slane %v1720, %v1741
        %v1744 = vunpack.c.l.s4 1966171168
        %v1745 = vunpack.c.0.s8 %v1744
        %v1746 = vlaneseq
        %v1747 = vshrl.u32 %v1746, 7
        %v1748 = vsub.s32 %v1745, %v1747
        %v1749 = vrot.slane %v1721, %v1748
        %v1750 = vcombine.high %v1728, %v1728
        %v1751 = vcombine.high %v1735, %v1735
        %v1752 = vcombine.high %v1742, %v1742
        %v1753 = vcombine.high %v1749, %v1749
        %v1755 = vunpack.c.l.s4 1966171168
        %v1756 = vunpack.c.0.s8 %v1755
        %v1757 = vlaneseq
        %v1758 = vshrl.u32 %v1757, 7
        %v1759 = vsub.s32 %v1756, %v1758
        %v1760 = vrot.slane %v1519, %v1759
        %v1761 = vcombine.high %v1760, %v1760
        %v1763 = vunpack.c.l.s4 1966171168
        %v1764 = vunpack.c.0.s8 %v1763
        %v1765 = vlaneseq
        %v1766 = vshrl.u32 %v1765, 7
        %v1767 = vsub.s32 %v1764, %v1766
        %v1768 = vrot.slane %v1760, %v1767
        %v1770 = vunpack.c.l.s4 1966171168
        %v1771 = vunpack.c.0.s8 %v1770
        %v1772 = vlaneseq
        %v1773 = vshrl.u32 %v1772, 7
        %v1774 = vsub.s32 %v1771, %v1773
        %v1775 = vrot.slane %v1761, %v1774
        %v1776 = vcombine.high %v1768, %v1768
        %v1964 = vunpack.c.l.b16 %v1520
        %v1965 = vunpack.c.l.b16 %v1521
        %v1966 = vunpack.c.l.b16 %v1522
        %v1967 = vunpack.c.l.b16 %v1523
        %v1968 = vunpack.c.l.b16 %v1524
        %v1969 = vunpack.c.l.b16 %v1525
        %v1970 = vunpack.c.l.b16 %v1526
        %v1971 = vunpack.c.l.b16 %v1527
        %v1972 = vunpack.c.l.b16 %v1528
        %v1973 = vunpack.c.l.b16 %v1529
        %v1974 = vunpack.c.l.b16 %v1530
        %v1975 = vunpack.c.l.b16 %v1531
        %v1976 = vunpack.c.l.b16 %v1532
        %v1977 = vunpack.c.l.b16 %v1533
        %v1978 = vunpack.c.l.b16 %v1534
        %v1979 = vunpack.c.l.b16 %v1535
        %v1980 = vunpack.c.l.b16 %v1536
        %v1981 = vunpack.c.l.b16 %v1537
        %v1982 = vunpack.c.l.b16 %v1538
        %v1983 = vunpack.c.l.b16 %v1539
        %v1984 = vunpack.c.l.b16 %v1540
        %v1985 = vunpack.c.l.b16 %v1541
        %v1986 = vunpack.c.l.b16 %v1542
        %v1987 = vunpack.c.l.b16 %v1543
        %v1988 = vunpack.c.l.b16 %v1544
        %v1989 = vunpack.c.l.b16 %v1545
        %v1990 = vunpack.c.l.b16 %v1546
        %v1991 = vunpack.c.l.b16 %v1547
        %v1992 = vunpack.c.l.b16 %v1548
        %v1993 = vunpack.c.l.b16 %v1549
        %v1994 = vunpack.c.l.b16 %v1550
        %v1995 = vunpack.c.l.b16 %v1551
        %v1996 = vunpack.c.l.b16 %v1552
        %v1997 = vunpack.c.l.b16 %v1553
        %v1998 = vunpack.c.l.b16 %v1554
        %v1999 = vunpack.c.l.b16 %v1555
        %v2000 = vunpack.c.l.b16 %v1556
        %v2001 = vunpack.c.l.b16 %v1557
        %v2002 = vunpack.c.l.b16 %v1558
        %v2003 = vunpack.c.l.b16 %v1559
        %v2004 = vunpack.c.l.b16 %v1560
        %v2005 = vunpack.c.l.b16 %v1561
        %v2006 = vunpack.c.l.b16 %v1562
        %v2007 = vunpack.c.l.b16 %v1563
        %v2008 = vunpack.c.l.b16 %v1564
        %v2009 = vunpack.c.l.b16 %v1565
        %v2010 = vunpack.c.l.b16 %v1566
        %v2011 = vunpack.c.l.b16 %v1567
        %v2012 = vunpack.c.l.b16 %v1568
        %v2013 = vunpack.c.l.b16 %v1569
        %v2014 = vunpack.c.l.b16 %v1570
        %v2015 = vunpack.c.l.b16 %v1571
        %v2016 = vunpack.c.l.b16 %v1572
        %v2017 = vunpack.c.l.b16 %v1573
        %v2018 = vunpack.c.l.b16 %v1574
        %v2019 = vunpack.c.l.b16 %v1575
        %v2020 = vunpack.c.l.b16 %v1576
        %v2021 = vunpack.c.l.b16 %v1577
        %v2022 = vunpack.c.l.b16 %v1578
        %v2023 = vunpack.c.l.b16 %v1579
        %v2024 = vunpack.c.l.b16 %v1580
        %v2025 = vunpack.c.l.b16 %v1581
        %v2026 = vunpack.c.l.b16 %v1582
        %v2027 = vunpack.c.l.b16 %v1583
        %v2028 = vunpack.c.l.b16 %v1584
        %v2029 = vunpack.c.l.b16 %v1585
        %v2030 = vunpack.c.l.b16 %v1586
        %v2031 = vunpack.c.l.b16 %v1587
        %v2032 = vunpack.c.l.b16 %v1588
        %v2033 = vunpack.c.l.b16 %v1589
        %v2034 = vunpack.c.l.b16 %v1590
        %v2035 = vunpack.c.l.b16 %v1591
        %v2036 = vunpack.c.l.b16 %v1592
        %v2037 = vunpack.c.l.b16 %v1593
        %v2038 = vunpack.c.l.b16 %v1594
        %v2039 = vunpack.c.l.b16 %v1595
        %v2040 = vunpack.c.l.b16 %v1596
        %v2041 = vunpack.c.l.b16 %v1597
        %v2042 = vunpack.c.l.b16 %v1598
        %v2043 = vunpack.c.l.b16 %v1599
        %v2044 = vunpack.c.l.b16 %v1600
        %v2045 = vunpack.c.l.b16 %v1601
        %v2046 = vunpack.c.l.b16 %v1602
        %v2047 = vunpack.c.l.b16 %v1603
        %v2048 = vunpack.c.l.b16 %v1604
        %v2049 = vunpack.c.l.b16 %v1605
        %v2050 = vunpack.c.l.b16 %v1606
        %v2051 = vunpack.c.l.b16 %v1607
        %v2052 = vunpack.c.l.b16 %v1608
        %v2053 = vunpack.c.l.b16 %v1609
        %v2054 = vunpack.c.l.b16 %v1610
        %v2055 = vunpack.c.l.b16 %v1611
        %v2056 = vunpack.c.l.b16 %v1612
        %v2057 = vunpack.c.l.b16 %v1613
        %v2058 = vunpack.c.l.b16 %v1614
        %v2059 = vunpack.c.l.b16 %v1615
        %v2060 = vunpack.c.l.b16 %v1616
        %v2061 = vunpack.c.l.b16 %v1617
        %v2062 = vunpack.c.l.b16 %v1618
        %v2063 = vunpack.c.l.b16 %v1619
        %v2064 = vunpack.c.l.b16 %v1620
        %v2065 = vunpack.c.l.b16 %v1621
        %v2066 = vunpack.c.l.b16 %v1622
        %v2067 = vunpack.c.l.b16 %v1623
        %v2068 = vunpack.c.l.b16 %v1624
        %v2069 = vunpack.c.l.b16 %v1625
        %v2070 = vunpack.c.l.b16 %v1626
        %v2071 = vunpack.c.l.b16 %v1627
        %v2072 = vunpack.c.l.b16 %v1628
        %v2073 = vunpack.c.l.b16 %v1629
        %v2074 = vunpack.c.l.b16 %v1630
        %v2075 = vunpack.c.l.b16 %v1631
        %v2076 = vunpack.c.l.b16 %v1632
        %v2077 = vunpack.c.l.b16 %v1633
        %v2078 = vunpack.c.l.b16 %v1634
        %v2079 = vunpack.c.l.b16 %v1635
        %v2080 = vunpack.c.l.b16 %v1636
        %v2081 = vunpack.c.l.b16 %v1637
        %v2082 = vunpack.c.l.b16 %v1638
        %v2083 = vunpack.c.l.b16 %v1639
        %v2084 = vunpack.c.l.b16 %v1640
        %v2085 = vunpack.c.l.b16 %v1641
        %v2086 = vunpack.c.l.b16 %v1642
        %v2087 = vunpack.c.l.b16 %v1643
        %v2088 = vunpack.c.l.b16 %v1644
        %v2089 = vunpack.c.l.b16 %v1645
        %v2090 = vunpack.c.l.b16 %v1646
        %v2091 = vunpack.c.l.b16 %v1647
        %v2092 = vunpack.c.l.b16 %v1648
        %v2093 = vunpack.c.l.b16 %v1649
        %v2094 = vunpack.c.l.b16 %v1650
        %v2095 = vunpack.c.l.b16 %v1651
        %v2096 = vunpack.c.l.b16 %v1652
        %v2097 = vunpack.c.l.b16 %v1653
        %v2098 = vunpack.c.l.b16 %v1654
        %v2099 = vunpack.c.l.b16 %v1655
        %v2100 = vunpack.c.l.b16 %v1656
        %v2101 = vunpack.c.l.b16 %v1657
        %v2102 = vunpack.c.l.b16 %v1658
        %v2103 = vunpack.c.l.b16 %v1659
        %v2104 = vunpack.c.l.b16 %v1660
        %v2105 = vunpack.c.l.b16 %v1661
        %v2106 = vunpack.c.l.b16 %v1662
        %v2107 = vunpack.c.l.b16 %v1663
        %v2108 = vunpack.c.l.b16 %v1664
        %v2109 = vunpack.c.l.b16 %v1665
        %v2110 = vunpack.c.l.b16 %v1666
        %v2111 = vunpack.c.l.b16 %v1667
        %v2112 = vunpack.c.l.b16 %v1668
        %v2113 = vunpack.c.l.b16 %v1669
        %v2114 = vunpack.c.l.b16 %v1670
        %v2115 = vunpack.c.l.b16 %v1671
        %v2116 = vunpack.c.l.b16 %v1672
        %v2117 = vunpack.c.l.b16 %v1673
        %v2118 = vunpack.c.l.b16 %v1674
        %v2119 = vunpack.c.l.b16 %v1675
        %v2120 = vunpack.c.l.b16 %v1676
        %v2121 = vunpack.c.l.b16 %v1677
        %v2122 = vunpack.c.l.b16 %v1678
        %v2123 = vunpack.c.l.b16 %v1679
        %v2124 = vunpack.c.l.b16 %v1680
        %v2125 = vunpack.c.l.b16 %v1681
        %v2126 = vunpack.c.l.b16 %v1682
        %v2127 = vunpack.c.l.b16 %v1683
        %v2128 = vunpack.c.l.b16 %v1684
        %v2129 = vunpack.c.l.b16 %v1685
        %v2130 = vunpack.c.l.b16 %v1686
        %v2131 = vunpack.c.l.b16 %v1687
        %v2132 = vunpack.c.l.b16 %v1688
        %v2133 = vunpack.c.l.b16 %v1689
        %v2134 = vunpack.c.l.b16 %v1690
        %v2135 = vunpack.c.l.b16 %v1691
        %v2136 = vunpack.c.l.b16 %v1692
        %v2137 = vunpack.c.l.b16 %v1693
        %v2138 = vunpack.c.l.b16 %v1694
        %v2139 = vunpack.c.l.b16 %v1695
        %v2140 = vpack.c.b16 %v1965, %v1964
        %v2141 = vpack.c.b16 %v1967, %v1966
        %v2142 = vpack.c.b16 %v1969, %v1968
        %v2143 = vpack.c.b16 %v1971, %v1970
        %v2144 = vpack.c.b16 %v1973, %v1972
        %v2145 = vpack.c.b16 %v1975, %v1974
        %v2146 = vpack.c.b16 %v1977, %v1976
        %v2147 = vpack.c.b16 %v1979, %v1978
        %v2148 = vpack.c.b16 %v1981, %v1980
        %v2149 = vpack.c.b16 %v1983, %v1982
        %v2150 = vpack.c.b16 %v1985, %v1984
        %v2151 = vpack.c.b16 %v1987, %v1986
        %v2152 = vpack.c.b16 %v1989, %v1988
        %v2153 = vpack.c.b16 %v1991, %v1990
        %v2154 = vpack.c.b16 %v1993, %v1992
        %v2155 = vpack.c.b16 %v1995, %v1994
        %v2156 = vpack.c.b16 %v1997, %v1996
        %v2157 = vpack.c.b16 %v1999, %v1998
        %v2158 = vpack.c.b16 %v2001, %v2000
        %v2159 = vpack.c.b16 %v2003, %v2002
        %v2160 = vpack.c.b16 %v2005, %v2004
        %v2161 = vpack.c.b16 %v2007, %v2006
        %v2162 = vpack.c.b16 %v2009, %v2008
        %v2163 = vpack.c.b16 %v2011, %v2010
        %v2164 = vpack.c.b16 %v2013, %v2012
        %v2165 = vpack.c.b16 %v2015, %v2014
        %v2166 = vpack.c.b16 %v2017, %v2016
        %v2167 = vpack.c.b16 %v2019, %v2018
        %v2168 = vpack.c.b16 %v2021, %v2020
        %v2169 = vpack.c.b16 %v2023, %v2022
        %v2170 = vpack.c.b16 %v2025, %v2024
        %v2171 = vpack.c.b16 %v2027, %v2026
        %v2172 = vpack.c.b16 %v2029, %v2028
        %v2173 = vpack.c.b16 %v2031, %v2030
        %v2174 = vpack.c.b16 %v2033, %v2032
        %v2175 = vpack.c.b16 %v2035, %v2034
        %v2176 = vpack.c.b16 %v2037, %v2036
        %v2177 = vpack.c.b16 %v2039, %v2038
        %v2178 = vpack.c.b16 %v2041, %v2040
        %v2179 = vpack.c.b16 %v2043, %v2042
        %v2180 = vpack.c.b16 %v2045, %v2044
        %v2181 = vpack.c.b16 %v2047, %v2046
        %v2182 = vpack.c.b16 %v2049, %v2048
        %v2183 = vpack.c.b16 %v2051, %v2050
        %v2184 = vpack.c.b16 %v2053, %v2052
        %v2185 = vpack.c.b16 %v2055, %v2054
        %v2186 = vpack.c.b16 %v2057, %v2056
        %v2187 = vpack.c.b16 %v2059, %v2058
        %v2188 = vpack.c.b16 %v2061, %v2060
        %v2189 = vpack.c.b16 %v2063, %v2062
        %v2190 = vpack.c.b16 %v2065, %v2064
        %v2191 = vpack.c.b16 %v2067, %v2066
        %v2192 = vpack.c.b16 %v2069, %v2068
        %v2193 = vpack.c.b16 %v2071, %v2070
        %v2194 = vpack.c.b16 %v2073, %v2072
        %v2195 = vpack.c.b16 %v2075, %v2074
        %v2196 = vpack.c.b16 %v2077, %v2076
        %v2197 = vpack.c.b16 %v2079, %v2078
        %v2198 = vpack.c.b16 %v2081, %v2080
        %v2199 = vpack.c.b16 %v2083, %v2082
        %v2200 = vpack.c.b16 %v2085, %v2084
        %v2201 = vpack.c.b16 %v2087, %v2086
        %v2202 = vpack.c.b16 %v2089, %v2088
        %v2203 = vpack.c.b16 %v2091, %v2090
        %v2204 = vpack.c.b16 %v2093, %v2092
        %v2205 = vpack.c.b16 %v2095, %v2094
        %v2206 = vpack.c.b16 %v2097, %v2096
        %v2207 = vpack.c.b16 %v2099, %v2098
        %v2208 = vpack.c.b16 %v2101, %v2100
        %v2209 = vpack.c.b16 %v2103, %v2102
        %v2210 = vpack.c.b16 %v2105, %v2104
        %v2211 = vpack.c.b16 %v2107, %v2106
        %v2212 = vpack.c.b16 %v2109, %v2108
        %v2213 = vpack.c.b16 %v2111, %v2110
        %v2214 = vpack.c.b16 %v2113, %v2112
        %v2215 = vpack.c.b16 %v2115, %v2114
        %v2216 = vpack.c.b16 %v2117, %v2116
        %v2217 = vpack.c.b16 %v2119, %v2118
        %v2218 = vpack.c.b16 %v2121, %v2120
        %v2219 = vpack.c.b16 %v2123, %v2122
        %v2220 = vpack.c.b16 %v2125, %v2124
        %v2221 = vpack.c.b16 %v2127, %v2126
        %v2222 = vpack.c.b16 %v2129, %v2128
        %v2223 = vpack.c.b16 %v2131, %v2130
        %v2224 = vpack.c.b16 %v2133, %v2132
        %v2225 = vpack.c.b16 %v2135, %v2134
        %v2226 = vpack.c.b16 %v2137, %v2136
        %v2227 = vpack.c.b16 %v2139, %v2138
        %2316 = vmatprep.subr.bf16.mxu0 0
        %2317 = vmatpush1.bf16.msra.mxu0 %v2140
        %2318 = vmatprep.subr.bf16.mxu0 0
        %2319 = vmatpush1.bf16.msra.mxu0 %v2141
        %2320 = vmatprep.subr.bf16.mxu0 0
        %2321 = vmatpush1.bf16.msra.mxu0 %v2142
        %2322 = vmatprep.subr.bf16.mxu0 0
        %2323 = vmatpush1.bf16.msra.mxu0 %v2143
        %2324 = vmatprep.subr.bf16.mxu0 0
        %2325 = vmatpush1.bf16.msra.mxu0 %v2144
        %2326 = vmatprep.subr.bf16.mxu0 0
        %2327 = vmatpush1.bf16.msra.mxu0 %v2145
        %2328 = vmatprep.subr.bf16.mxu0 0
        %2329 = vmatpush1.bf16.msra.mxu0 %v2146
        %2330 = vmatprep.subr.bf16.mxu0 0
        %2331 = vmatpush1.bf16.msra.mxu0 %v2147
        %2332 = vmatprep.subr.bf16.mxu0 0
        %2333 = vmatpush1.bf16.msra.mxu0 %v2148
        %2334 = vmatprep.subr.bf16.mxu0 0
        %2335 = vmatpush1.bf16.msra.mxu0 %v2149
        %2336 = vmatprep.subr.bf16.mxu0 0
        %2337 = vmatpush1.bf16.msra.mxu0 %v2150
        %2338 = vmatprep.subr.bf16.mxu0 0
        %2339 = vmatpush1.bf16.msra.mxu0 %v2151
        %2340 = vmatprep.subr.bf16.mxu0 0
        %2341 = vmatpush1.bf16.msra.mxu0 %v2152
        %2342 = vmatprep.subr.bf16.mxu0 0
        %2343 = vmatpush1.bf16.msra.mxu0 %v2153
        %2344 = vmatprep.subr.bf16.mxu0 0
        %2345 = vmatpush1.bf16.msra.mxu0 %v2154
        %2346 = vmatprep.subr.bf16.mxu0 0
        %2347 = vmatpush1.bf16.msra.mxu0 %v2155
        %2348 = vmatprep.mubr.bf16.mxu0 %v1742
        %2349 = vmatmul.mubr.bf16.gmra.mrb[0].mxu0 %v1728
        %v2350 = vpop.f32.mrb[0].mxu0
        %v2351 = vadd.f32 %v1701, %v2350
        %v2352 = vpop.f32.mrb[0].mxu0
        %v2353 = vpop.f32.mrb[0].mxu0
        %v2354 = vpop.f32.mrb[0].mxu0
        %2355 = vdwg.mxu0
        %2356 = vmatprep.subr.bf16.mxu0 0
        %2357 = vmatpush1.bf16.msra.mxu0 %v2156
        %2358 = vmatprep.subr.bf16.mxu0 0
        %2359 = vmatpush1.bf16.msra.mxu0 %v2157
        %2360 = vmatprep.subr.bf16.mxu0 0
        %2361 = vmatpush1.bf16.msra.mxu0 %v2158
        %2362 = vmatprep.subr.bf16.mxu0 0
        %2363 = vmatpush1.bf16.msra.mxu0 %v2159
        %2364 = vmatprep.subr.bf16.mxu0 0
        %2365 = vmatpush1.bf16.msra.mxu0 %v2160
        %2366 = vmatprep.subr.bf16.mxu0 0
        %2367 = vmatpush1.bf16.msra.mxu0 %v2161
        %2368 = vmatprep.subr.bf16.mxu0 0
        %2369 = vmatpush1.bf16.msra.mxu0 %v2162
        %2370 = vmatprep.subr.bf16.mxu0 0
        %2371 = vmatpush1.bf16.msra.mxu0 %v2163
        %2372 = vmatprep.subr.bf16.mxu0 0
        %2373 = vmatpush1.bf16.msra.mxu0 %v2164
        %2374 = vmatprep.subr.bf16.mxu0 0
        %2375 = vmatpush1.bf16.msra.mxu0 %v2165
        %2376 = vmatprep.subr.bf16.mxu0 0
        %2377 = vmatpush1.bf16.msra.mxu0 %v2166
        %2378 = vmatprep.subr.bf16.mxu0 0
        %2379 = vmatpush1.bf16.msra.mxu0 %v2167
        %2380 = vmatprep.subr.bf16.mxu0 0
        %2381 = vmatpush1.bf16.msra.mxu0 %v2168
        %2382 = vmatprep.subr.bf16.mxu0 0
        %2383 = vmatpush1.bf16.msra.mxu0 %v2169
        %2384 = vmatprep.subr.bf16.mxu0 0
        %2385 = vmatpush1.bf16.msra.mxu0 %v2170
        %2386 = vmatprep.subr.bf16.mxu0 0
        %2387 = vmatpush1.bf16.msra.mxu0 %v2171
        %2388 = vmatprep.mubr.bf16.mxu0 %v1752
        %2389 = vmatmul.mubr.bf16.gmra.mrb[0].mxu0 %v1750
        %v2390 = vpop.f32.mrb[0].mxu0
        %v2391 = vadd.f32 %v2351, %v2390
        %v2392 = vpop.f32.mrb[0].mxu0
        %v2393 = vpop.f32.mrb[0].mxu0
        %v2394 = vpop.f32.mrb[0].mxu0
        %2395 = vdwg.mxu0
        %2396 = vmatprep.subr.bf16.mxu0 0
        %2397 = vmatpush1.bf16.msra.mxu0 %v2172
        %2398 = vmatprep.subr.bf16.mxu0 0
        %2399 = vmatpush1.bf16.msra.mxu0 %v2173
        %2400 = vmatprep.subr.bf16.mxu0 0
        %2401 = vmatpush1.bf16.msra.mxu0 %v2174
        %2402 = vmatprep.subr.bf16.mxu0 0
        %2403 = vmatpush1.bf16.msra.mxu0 %v2175
        %2404 = vmatprep.subr.bf16.mxu0 0
        %2405 = vmatpush1.bf16.msra.mxu0 %v2176
        %2406 = vmatprep.subr.bf16.mxu0 0
        %2407 = vmatpush1.bf16.msra.mxu0 %v2177
        %2408 = vmatprep.subr.bf16.mxu0 0
        %2409 = vmatpush1.bf16.msra.mxu0 %v2178
        %2410 = vmatprep.subr.bf16.mxu0 0
        %2411 = vmatpush1.bf16.msra.mxu0 %v2179
        %2412 = vmatprep.subr.bf16.mxu0 0
        %2413 = vmatpush1.bf16.msra.mxu0 %v2180
        %2414 = vmatprep.subr.bf16.mxu0 0
        %2415 = vmatpush1.bf16.msra.mxu0 %v2181
        %2416 = vmatprep.subr.bf16.mxu0 0
        %2417 = vmatpush1.bf16.msra.mxu0 %v2182
        %2418 = vmatprep.subr.bf16.mxu0 0
        %2419 = vmatpush1.bf16.msra.mxu0 %v2183
        %2420 = vmatprep.subr.bf16.mxu0 0
        %2421 = vmatpush1.bf16.msra.mxu0 %v2184
        %2422 = vmatprep.subr.bf16.mxu0 0
        %2423 = vmatpush1.bf16.msra.mxu0 %v2185
        %2424 = vmatprep.subr.bf16.mxu0 0
        %2425 = vmatpush1.bf16.msra.mxu0 %v2186
        %2426 = vmatprep.subr.bf16.mxu0 0
        %2427 = vmatpush1.bf16.msra.mxu0 %v2187
        %2428 = vmatprep.mubr.bf16.mxu0 %v1749
        %2429 = vmatmul.mubr.bf16.gmra.mrb[0].mxu0 %v1735
        %v2430 = vpop.f32.mrb[0].mxu0
        %v2431 = vadd.f32 %v2391, %v2430
        %v2432 = vpop.f32.mrb[0].mxu0
        %v2433 = vpop.f32.mrb[0].mxu0
        %v2434 = vpop.f32.mrb[0].mxu0
        %2435 = vdwg.mxu0
        %2436 = vmatprep.subr.bf16.mxu0 0
        %2437 = vmatpush1.bf16.msra.mxu0 %v2188
        %2438 = vmatprep.subr.bf16.mxu0 0
        %2439 = vmatpush1.bf16.msra.mxu0 %v2189
        %2440 = vmatprep.subr.bf16.mxu0 0
        %2441 = vmatpush1.bf16.msra.mxu0 %v2190
        %2442 = vmatprep.subr.bf16.mxu0 0
        %2443 = vmatpush1.bf16.msra.mxu0 %v2191
        %2444 = vmatprep.subr.bf16.mxu0 0
        %2445 = vmatpush1.bf16.msra.mxu0 %v2192
        %2446 = vmatprep.subr.bf16.mxu0 0
        %2447 = vmatpush1.bf16.msra.mxu0 %v2193
        %2448 = vmatprep.subr.bf16.mxu0 0
        %2449 = vmatpush1.bf16.msra.mxu0 %v2194
        %2450 = vmatprep.subr.bf16.mxu0 0
        %2451 = vmatpush1.bf16.msra.mxu0 %v2195
        %2452 = vmatprep.subr.bf16.mxu0 0
        %2453 = vmatpush1.bf16.msra.mxu0 %v2196
        %2454 = vmatprep.subr.bf16.mxu0 0
        %2455 = vmatpush1.bf16.msra.mxu0 %v2197
        %2456 = vmatprep.subr.bf16.mxu0 0
        %2457 = vmatpush1.bf16.msra.mxu0 %v2198
        %2458 = vmatprep.subr.bf16.mxu0 0
        %2459 = vmatpush1.bf16.msra.mxu0 %v2199
        %2460 = vmatprep.subr.bf16.mxu0 0
        %2461 = vmatpush1.bf16.msra.mxu0 %v2200
        %2462 = vmatprep.subr.bf16.mxu0 0
        %2463 = vmatpush1.bf16.msra.mxu0 %v2201
        %2464 = vmatprep.subr.bf16.mxu0 0
        %2465 = vmatpush1.bf16.msra.mxu0 %v2202
        %2466 = vmatprep.subr.bf16.mxu0 0
        %2467 = vmatpush1.bf16.msra.mxu0 %v2203
        %2468 = vmatprep.mubr.bf16.mxu0 %v1753
        %2469 = vmatmul.mubr.bf16.gmra.mrb[0].mxu0 %v1751
        %v2470 = vpop.f32.mrb[0].mxu0
        %v2471 = vadd.f32 %v2431, %v2470
        %v2472 = vpop.f32.mrb[0].mxu0
        %v2473 = vpop.f32.mrb[0].mxu0
        %v2474 = vpop.f32.mrb[0].mxu0
        %2475 = vdwg.mxu0
        %2476 = vmatprep.subr.bf16.mxu0 0
        %2477 = vmatpush1.bf16.msra.mxu0 %v2204
        %2478 = vmatprep.subr.bf16.mxu0 0
        %2479 = vmatpush1.bf16.msra.mxu0 %v2205
        %2480 = vmatprep.subr.bf16.mxu0 0
        %2481 = vmatpush1.bf16.msra.mxu0 %v2206
        %2482 = vmatprep.subr.bf16.mxu0 0
        %2483 = vmatpush1.bf16.msra.mxu0 %v2207
        %2484 = vmatprep.subr.bf16.mxu0 0
        %2485 = vmatpush1.bf16.msra.mxu0 %v2208
        %2486 = vmatprep.subr.bf16.mxu0 0
        %2487 = vmatpush1.bf16.msra.mxu0 %v2209
        %2488 = vmatprep.subr.bf16.mxu0 0
        %2489 = vmatpush1.bf16.msra.mxu0 %v2210
        %2490 = vmatprep.subr.bf16.mxu0 0
        %2491 = vmatpush1.bf16.msra.mxu0 %v2211
        %2492 = vmatprep.subr.bf16.mxu0 0
        %2493 = vmatpush1.bf16.msra.mxu0 %v2212
        %2494 = vmatprep.subr.bf16.mxu0 0
        %2495 = vmatpush1.bf16.msra.mxu0 %v2213
        %2496 = vmatprep.subr.bf16.mxu0 0
        %2497 = vmatpush1.bf16.msra.mxu0 %v2214
        %2498 = vmatprep.subr.bf16.mxu0 0
        %2499 = vmatpush1.bf16.msra.mxu0 %v2215
        %2500 = vmatprep.subr.bf16.mxu0 0
        %2501 = vmatpush1.bf16.msra.mxu0 %v2216
        %2502 = vmatprep.subr.bf16.mxu0 0
        %2503 = vmatpush1.bf16.msra.mxu0 %v2217
        %2504 = vmatprep.subr.bf16.mxu0 0
        %2505 = vmatpush1.bf16.msra.mxu0 %v2218
        %2506 = vmatprep.subr.bf16.mxu0 0
        %2507 = vmatpush1.bf16.msra.mxu0 %v2219
        %2508 = vmatprep.mubr.bf16.mxu0 %v1775
        %2509 = vmatmul.mubr.bf16.gmra.mrb[0].mxu0 %v1768
        %v2510 = vpop.f32.mrb[0].mxu0
        %v2511 = vadd.f32 %v2471, %v2510
        %v2512 = vpop.f32.mrb[0].mxu0
        %v2513 = vpop.f32.mrb[0].mxu0
        %v2514 = vpop.f32.mrb[0].mxu0
        %2515 = vdwg.mxu0
        %2516 = vmatprep.subr.bf16.mxu0 0
        %2517 = vmatpush1.bf16.msra.mxu0 %v2220
        %2518 = vmatprep.subr.bf16.mxu0 0
        %2519 = vmatpush1.bf16.msra.mxu0 %v2221
        %2520 = vmatprep.subr.bf16.mxu0 0
        %2521 = vmatpush1.bf16.msra.mxu0 %v2222
        %2522 = vmatprep.subr.bf16.mxu0 0
        %2523 = vmatpush1.bf16.msra.mxu0 %v2223
        %2524 = vmatprep.subr.bf16.mxu0 0
        %2525 = vmatpush1.bf16.msra.mxu0 %v2224
        %2526 = vmatprep.subr.bf16.mxu0 0
        %2527 = vmatpush1.bf16.msra.mxu0 %v2225
        %2528 = vmatprep.subr.bf16.mxu0 0
        %2529 = vmatpush1.bf16.msra.mxu0 %v2226
        %2530 = vmatprep.subr.bf16.mxu0 0
        %2531 = vmatpush1.bf16.msra.mxu0 %v2227
        %2532 = vmatprep.subr.bf16.mxu0 0
        %2533 = vmatpush1.bf16.msra.mxu0 0
        %2534 = vmatprep.subr.bf16.mxu0 0
        %2535 = vmatpush1.bf16.msra.mxu0 0
        %2536 = vmatprep.subr.bf16.mxu0 0
        %2537 = vmatpush1.bf16.msra.mxu0 0
        %2538 = vmatprep.subr.bf16.mxu0 0
        %2539 = vmatpush1.bf16.msra.mxu0 0
        %2540 = vmatprep.subr.bf16.mxu0 0
        %2541 = vmatpush1.bf16.msra.mxu0 0
        %2542 = vmatprep.subr.bf16.mxu0 0
        %2543 = vmatpush1.bf16.msra.mxu0 0
        %2544 = vmatprep.subr.bf16.mxu0 0
        %2545 = vmatpush1.bf16.msra.mxu0 0
        %2546 = vmatprep.subr.bf16.mxu0 0
        %2547 = vmatpush1.bf16.msra.mxu0 0
        %2548 = vmatprep.mubr.bf16.mxu0 0
        %2549 = vmatmul.mubr.bf16.gmra.mrb[0].mxu0 %v1776
        %v2550 = vpop.f32.mrb[0].mxu0
        %v2551 = vadd.f32 %v2511, %v2550
        %v2552 = vpop.f32.mrb[0].mxu0
        %v2553 = vpop.f32.mrb[0].mxu0
        %v2554 = vpop.f32.mrb[0].mxu0
        %2555 = vdwg.mxu0
        %v2556 = vtanh.pop %v2551
        %v2557 = vpack.c.bf16 %v2556, %v2556
        %v2558 = vld [vmem:[%s3] sm:$0xf]
        %v2559 = vld [vmem:[%s3 + $0x4] sm:$0xf]
        %v2560 = vld [vmem:[%s3 + $0x8] sm:$0xf]
        %v2561 = vld [vmem:[%s3 + $0xc] sm:$0xf]
        %v2562 = vld [vmem:[%s3 + $0x10] sm:$0xf]
        %v2563 = vld [vmem:[%s3 + $0x14] sm:$0xf]
        %v2564 = vld [vmem:[%s3 + $0x18] sm:$0xf]
        %v2565 = vld [vmem:[%s4] sm:$0x1]
        %v2567 = vlaneseq
        %v2568 = vshrl.u32 %v2567, 7
        %v2569 = vsub.s32 0, %v2568
        %v2570 = vrot.slane %v2565, %v2569
        %v2579 = vunpack.c.l.b16 %v2558
        %v2580 = vunpack.c.l.b16 %v2559
        %v2581 = vunpack.c.l.b16 %v2560
        %v2582 = vunpack.c.l.b16 %v2561
        %v2583 = vunpack.c.l.b16 %v2562
        %v2584 = vunpack.c.l.b16 %v2563
        %v2585 = vunpack.c.l.b16 %v2564
        %v2586 = vpack.c.b16 %v2580, %v2579
        %v2587 = vpack.c.b16 %v2582, %v2581
        %v2588 = vpack.c.b16 %v2584, %v2583
        %v2589 = vpack.c.b16 %v2585, %v2585
        %v2594 = vsel %vm1378, %v2557, 0
        %v2597 = vand.u32 %v2589, %v1385
        %2599 = vmatprep.subr.bf16.mxu0 0
        %2600 = vmatpush1.bf16.msra.mxu0 %v2586
        %2601 = vmatprep.subr.bf16.mxu0 0
        %2602 = vmatpush1.bf16.msra.mxu0 %v2587
        %2603 = vmatprep.subr.bf16.mxu0 0
        %2604 = vmatpush1.bf16.msra.mxu0 %v2588
        %2605 = vmatprep.subr.bf16.mxu0 0
        %2606 = vmatpush1.bf16.msra.mxu0 %v2597
        %2607 = vmatprep.subr.bf16.mxu0 0
        %2608 = vmatpush1.bf16.msra.mxu0 0
        %2609 = vmatprep.subr.bf16.mxu0 0
        %2610 = vmatpush1.bf16.msra.mxu0 0
        %2611 = vmatprep.subr.bf16.mxu0 0
        %2612 = vmatpush1.bf16.msra.mxu0 0
        %2613 = vmatprep.subr.bf16.mxu0 0
        %2614 = vmatpush1.bf16.msra.mxu0 0
        %2615 = vmatprep.subr.bf16.mxu0 0
        %2616 = vmatpush1.bf16.msra.mxu0 0
        %2617 = vmatprep.subr.bf16.mxu0 0
        %2618 = vmatpush1.bf16.msra.mxu0 0
        %2619 = vmatprep.subr.bf16.mxu0 0
        %2620 = vmatpush1.bf16.msra.mxu0 0
        %2621 = vmatprep.subr.bf16.mxu0 0
        %2622 = vmatpush1.bf16.msra.mxu0 0
        %2623 = vmatprep.subr.bf16.mxu0 0
        %2624 = vmatpush1.bf16.msra.mxu0 0
        %2625 = vmatprep.subr.bf16.mxu0 0
        %2626 = vmatpush1.bf16.msra.mxu0 0
        %2627 = vmatprep.subr.bf16.mxu0 0
        %2628 = vmatpush1.bf16.msra.mxu0 0
        %2629 = vmatprep.subr.bf16.mxu0 0
        %2630 = vmatpush1.bf16.msra.mxu0 0
        %2631 = vmatprep.mubr.bf16.mxu0 0
        %2632 = vmatmul.mubr.bf16.gmra.mrb[0].mxu0 %v2594
        %v2633 = vpop.f32.mrb[0].mxu0
        %v2634 = vadd.f32 %v2570, %v2633
        %v2635 = vpop.f32.mrb[0].mxu0
        %v2636 = vpop.f32.mrb[0].mxu0
        %v2637 = vpop.f32.mrb[0].mxu0
        %2638 = vdwg.mxu0
        %v2639 = vtanh.pop %v2634
        %v2640 = vld [vmem:[#allocation2] sm:$0x3]
        %v2641 = vpack.c.bf16 %v2639, %v2639
        %s2642 = scalar_lea.vmem %s294, 32
        %v2643 = vld [vmem:[%s2642] sm:$0xf]
        %v2644 = vld [vmem:[%s2642 + $0x4] sm:$0xf]
        %v2645 = vld [vmem:[%s2642 + $0x8] sm:$0xf]
        %v2646 = vld [vmem:[%s2642 + $0xc] sm:$0xf]
        %v2647 = vld [vmem:[%s2642 + $0x10] sm:$0xf]
        %v2648 = vld [vmem:[%s2642 + $0x14] sm:$0xf]
        %v2649 = vld [vmem:[%s2642 + $0x18] sm:$0xf]
        %v2650 = vld [vmem:[%s2642 + $0x1c] sm:$0x7]
        %v2659 = vunpack.c.l.b16 %v2643
        %v2660 = vunpack.c.l.b16 %v2644
        %v2661 = vunpack.c.l.b16 %v2645
        %v2662 = vunpack.c.l.b16 %v2646
        %v2663 = vunpack.c.l.b16 %v2647
        %v2664 = vunpack.c.l.b16 %v2648
        %v2665 = vunpack.c.l.b16 %v2649
        %v2666 = vunpack.c.l.b16 %v2650
        %v2667 = vpack.c.b16 %v2660, %v2659
        %v2668 = vpack.c.b16 %v2662, %v2661
        %v2669 = vpack.c.b16 %v2664, %v2663
        %v2670 = vpack.c.b16 %v2666, %v2665
        %v2675 = vsel %vm1463, %v2641, 0
        %v2678 = vand.u32 %v2670, %v1470
        %2680 = vmatprep.subr.bf16.mxu0 0
        %2681 = vmatpush1.bf16.msra.mxu0 %v2667
        %2682 = vmatprep.subr.bf16.mxu0 0
        %2683 = vmatpush1.bf16.msra.mxu0 %v2668
        %2684 = vmatprep.subr.bf16.mxu0 0
        %2685 = vmatpush1.bf16.msra.mxu0 %v2669
        %2686 = vmatprep.subr.bf16.mxu0 0
        %2687 = vmatpush1.bf16.msra.mxu0 %v2678
        %2688 = vmatprep.subr.bf16.mxu0 0
        %2689 = vmatpush1.bf16.msra.mxu0 0
        %2690 = vmatprep.subr.bf16.mxu0 0
        %2691 = vmatpush1.bf16.msra.mxu0 0
        %2692 = vmatprep.subr.bf16.mxu0 0
        %2693 = vmatpush1.bf16.msra.mxu0 0
        %2694 = vmatprep.subr.bf16.mxu0 0
        %2695 = vmatpush1.bf16.msra.mxu0 0
        %2696 = vmatprep.subr.bf16.mxu0 0
        %2697 = vmatpush1.bf16.msra.mxu0 0
        %2698 = vmatprep.subr.bf16.mxu0 0
        %2699 = vmatpush1.bf16.msra.mxu0 0
        %2700 = vmatprep.subr.bf16.mxu0 0
        %2701 = vmatpush1.bf16.msra.mxu0 0
        %2702 = vmatprep.subr.bf16.mxu0 0
        %2703 = vmatpush1.bf16.msra.mxu0 0
        %2704 = vmatprep.subr.bf16.mxu0 0
        %2705 = vmatpush1.bf16.msra.mxu0 0
        %2706 = vmatprep.subr.bf16.mxu0 0
        %2707 = vmatpush1.bf16.msra.mxu0 0
        %2708 = vmatprep.subr.bf16.mxu0 0
        %2709 = vmatpush1.bf16.msra.mxu0 0
        %2710 = vmatprep.subr.bf16.mxu0 0
        %2711 = vmatpush1.bf16.msra.mxu0 0
        %2712 = vmatprep.mubr.bf16.mxu0 0
        %2713 = vmatmul.mubr.bf16.gmra.mrb[0].mxu0 %v2675
        %v2714 = vpop.f32.mrb[0].mxu0
        %v2715 = vadd.f32 0.0, %v2714
        %v2716 = vpop.f32.mrb[0].mxu0
        %v2717 = vpop.f32.mrb[0].mxu0
        %v2718 = vpop.f32.mrb[0].mxu0
        %2719 = vdwg.mxu0
        %v2720 = vadd.f32 %v2640, %v2715
        %2721 = vst.msk [vmem:[#allocation2] sm:$0x3] %vm1515, %v2720
        %s2722 = scalar_lea.vmem %s287, 22
        %v2723 = vld [vmem:[%s2722] sm:$0xff]
        %v2724 = vld [vmem:[%s2722 + $0x8] sm:$0x7]
        %v2725 = vld [vmem:[%s1] sm:$0xf]
        %v2726 = vld [vmem:[%s1 + $0x4] sm:$0xf]
        %v2727 = vld [vmem:[%s1 + $0x8] sm:$0xf]
        %v2728 = vld [vmem:[%s1 + $0xc] sm:$0xf]
        %v2729 = vld [vmem:[%s1 + $0x10] sm:$0xf]
        %v2730 = vld [vmem:[%s1 + $0x14] sm:$0xf]
        %v2731 = vld [vmem:[%s1 + $0x18] sm:$0xf]
        %v2732 = vld [vmem:[%s1 + $0x1c] sm:$0xf]
        %v2733 = vld [vmem:[%s1 + $0x20] sm:$0xf]
        %v2734 = vld [vmem:[%s1 + $0x24] sm:$0xf]
        %v2735 = vld [vmem:[%s1 + $0x28] sm:$0xf]
        %v2736 = vld [vmem:[%s1 + $0x2c] sm:$0xf]
        %v2737 = vld [vmem:[%s1 + $0x30] sm:$0xf]
        %v2738 = vld [vmem:[%s1 + $0x34] sm:$0xf]
        %v2739 = vld [vmem:[%s1 + $0x38] sm:$0xf]
        %v2740 = vld [vmem:[%s1 + $0x3c] sm:$0xf]
        %v2741 = vld [vmem:[%s1 + $0x40] sm:$0xf]
        %v2742 = vld [vmem:[%s1 + $0x44] sm:$0xf]
        %v2743 = vld [vmem:[%s1 + $0x48] sm:$0xf]
        %v2744 = vld [vmem:[%s1 + $0x4c] sm:$0xf]
        %v2745 = vld [vmem:[%s1 + $0x50] sm:$0xf]
        %v2746 = vld [vmem:[%s1 + $0x54] sm:$0xf]
        %v2747 = vld [vmem:[%s1 + $0x58] sm:$0xf]
        %v2748 = vld [vmem:[%s1 + $0x5c] sm:$0xf]
        %v2749 = vld [vmem:[%s1 + $0x60] sm:$0xf]
        %v2750 = vld [vmem:[%s1 + $0x64] sm:$0xf]
        %v2751 = vld [vmem:[%s1 + $0x68] sm:$0xf]
        %v2752 = vld [vmem:[%s1 + $0x6c] sm:$0xf]
        %v2753 = vld [vmem:[%s1 + $0x70] sm:$0xf]
        %v2754 = vld [vmem:[%s1 + $0x74] sm:$0xf]
        %v2755 = vld [vmem:[%s1 + $0x78] sm:$0xf]
        %v2756 = vld [vmem:[%s1 + $0x7c] sm:$0xf]
        %v2757 = vld [vmem:[%s1 + $0x80] sm:$0xf]
        %v2758 = vld [vmem:[%s1 + $0x84] sm:$0xf]
        %v2759 = vld [vmem:[%s1 + $0x88] sm:$0xf]
        %v2760 = vld [vmem:[%s1 + $0x8c] sm:$0xf]
        %v2761 = vld [vmem:[%s1 + $0x90] sm:$0xf]
        %v2762 = vld [vmem:[%s1 + $0x94] sm:$0xf]
        %v2763 = vld [vmem:[%s1 + $0x98] sm:$0xf]
        %v2764 = vld [vmem:[%s1 + $0x9c] sm:$0xf]
        %v2765 = vld [vmem:[%s1 + $0xa0] sm:$0xf]
        %v2766 = vld [vmem:[%s1 + $0xa4] sm:$0xf]
        %v2767 = vld [vmem:[%s1 + $0xa8] sm:$0xf]
        %v2768 = vld [vmem:[%s1 + $0xac] sm:$0xf]
        %v2769 = vld [vmem:[%s1 + $0xb0] sm:$0xf]
        %v2770 = vld [vmem:[%s1 + $0xb4] sm:$0xf]
        %v2771 = vld [vmem:[%s1 + $0xb8] sm:$0xf]
        %v2772 = vld [vmem:[%s1 + $0xbc] sm:$0xf]
        %v2773 = vld [vmem:[%s1 + $0xc0] sm:$0xf]
        %v2774 = vld [vmem:[%s1 + $0xc4] sm:$0xf]
        %v2775 = vld [vmem:[%s1 + $0xc8] sm:$0xf]
        %v2776 = vld [vmem:[%s1 + $0xcc] sm:$0xf]
        %v2777 = vld [vmem:[%s1 + $0xd0] sm:$0xf]
        %v2778 = vld [vmem:[%s1 + $0xd4] sm:$0xf]
        %v2779 = vld [vmem:[%s1 + $0xd8] sm:$0xf]
        %v2780 = vld [vmem:[%s1 + $0xdc] sm:$0xf]
        %v2781 = vld [vmem:[%s1 + $0xe0] sm:$0xf]
        %v2782 = vld [vmem:[%s1 + $0xe4] sm:$0xf]
        %v2783 = vld [vmem:[%s1 + $0xe8] sm:$0xf]
        %v2784 = vld [vmem:[%s1 + $0xec] sm:$0xf]
        %v2785 = vld [vmem:[%s1 + $0xf0] sm:$0xf]
        %v2786 = vld [vmem:[%s1 + $0xf4] sm:$0xf]
        %v2787 = vld [vmem:[%s1 + $0xf8] sm:$0xf]
        %v2788 = vld [vmem:[%s1 + $0xfc] sm:$0xf]
        %v2789 = vld [vmem:[%s1 + $0x100] sm:$0xf]
        %v2790 = vld [vmem:[%s1 + $0x104] sm:$0xf]
        %v2791 = vld [vmem:[%s1 + $0x108] sm:$0xf]
        %v2792 = vld [vmem:[%s1 + $0x10c] sm:$0xf]
        %v2793 = vld [vmem:[%s1 + $0x110] sm:$0xf]
        %v2794 = vld [vmem:[%s1 + $0x114] sm:$0xf]
        %v2795 = vld [vmem:[%s1 + $0x118] sm:$0xf]
        %v2796 = vld [vmem:[%s1 + $0x11c] sm:$0xf]
        %v2797 = vld [vmem:[%s1 + $0x120] sm:$0xf]
        %v2798 = vld [vmem:[%s1 + $0x124] sm:$0xf]
        %v2799 = vld [vmem:[%s1 + $0x128] sm:$0xf]
        %v2800 = vld [vmem:[%s1 + $0x12c] sm:$0xf]
        %v2801 = vld [vmem:[%s1 + $0x130] sm:$0xf]
        %v2802 = vld [vmem:[%s1 + $0x134] sm:$0xf]
        %v2803 = vld [vmem:[%s1 + $0x138] sm:$0xf]
        %v2804 = vld [vmem:[%s1 + $0x13c] sm:$0xf]
        %v2805 = vld [vmem:[%s1 + $0x140] sm:$0xf]
        %v2806 = vld [vmem:[%s1 + $0x144] sm:$0xf]
        %v2807 = vld [vmem:[%s1 + $0x148] sm:$0xf]
        %v2808 = vld [vmem:[%s1 + $0x14c] sm:$0xf]
        %v2809 = vld [vmem:[%s1 + $0x150] sm:$0xf]
        %v2810 = vld [vmem:[%s1 + $0x154] sm:$0xf]
        %v2811 = vld [vmem:[%s1 + $0x158] sm:$0xf]
        %v2812 = vld [vmem:[%s1 + $0x15c] sm:$0xf]
        %v2813 = vld [vmem:[%s1 + $0x160] sm:$0xf]
        %v2814 = vld [vmem:[%s1 + $0x164] sm:$0xf]
        %v2815 = vld [vmem:[%s1 + $0x168] sm:$0xf]
        %v2816 = vld [vmem:[%s1 + $0x16c] sm:$0xf]
        %v2817 = vld [vmem:[%s1 + $0x170] sm:$0xf]
        %v2818 = vld [vmem:[%s1 + $0x174] sm:$0xf]
        %v2819 = vld [vmem:[%s1 + $0x178] sm:$0xf]
        %v2820 = vld [vmem:[%s1 + $0x17c] sm:$0xf]
        %v2821 = vld [vmem:[%s1 + $0x180] sm:$0xf]
        %v2822 = vld [vmem:[%s1 + $0x184] sm:$0xf]
        %v2823 = vld [vmem:[%s1 + $0x188] sm:$0xf]
        %v2824 = vld [vmem:[%s1 + $0x18c] sm:$0xf]
        %v2825 = vld [vmem:[%s1 + $0x190] sm:$0xf]
        %v2826 = vld [vmem:[%s1 + $0x194] sm:$0xf]
        %v2827 = vld [vmem:[%s1 + $0x198] sm:$0xf]
        %v2828 = vld [vmem:[%s1 + $0x19c] sm:$0xf]
        %v2829 = vld [vmem:[%s1 + $0x1a0] sm:$0xf]
        %v2830 = vld [vmem:[%s1 + $0x1a4] sm:$0xf]
        %v2831 = vld [vmem:[%s1 + $0x1a8] sm:$0xf]
        %v2832 = vld [vmem:[%s1 + $0x1ac] sm:$0xf]
        %v2833 = vld [vmem:[%s1 + $0x1b0] sm:$0xf]
        %v2834 = vld [vmem:[%s1 + $0x1b4] sm:$0xf]
        %v2835 = vld [vmem:[%s1 + $0x1b8] sm:$0xf]
        %v2836 = vld [vmem:[%s1 + $0x1bc] sm:$0xf]
        %v2837 = vld [vmem:[%s1 + $0x1c0] sm:$0xf]
        %v2838 = vld [vmem:[%s1 + $0x1c4] sm:$0xf]
        %v2839 = vld [vmem:[%s1 + $0x1c8] sm:$0xf]
        %v2840 = vld [vmem:[%s1 + $0x1cc] sm:$0xf]
        %v2841 = vld [vmem:[%s1 + $0x1d0] sm:$0xf]
        %v2842 = vld [vmem:[%s1 + $0x1d4] sm:$0xf]
        %v2843 = vld [vmem:[%s1 + $0x1d8] sm:$0xf]
        %v2844 = vld [vmem:[%s1 + $0x1dc] sm:$0xf]
        %v2845 = vld [vmem:[%s1 + $0x1e0] sm:$0xf]
        %v2846 = vld [vmem:[%s1 + $0x1e4] sm:$0xf]
        %v2847 = vld [vmem:[%s1 + $0x1e8] sm:$0xf]
        %v2848 = vld [vmem:[%s1 + $0x1ec] sm:$0xf]
        %v2849 = vld [vmem:[%s1 + $0x1f0] sm:$0xf]
        %v2850 = vld [vmem:[%s1 + $0x1f4] sm:$0xf]
        %v2851 = vld [vmem:[%s1 + $0x1f8] sm:$0xf]
        %v2852 = vld [vmem:[%s1 + $0x1fc] sm:$0xf]
        %v2853 = vld [vmem:[%s1 + $0x200] sm:$0xf]
        %v2854 = vld [vmem:[%s1 + $0x204] sm:$0xf]
        %v2855 = vld [vmem:[%s1 + $0x208] sm:$0xf]
        %v2856 = vld [vmem:[%s1 + $0x20c] sm:$0xf]
        %v2857 = vld [vmem:[%s1 + $0x210] sm:$0xf]
        %v2858 = vld [vmem:[%s1 + $0x214] sm:$0xf]
        %v2859 = vld [vmem:[%s1 + $0x218] sm:$0xf]
        %v2860 = vld [vmem:[%s1 + $0x21c] sm:$0xf]
        %v2861 = vld [vmem:[%s1 + $0x220] sm:$0xf]
        %v2862 = vld [vmem:[%s1 + $0x224] sm:$0xf]
        %v2863 = vld [vmem:[%s1 + $0x228] sm:$0xf]
        %v2864 = vld [vmem:[%s1 + $0x22c] sm:$0xf]
        %v2865 = vld [vmem:[%s1 + $0x230] sm:$0xf]
        %v2866 = vld [vmem:[%s1 + $0x234] sm:$0xf]
        %v2867 = vld [vmem:[%s1 + $0x238] sm:$0xf]
        %v2868 = vld [vmem:[%s1 + $0x23c] sm:$0xf]
        %v2869 = vld [vmem:[%s1 + $0x240] sm:$0xf]
        %v2870 = vld [vmem:[%s1 + $0x244] sm:$0xf]
        %v2871 = vld [vmem:[%s1 + $0x248] sm:$0xf]
        %v2872 = vld [vmem:[%s1 + $0x24c] sm:$0xf]
        %v2873 = vld [vmem:[%s1 + $0x250] sm:$0xf]
        %v2874 = vld [vmem:[%s1 + $0x254] sm:$0xf]
        %v2875 = vld [vmem:[%s1 + $0x258] sm:$0xf]
        %v2876 = vld [vmem:[%s1 + $0x25c] sm:$0xf]
        %v2877 = vld [vmem:[%s1 + $0x260] sm:$0xf]
        %v2878 = vld [vmem:[%s1 + $0x264] sm:$0xf]
        %v2879 = vld [vmem:[%s1 + $0x268] sm:$0xf]
        %v2880 = vld [vmem:[%s1 + $0x26c] sm:$0xf]
        %v2881 = vld [vmem:[%s1 + $0x270] sm:$0xf]
        %v2882 = vld [vmem:[%s1 + $0x274] sm:$0xf]
        %v2883 = vld [vmem:[%s1 + $0x278] sm:$0xf]
        %v2884 = vld [vmem:[%s1 + $0x27c] sm:$0xf]
        %v2885 = vld [vmem:[%s1 + $0x280] sm:$0xf]
        %v2886 = vld [vmem:[%s1 + $0x284] sm:$0xf]
        %v2887 = vld [vmem:[%s1 + $0x288] sm:$0xf]
        %v2888 = vld [vmem:[%s1 + $0x28c] sm:$0xf]
        %v2889 = vld [vmem:[%s1 + $0x290] sm:$0xf]
        %v2890 = vld [vmem:[%s1 + $0x294] sm:$0xf]
        %v2891 = vld [vmem:[%s1 + $0x298] sm:$0xf]
        %v2892 = vld [vmem:[%s1 + $0x29c] sm:$0xf]
        %v2893 = vld [vmem:[%s1 + $0x2a0] sm:$0xf]
        %v2894 = vld [vmem:[%s1 + $0x2a4] sm:$0xf]
        %v2895 = vld [vmem:[%s1 + $0x2a8] sm:$0xf]
        %v2896 = vld [vmem:[%s1 + $0x2ac] sm:$0xf]
        %v2897 = vld [vmem:[%s1 + $0x2b0] sm:$0xf]
        %v2898 = vld [vmem:[%s1 + $0x2b4] sm:$0xf]
        %v2899 = vld [vmem:[%s1 + $0x2b8] sm:$0xf]
        %v2900 = vld [vmem:[%s1 + $0x2bc] sm:$0xf]
        %v2901 = vld [vmem:[%s2] sm:$0x1]
        %v2903 = vlaneseq
        %v2904 = vshrl.u32 %v2903, 7
        %v2905 = vsub.s32 0, %v2904
        %v2906 = vrot.slane %v2901, %v2905
        %v2910 = vcombine.high %v2723, %v2723
        %v2912 = vunpack.c.l.s4 1966171168
        %v2913 = vunpack.c.0.s8 %v2912
        %v2914 = vlaneseq
        %v2915 = vshrl.u32 %v2914, 7
        %v2916 = vsub.s32 %v2913, %v2915
        %v2917 = vrot.slane %v2723, %v2916
        %v2919 = vunpack.c.l.s4 1966171168
        %v2920 = vunpack.c.0.s8 %v2919
        %v2921 = vlaneseq
        %v2922 = vshrl.u32 %v2921, 7
        %v2923 = vsub.s32 %v2920, %v2922
        %v2924 = vrot.slane %v2910, %v2923
        %v2925 = vcombine.high %v2917, %v2917
        %v2926 = vcombine.high %v2924, %v2924
        %v2928 = vunpack.c.l.s4 1966171168
        %v2929 = vunpack.c.0.s8 %v2928
        %v2930 = vlaneseq
        %v2931 = vshrl.u32 %v2930, 7
        %v2932 = vsub.s32 %v2929, %v2931
        %v2933 = vrot.slane %v2917, %v2932
        %v2935 = vunpack.c.l.s4 1966171168
        %v2936 = vunpack.c.0.s8 %v2935
        %v2937 = vlaneseq
        %v2938 = vshrl.u32 %v2937, 7
        %v2939 = vsub.s32 %v2936, %v2938
        %v2940 = vrot.slane %v2924, %v2939
        %v2942 = vunpack.c.l.s4 1966171168
        %v2943 = vunpack.c.0.s8 %v2942
        %v2944 = vlaneseq
        %v2945 = vshrl.u32 %v2944, 7
        %v2946 = vsub.s32 %v2943, %v2945
        %v2947 = vrot.slane %v2925, %v2946
        %v2949 = vunpack.c.l.s4 1966171168
        %v2950 = vunpack.c.0.s8 %v2949
        %v2951 = vlaneseq
        %v2952 = vshrl.u32 %v2951, 7
        %v2953 = vsub.s32 %v2950, %v2952
        %v2954 = vrot.slane %v2926, %v2953
        %v2955 = vcombine.high %v2933, %v2933
        %v2956 = vcombine.high %v2940, %v2940
        %v2957 = vcombine.high %v2947, %v2947
        %v2958 = vcombine.high %v2954, %v2954
        %v2960 = vunpack.c.l.s4 1966171168
        %v2961 = vunpack.c.0.s8 %v2960
        %v2962 = vlaneseq
        %v2963 = vshrl.u32 %v2962, 7
        %v2964 = vsub.s32 %v2961, %v2963
        %v2965 = vrot.slane %v2724, %v2964
        %v2966 = vcombine.high %v2965, %v2965
        %v2968 = vunpack.c.l.s4 1966171168
        %v2969 = vunpack.c.0.s8 %v2968
        %v2970 = vlaneseq
        %v2971 = vshrl.u32 %v2970, 7
        %v2972 = vsub.s32 %v2969, %v2971
        %v2973 = vrot.slane %v2965, %v2972
        %v2975 = vunpack.c.l.s4 1966171168
        %v2976 = vunpack.c.0.s8 %v2975
        %v2977 = vlaneseq
        %v2978 = vshrl.u32 %v2977, 7
        %v2979 = vsub.s32 %v2976, %v2978
        %v2980 = vrot.slane %v2966, %v2979
        %v2981 = vcombine.high %v2973, %v2973
        %v3169 = vunpack.c.l.b16 %v2725
        %v3170 = vunpack.c.l.b16 %v2726
        %v3171 = vunpack.c.l.b16 %v2727
        %v3172 = vunpack.c.l.b16 %v2728
        %v3173 = vunpack.c.l.b16 %v2729
        %v3174 = vunpack.c.l.b16 %v2730
        %v3175 = vunpack.c.l.b16 %v2731
        %v3176 = vunpack.c.l.b16 %v2732
        %v3177 = vunpack.c.l.b16 %v2733
        %v3178 = vunpack.c.l.b16 %v2734
        %v3179 = vunpack.c.l.b16 %v2735
        %v3180 = vunpack.c.l.b16 %v2736
        %v3181 = vunpack.c.l.b16 %v2737
        %v3182 = vunpack.c.l.b16 %v2738
        %v3183 = vunpack.c.l.b16 %v2739
        %v3184 = vunpack.c.l.b16 %v2740
        %v3185 = vunpack.c.l.b16 %v2741
        %v3186 = vunpack.c.l.b16 %v2742
        %v3187 = vunpack.c.l.b16 %v2743
        %v3188 = vunpack.c.l.b16 %v2744
        %v3189 = vunpack.c.l.b16 %v2745
        %v3190 = vunpack.c.l.b16 %v2746
        %v3191 = vunpack.c.l.b16 %v2747
        %v3192 = vunpack.c.l.b16 %v2748
        %v3193 = vunpack.c.l.b16 %v2749
        %v3194 = vunpack.c.l.b16 %v2750
        %v3195 = vunpack.c.l.b16 %v2751
        %v3196 = vunpack.c.l.b16 %v2752
        %v3197 = vunpack.c.l.b16 %v2753
        %v3198 = vunpack.c.l.b16 %v2754
        %v3199 = vunpack.c.l.b16 %v2755
        %v3200 = vunpack.c.l.b16 %v2756
        %v3201 = vunpack.c.l.b16 %v2757
        %v3202 = vunpack.c.l.b16 %v2758
        %v3203 = vunpack.c.l.b16 %v2759
        %v3204 = vunpack.c.l.b16 %v2760
        %v3205 = vunpack.c.l.b16 %v2761
        %v3206 = vunpack.c.l.b16 %v2762
        %v3207 = vunpack.c.l.b16 %v2763
        %v3208 = vunpack.c.l.b16 %v2764
        %v3209 = vunpack.c.l.b16 %v2765
        %v3210 = vunpack.c.l.b16 %v2766
        %v3211 = vunpack.c.l.b16 %v2767
        %v3212 = vunpack.c.l.b16 %v2768
        %v3213 = vunpack.c.l.b16 %v2769
        %v3214 = vunpack.c.l.b16 %v2770
        %v3215 = vunpack.c.l.b16 %v2771
        %v3216 = vunpack.c.l.b16 %v2772
        %v3217 = vunpack.c.l.b16 %v2773
        %v3218 = vunpack.c.l.b16 %v2774
        %v3219 = vunpack.c.l.b16 %v2775
        %v3220 = vunpack.c.l.b16 %v2776
        %v3221 = vunpack.c.l.b16 %v2777
        %v3222 = vunpack.c.l.b16 %v2778
        %v3223 = vunpack.c.l.b16 %v2779
        %v3224 = vunpack.c.l.b16 %v2780
        %v3225 = vunpack.c.l.b16 %v2781
        %v3226 = vunpack.c.l.b16 %v2782
        %v3227 = vunpack.c.l.b16 %v2783
        %v3228 = vunpack.c.l.b16 %v2784
        %v3229 = vunpack.c.l.b16 %v2785
        %v3230 = vunpack.c.l.b16 %v2786
        %v3231 = vunpack.c.l.b16 %v2787
        %v3232 = vunpack.c.l.b16 %v2788
        %v3233 = vunpack.c.l.b16 %v2789
        %v3234 = vunpack.c.l.b16 %v2790
        %v3235 = vunpack.c.l.b16 %v2791
        %v3236 = vunpack.c.l.b16 %v2792
        %v3237 = vunpack.c.l.b16 %v2793
        %v3238 = vunpack.c.l.b16 %v2794
        %v3239 = vunpack.c.l.b16 %v2795
        %v3240 = vunpack.c.l.b16 %v2796
        %v3241 = vunpack.c.l.b16 %v2797
        %v3242 = vunpack.c.l.b16 %v2798
        %v3243 = vunpack.c.l.b16 %v2799
        %v3244 = vunpack.c.l.b16 %v2800
        %v3245 = vunpack.c.l.b16 %v2801
        %v3246 = vunpack.c.l.b16 %v2802
        %v3247 = vunpack.c.l.b16 %v2803
        %v3248 = vunpack.c.l.b16 %v2804
        %v3249 = vunpack.c.l.b16 %v2805
        %v3250 = vunpack.c.l.b16 %v2806
        %v3251 = vunpack.c.l.b16 %v2807
        %v3252 = vunpack.c.l.b16 %v2808
        %v3253 = vunpack.c.l.b16 %v2809
        %v3254 = vunpack.c.l.b16 %v2810
        %v3255 = vunpack.c.l.b16 %v2811
        %v3256 = vunpack.c.l.b16 %v2812
        %v3257 = vunpack.c.l.b16 %v2813
        %v3258 = vunpack.c.l.b16 %v2814
        %v3259 = vunpack.c.l.b16 %v2815
        %v3260 = vunpack.c.l.b16 %v2816
        %v3261 = vunpack.c.l.b16 %v2817
        %v3262 = vunpack.c.l.b16 %v2818
        %v3263 = vunpack.c.l.b16 %v2819
        %v3264 = vunpack.c.l.b16 %v2820
        %v3265 = vunpack.c.l.b16 %v2821
        %v3266 = vunpack.c.l.b16 %v2822
        %v3267 = vunpack.c.l.b16 %v2823
        %v3268 = vunpack.c.l.b16 %v2824
        %v3269 = vunpack.c.l.b16 %v2825
        %v3270 = vunpack.c.l.b16 %v2826
        %v3271 = vunpack.c.l.b16 %v2827
        %v3272 = vunpack.c.l.b16 %v2828
        %v3273 = vunpack.c.l.b16 %v2829
        %v3274 = vunpack.c.l.b16 %v2830
        %v3275 = vunpack.c.l.b16 %v2831
        %v3276 = vunpack.c.l.b16 %v2832
        %v3277 = vunpack.c.l.b16 %v2833
        %v3278 = vunpack.c.l.b16 %v2834
        %v3279 = vunpack.c.l.b16 %v2835
        %v3280 = vunpack.c.l.b16 %v2836
        %v3281 = vunpack.c.l.b16 %v2837
        %v3282 = vunpack.c.l.b16 %v2838
        %v3283 = vunpack.c.l.b16 %v2839
        %v3284 = vunpack.c.l.b16 %v2840
        %v3285 = vunpack.c.l.b16 %v2841
        %v3286 = vunpack.c.l.b16 %v2842
        %v3287 = vunpack.c.l.b16 %v2843
        %v3288 = vunpack.c.l.b16 %v2844
        %v3289 = vunpack.c.l.b16 %v2845
        %v3290 = vunpack.c.l.b16 %v2846
        %v3291 = vunpack.c.l.b16 %v2847
        %v3292 = vunpack.c.l.b16 %v2848
        %v3293 = vunpack.c.l.b16 %v2849
        %v3294 = vunpack.c.l.b16 %v2850
        %v3295 = vunpack.c.l.b16 %v2851
        %v3296 = vunpack.c.l.b16 %v2852
        %v3297 = vunpack.c.l.b16 %v2853
        %v3298 = vunpack.c.l.b16 %v2854
        %v3299 = vunpack.c.l.b16 %v2855
        %v3300 = vunpack.c.l.b16 %v2856
        %v3301 = vunpack.c.l.b16 %v2857
        %v3302 = vunpack.c.l.b16 %v2858
        %v3303 = vunpack.c.l.b16 %v2859
        %v3304 = vunpack.c.l.b16 %v2860
        %v3305 = vunpack.c.l.b16 %v2861
        %v3306 = vunpack.c.l.b16 %v2862
        %v3307 = vunpack.c.l.b16 %v2863
        %v3308 = vunpack.c.l.b16 %v2864
        %v3309 = vunpack.c.l.b16 %v2865
        %v3310 = vunpack.c.l.b16 %v2866
        %v3311 = vunpack.c.l.b16 %v2867
        %v3312 = vunpack.c.l.b16 %v2868
        %v3313 = vunpack.c.l.b16 %v2869
        %v3314 = vunpack.c.l.b16 %v2870
        %v3315 = vunpack.c.l.b16 %v2871
        %v3316 = vunpack.c.l.b16 %v2872
        %v3317 = vunpack.c.l.b16 %v2873
        %v3318 = vunpack.c.l.b16 %v2874
        %v3319 = vunpack.c.l.b16 %v2875
        %v3320 = vunpack.c.l.b16 %v2876
        %v3321 = vunpack.c.l.b16 %v2877
        %v3322 = vunpack.c.l.b16 %v2878
        %v3323 = vunpack.c.l.b16 %v2879
        %v3324 = vunpack.c.l.b16 %v2880
        %v3325 = vunpack.c.l.b16 %v2881
        %v3326 = vunpack.c.l.b16 %v2882
        %v3327 = vunpack.c.l.b16 %v2883
        %v3328 = vunpack.c.l.b16 %v2884
        %v3329 = vunpack.c.l.b16 %v2885
        %v3330 = vunpack.c.l.b16 %v2886
        %v3331 = vunpack.c.l.b16 %v2887
        %v3332 = vunpack.c.l.b16 %v2888
        %v3333 = vunpack.c.l.b16 %v2889
        %v3334 = vunpack.c.l.b16 %v2890
        %v3335 = vunpack.c.l.b16 %v2891
        %v3336 = vunpack.c.l.b16 %v2892
        %v3337 = vunpack.c.l.b16 %v2893
        %v3338 = vunpack.c.l.b16 %v2894
        %v3339 = vunpack.c.l.b16 %v2895
        %v3340 = vunpack.c.l.b16 %v2896
        %v3341 = vunpack.c.l.b16 %v2897
        %v3342 = vunpack.c.l.b16 %v2898
        %v3343 = vunpack.c.l.b16 %v2899
        %v3344 = vunpack.c.l.b16 %v2900
        %v3345 = vpack.c.b16 %v3170, %v3169
        %v3346 = vpack.c.b16 %v3172, %v3171
        %v3347 = vpack.c.b16 %v3174, %v3173
        %v3348 = vpack.c.b16 %v3176, %v3175
        %v3349 = vpack.c.b16 %v3178, %v3177
        %v3350 = vpack.c.b16 %v3180, %v3179
        %v3351 = vpack.c.b16 %v3182, %v3181
        %v3352 = vpack.c.b16 %v3184, %v3183
        %v3353 = vpack.c.b16 %v3186, %v3185
        %v3354 = vpack.c.b16 %v3188, %v3187
        %v3355 = vpack.c.b16 %v3190, %v3189
        %v3356 = vpack.c.b16 %v3192, %v3191
        %v3357 = vpack.c.b16 %v3194, %v3193
        %v3358 = vpack.c.b16 %v3196, %v3195
        %v3359 = vpack.c.b16 %v3198, %v3197
        %v3360 = vpack.c.b16 %v3200, %v3199
        %v3361 = vpack.c.b16 %v3202, %v3201
        %v3362 = vpack.c.b16 %v3204, %v3203
        %v3363 = vpack.c.b16 %v3206, %v3205
        %v3364 = vpack.c.b16 %v3208, %v3207
        %v3365 = vpack.c.b16 %v3210, %v3209
        %v3366 = vpack.c.b16 %v3212, %v3211
        %v3367 = vpack.c.b16 %v3214, %v3213
        %v3368 = vpack.c.b16 %v3216, %v3215
        %v3369 = vpack.c.b16 %v3218, %v3217
        %v3370 = vpack.c.b16 %v3220, %v3219
        %v3371 = vpack.c.b16 %v3222, %v3221
        %v3372 = vpack.c.b16 %v3224, %v3223
        %v3373 = vpack.c.b16 %v3226, %v3225
        %v3374 = vpack.c.b16 %v3228, %v3227
        %v3375 = vpack.c.b16 %v3230, %v3229
        %v3376 = vpack.c.b16 %v3232, %v3231
        %v3377 = vpack.c.b16 %v3234, %v3233
        %v3378 = vpack.c.b16 %v3236, %v3235
        %v3379 = vpack.c.b16 %v3238, %v3237
        %v3380 = vpack.c.b16 %v3240, %v3239
        %v3381 = vpack.c.b16 %v3242, %v3241
        %v3382 = vpack.c.b16 %v3244, %v3243
        %v3383 = vpack.c.b16 %v3246, %v3245
        %v3384 = vpack.c.b16 %v3248, %v3247
        %v3385 = vpack.c.b16 %v3250, %v3249
        %v3386 = vpack.c.b16 %v3252, %v3251
        %v3387 = vpack.c.b16 %v3254, %v3253
        %v3388 = vpack.c.b16 %v3256, %v3255
        %v3389 = vpack.c.b16 %v3258, %v3257
        %v3390 = vpack.c.b16 %v3260, %v3259
        %v3391 = vpack.c.b16 %v3262, %v3261
        %v3392 = vpack.c.b16 %v3264, %v3263
        %v3393 = vpack.c.b16 %v3266, %v3265
        %v3394 = vpack.c.b16 %v3268, %v3267
        %v3395 = vpack.c.b16 %v3270, %v3269
        %v3396 = vpack.c.b16 %v3272, %v3271
        %v3397 = vpack.c.b16 %v3274, %v3273
        %v3398 = vpack.c.b16 %v3276, %v3275
        %v3399 = vpack.c.b16 %v3278, %v3277
        %v3400 = vpack.c.b16 %v3280, %v3279
        %v3401 = vpack.c.b16 %v3282, %v3281
        %v3402 = vpack.c.b16 %v3284, %v3283
        %v3403 = vpack.c.b16 %v3286, %v3285
        %v3404 = vpack.c.b16 %v3288, %v3287
        %v3405 = vpack.c.b16 %v3290, %v3289
        %v3406 = vpack.c.b16 %v3292, %v3291
        %v3407 = vpack.c.b16 %v3294, %v3293
        %v3408 = vpack.c.b16 %v3296, %v3295
        %v3409 = vpack.c.b16 %v3298, %v3297
        %v3410 = vpack.c.b16 %v3300, %v3299
        %v3411 = vpack.c.b16 %v3302, %v3301
        %v3412 = vpack.c.b16 %v3304, %v3303
        %v3413 = vpack.c.b16 %v3306, %v3305
        %v3414 = vpack.c.b16 %v3308, %v3307
        %v3415 = vpack.c.b16 %v3310, %v3309
        %v3416 = vpack.c.b16 %v3312, %v3311
        %v3417 = vpack.c.b16 %v3314, %v3313
        %v3418 = vpack.c.b16 %v3316, %v3315
        %v3419 = vpack.c.b16 %v3318, %v3317
        %v3420 = vpack.c.b16 %v3320, %v3319
        %v3421 = vpack.c.b16 %v3322, %v3321
        %v3422 = vpack.c.b16 %v3324, %v3323
        %v3423 = vpack.c.b16 %v3326, %v3325
        %v3424 = vpack.c.b16 %v3328, %v3327
        %v3425 = vpack.c.b16 %v3330, %v3329
        %v3426 = vpack.c.b16 %v3332, %v3331
        %v3427 = vpack.c.b16 %v3334, %v3333
        %v3428 = vpack.c.b16 %v3336, %v3335
        %v3429 = vpack.c.b16 %v3338, %v3337
        %v3430 = vpack.c.b16 %v3340, %v3339
        %v3431 = vpack.c.b16 %v3342, %v3341
        %v3432 = vpack.c.b16 %v3344, %v3343
        %3521 = vmatprep.subr.bf16.mxu0 0
        %3522 = vmatpush1.bf16.msra.mxu0 %v3345
        %3523 = vmatprep.subr.bf16.mxu0 0
        %3524 = vmatpush1.bf16.msra.mxu0 %v3346
        %3525 = vmatprep.subr.bf16.mxu0 0
        %3526 = vmatpush1.bf16.msra.mxu0 %v3347
        %3527 = vmatprep.subr.bf16.mxu0 0
        %3528 = vmatpush1.bf16.msra.mxu0 %v3348
        %3529 = vmatprep.subr.bf16.mxu0 0
        %3530 = vmatpush1.bf16.msra.mxu0 %v3349
        %3531 = vmatprep.subr.bf16.mxu0 0
        %3532 = vmatpush1.bf16.msra.mxu0 %v3350
        %3533 = vmatprep.subr.bf16.mxu0 0
        %3534 = vmatpush1.bf16.msra.mxu0 %v3351
        %3535 = vmatprep.subr.bf16.mxu0 0
        %3536 = vmatpush1.bf16.msra.mxu0 %v3352
        %3537 = vmatprep.subr.bf16.mxu0 0
        %3538 = vmatpush1.bf16.msra.mxu0 %v3353
        %3539 = vmatprep.subr.bf16.mxu0 0
        %3540 = vmatpush1.bf16.msra.mxu0 %v3354
        %3541 = vmatprep.subr.bf16.mxu0 0
        %3542 = vmatpush1.bf16.msra.mxu0 %v3355
        %3543 = vmatprep.subr.bf16.mxu0 0
        %3544 = vmatpush1.bf16.msra.mxu0 %v3356
        %3545 = vmatprep.subr.bf16.mxu0 0
        %3546 = vmatpush1.bf16.msra.mxu0 %v3357
        %3547 = vmatprep.subr.bf16.mxu0 0
        %3548 = vmatpush1.bf16.msra.mxu0 %v3358
        %3549 = vmatprep.subr.bf16.mxu0 0
        %3550 = vmatpush1.bf16.msra.mxu0 %v3359
        %3551 = vmatprep.subr.bf16.mxu0 0
        %3552 = vmatpush1.bf16.msra.mxu0 %v3360
        %3553 = vmatprep.mubr.bf16.mxu0 %v2947
        %3554 = vmatmul.mubr.bf16.gmra.mrb[0].mxu0 %v2933
        %v3555 = vpop.f32.mrb[0].mxu0
        %v3556 = vadd.f32 %v2906, %v3555
        %v3557 = vpop.f32.mrb[0].mxu0
        %v3558 = vpop.f32.mrb[0].mxu0
        %v3559 = vpop.f32.mrb[0].mxu0
        %3560 = vdwg.mxu0
        %3561 = vmatprep.subr.bf16.mxu0 0
        %3562 = vmatpush1.bf16.msra.mxu0 %v3361
        %3563 = vmatprep.subr.bf16.mxu0 0
        %3564 = vmatpush1.bf16.msra.mxu0 %v3362
        %3565 = vmatprep.subr.bf16.mxu0 0
        %3566 = vmatpush1.bf16.msra.mxu0 %v3363
        %3567 = vmatprep.subr.bf16.mxu0 0
        %3568 = vmatpush1.bf16.msra.mxu0 %v3364
        %3569 = vmatprep.subr.bf16.mxu0 0
        %3570 = vmatpush1.bf16.msra.mxu0 %v3365
        %3571 = vmatprep.subr.bf16.mxu0 0
        %3572 = vmatpush1.bf16.msra.mxu0 %v3366
        %3573 = vmatprep.subr.bf16.mxu0 0
        %3574 = vmatpush1.bf16.msra.mxu0 %v3367
        %3575 = vmatprep.subr.bf16.mxu0 0
        %3576 = vmatpush1.bf16.msra.mxu0 %v3368
        %3577 = vmatprep.subr.bf16.mxu0 0
        %3578 = vmatpush1.bf16.msra.mxu0 %v3369
        %3579 = vmatprep.subr.bf16.mxu0 0
        %3580 = vmatpush1.bf16.msra.mxu0 %v3370
        %3581 = vmatprep.subr.bf16.mxu0 0
        %3582 = vmatpush1.bf16.msra.mxu0 %v3371
        %3583 = vmatprep.subr.bf16.mxu0 0
        %3584 = vmatpush1.bf16.msra.mxu0 %v3372
        %3585 = vmatprep.subr.bf16.mxu0 0
        %3586 = vmatpush1.bf16.msra.mxu0 %v3373
        %3587 = vmatprep.subr.bf16.mxu0 0
        %3588 = vmatpush1.bf16.msra.mxu0 %v3374
        %3589 = vmatprep.subr.bf16.mxu0 0
        %3590 = vmatpush1.bf16.msra.mxu0 %v3375
        %3591 = vmatprep.subr.bf16.mxu0 0
        %3592 = vmatpush1.bf16.msra.mxu0 %v3376
        %3593 = vmatprep.mubr.bf16.mxu0 %v2957
        %3594 = vmatmul.mubr.bf16.gmra.mrb[0].mxu0 %v2955
        %v3595 = vpop.f32.mrb[0].mxu0
        %v3596 = vadd.f32 %v3556, %v3595
        %v3597 = vpop.f32.mrb[0].mxu0
        %v3598 = vpop.f32.mrb[0].mxu0
        %v3599 = vpop.f32.mrb[0].mxu0
        %3600 = vdwg.mxu0
        %3601 = vmatprep.subr.bf16.mxu0 0
        %3602 = vmatpush1.bf16.msra.mxu0 %v3377
        %3603 = vmatprep.subr.bf16.mxu0 0
        %3604 = vmatpush1.bf16.msra.mxu0 %v3378
        %3605 = vmatprep.subr.bf16.mxu0 0
        %3606 = vmatpush1.bf16.msra.mxu0 %v3379
        %3607 = vmatprep.subr.bf16.mxu0 0
        %3608 = vmatpush1.bf16.msra.mxu0 %v3380
        %3609 = vmatprep.subr.bf16.mxu0 0
        %3610 = vmatpush1.bf16.msra.mxu0 %v3381
        %3611 = vmatprep.subr.bf16.mxu0 0
        %3612 = vmatpush1.bf16.msra.mxu0 %v3382
        %3613 = vmatprep.subr.bf16.mxu0 0
        %3614 = vmatpush1.bf16.msra.mxu0 %v3383
        %3615 = vmatprep.subr.bf16.mxu0 0
        %3616 = vmatpush1.bf16.msra.mxu0 %v3384
        %3617 = vmatprep.subr.bf16.mxu0 0
        %3618 = vmatpush1.bf16.msra.mxu0 %v3385
        %3619 = vmatprep.subr.bf16.mxu0 0
        %3620 = vmatpush1.bf16.msra.mxu0 %v3386
        %3621 = vmatprep.subr.bf16.mxu0 0
        %3622 = vmatpush1.bf16.msra.mxu0 %v3387
        %3623 = vmatprep.subr.bf16.mxu0 0
        %3624 = vmatpush1.bf16.msra.mxu0 %v3388
        %3625 = vmatprep.subr.bf16.mxu0 0
        %3626 = vmatpush1.bf16.msra.mxu0 %v3389
        %3627 = vmatprep.subr.bf16.mxu0 0
        %3628 = vmatpush1.bf16.msra.mxu0 %v3390
        %3629 = vmatprep.subr.bf16.mxu0 0
        %3630 = vmatpush1.bf16.msra.mxu0 %v3391
        %3631 = vmatprep.subr.bf16.mxu0 0
        %3632 = vmatpush1.bf16.msra.mxu0 %v3392
        %3633 = vmatprep.mubr.bf16.mxu0 %v2954
        %3634 = vmatmul.mubr.bf16.gmra.mrb[0].mxu0 %v2940
        %v3635 = vpop.f32.mrb[0].mxu0
        %v3636 = vadd.f32 %v3596, %v3635
        %v3637 = vpop.f32.mrb[0].mxu0
        %v3638 = vpop.f32.mrb[0].mxu0
        %v3639 = vpop.f32.mrb[0].mxu0
        %3640 = vdwg.mxu0
        %3641 = vmatprep.subr.bf16.mxu0 0
        %3642 = vmatpush1.bf16.msra.mxu0 %v3393
        %3643 = vmatprep.subr.bf16.mxu0 0
        %3644 = vmatpush1.bf16.msra.mxu0 %v3394
        %3645 = vmatprep.subr.bf16.mxu0 0
        %3646 = vmatpush1.bf16.msra.mxu0 %v3395
        %3647 = vmatprep.subr.bf16.mxu0 0
        %3648 = vmatpush1.bf16.msra.mxu0 %v3396
        %3649 = vmatprep.subr.bf16.mxu0 0
        %3650 = vmatpush1.bf16.msra.mxu0 %v3397
        %3651 = vmatprep.subr.bf16.mxu0 0
        %3652 = vmatpush1.bf16.msra.mxu0 %v3398
        %3653 = vmatprep.subr.bf16.mxu0 0
        %3654 = vmatpush1.bf16.msra.mxu0 %v3399
        %3655 = vmatprep.subr.bf16.mxu0 0
        %3656 = vmatpush1.bf16.msra.mxu0 %v3400
        %3657 = vmatprep.subr.bf16.mxu0 0
        %3658 = vmatpush1.bf16.msra.mxu0 %v3401
        %3659 = vmatprep.subr.bf16.mxu0 0
        %3660 = vmatpush1.bf16.msra.mxu0 %v3402
        %3661 = vmatprep.subr.bf16.mxu0 0
        %3662 = vmatpush1.bf16.msra.mxu0 %v3403
        %3663 = vmatprep.subr.bf16.mxu0 0
        %3664 = vmatpush1.bf16.msra.mxu0 %v3404
        %3665 = vmatprep.subr.bf16.mxu0 0
        %3666 = vmatpush1.bf16.msra.mxu0 %v3405
        %3667 = vmatprep.subr.bf16.mxu0 0
        %3668 = vmatpush1.bf16.msra.mxu0 %v3406
        %3669 = vmatprep.subr.bf16.mxu0 0
        %3670 = vmatpush1.bf16.msra.mxu0 %v3407
        %3671 = vmatprep.subr.bf16.mxu0 0
        %3672 = vmatpush1.bf16.msra.mxu0 %v3408
        %3673 = vmatprep.mubr.bf16.mxu0 %v2958
        %3674 = vmatmul.mubr.bf16.gmra.mrb[0].mxu0 %v2956
        %v3675 = vpop.f32.mrb[0].mxu0
        %v3676 = vadd.f32 %v3636, %v3675
        %v3677 = vpop.f32.mrb[0].mxu0
        %v3678 = vpop.f32.mrb[0].mxu0
        %v3679 = vpop.f32.mrb[0].mxu0
        %3680 = vdwg.mxu0
        %3681 = vmatprep.subr.bf16.mxu0 0
        %3682 = vmatpush1.bf16.msra.mxu0 %v3409
        %3683 = vmatprep.subr.bf16.mxu0 0
        %3684 = vmatpush1.bf16.msra.mxu0 %v3410
        %3685 = vmatprep.subr.bf16.mxu0 0
        %3686 = vmatpush1.bf16.msra.mxu0 %v3411
        %3687 = vmatprep.subr.bf16.mxu0 0
        %3688 = vmatpush1.bf16.msra.mxu0 %v3412
        %3689 = vmatprep.subr.bf16.mxu0 0
        %3690 = vmatpush1.bf16.msra.mxu0 %v3413
        %3691 = vmatprep.subr.bf16.mxu0 0
        %3692 = vmatpush1.bf16.msra.mxu0 %v3414
        %3693 = vmatprep.subr.bf16.mxu0 0
        %3694 = vmatpush1.bf16.msra.mxu0 %v3415
        %3695 = vmatprep.subr.bf16.mxu0 0
        %3696 = vmatpush1.bf16.msra.mxu0 %v3416
        %3697 = vmatprep.subr.bf16.mxu0 0
        %3698 = vmatpush1.bf16.msra.mxu0 %v3417
        %3699 = vmatprep.subr.bf16.mxu0 0
        %3700 = vmatpush1.bf16.msra.mxu0 %v3418
        %3701 = vmatprep.subr.bf16.mxu0 0
        %3702 = vmatpush1.bf16.msra.mxu0 %v3419
        %3703 = vmatprep.subr.bf16.mxu0 0
        %3704 = vmatpush1.bf16.msra.mxu0 %v3420
        %3705 = vmatprep.subr.bf16.mxu0 0
        %3706 = vmatpush1.bf16.msra.mxu0 %v3421
        %3707 = vmatprep.subr.bf16.mxu0 0
        %3708 = vmatpush1.bf16.msra.mxu0 %v3422
        %3709 = vmatprep.subr.bf16.mxu0 0
        %3710 = vmatpush1.bf16.msra.mxu0 %v3423
        %3711 = vmatprep.subr.bf16.mxu0 0
        %3712 = vmatpush1.bf16.msra.mxu0 %v3424
        %3713 = vmatprep.mubr.bf16.mxu0 %v2980
        %3714 = vmatmul.mubr.bf16.gmra.mrb[0].mxu0 %v2973
        %v3715 = vpop.f32.mrb[0].mxu0
        %v3716 = vadd.f32 %v3676, %v3715
        %v3717 = vpop.f32.mrb[0].mxu0
        %v3718 = vpop.f32.mrb[0].mxu0
        %v3719 = vpop.f32.mrb[0].mxu0
        %3720 = vdwg.mxu0
        %3721 = vmatprep.subr.bf16.mxu0 0
        %3722 = vmatpush1.bf16.msra.mxu0 %v3425
        %3723 = vmatprep.subr.bf16.mxu0 0
        %3724 = vmatpush1.bf16.msra.mxu0 %v3426
        %3725 = vmatprep.subr.bf16.mxu0 0
        %3726 = vmatpush1.bf16.msra.mxu0 %v3427
        %3727 = vmatprep.subr.bf16.mxu0 0
        %3728 = vmatpush1.bf16.msra.mxu0 %v3428
        %3729 = vmatprep.subr.bf16.mxu0 0
        %3730 = vmatpush1.bf16.msra.mxu0 %v3429
        %3731 = vmatprep.subr.bf16.mxu0 0
        %3732 = vmatpush1.bf16.msra.mxu0 %v3430
        %3733 = vmatprep.subr.bf16.mxu0 0
        %3734 = vmatpush1.bf16.msra.mxu0 %v3431
        %3735 = vmatprep.subr.bf16.mxu0 0
        %3736 = vmatpush1.bf16.msra.mxu0 %v3432
        %3737 = vmatprep.subr.bf16.mxu0 0
        %3738 = vmatpush1.bf16.msra.mxu0 0
        %3739 = vmatprep.subr.bf16.mxu0 0
        %3740 = vmatpush1.bf16.msra.mxu0 0
        %3741 = vmatprep.subr.bf16.mxu0 0
        %3742 = vmatpush1.bf16.msra.mxu0 0
        %3743 = vmatprep.subr.bf16.mxu0 0
        %3744 = vmatpush1.bf16.msra.mxu0 0
        %3745 = vmatprep.subr.bf16.mxu0 0
        %3746 = vmatpush1.bf16.msra.mxu0 0
        %3747 = vmatprep.subr.bf16.mxu0 0
        %3748 = vmatpush1.bf16.msra.mxu0 0
        %3749 = vmatprep.subr.bf16.mxu0 0
        %3750 = vmatpush1.bf16.msra.mxu0 0
        %3751 = vmatprep.subr.bf16.mxu0 0
        %3752 = vmatpush1.bf16.msra.mxu0 0
        %3753 = vmatprep.mubr.bf16.mxu0 0
        %3754 = vmatmul.mubr.bf16.gmra.mrb[0].mxu0 %v2981
        %v3755 = vpop.f32.mrb[0].mxu0
        %v3756 = vadd.f32 %v3716, %v3755
        %v3757 = vpop.f32.mrb[0].mxu0
        %v3758 = vpop.f32.mrb[0].mxu0
        %v3759 = vpop.f32.mrb[0].mxu0
        %3760 = vdwg.mxu0
        %v3761 = vtanh.pop %v3756
        %v3762 = vpack.c.bf16 %v3761, %v3761
        %v3763 = vld [vmem:[%s3] sm:$0xf]
        %v3764 = vld [vmem:[%s3 + $0x4] sm:$0xf]
        %v3765 = vld [vmem:[%s3 + $0x8] sm:$0xf]
        %v3766 = vld [vmem:[%s3 + $0xc] sm:$0xf]
        %v3767 = vld [vmem:[%s3 + $0x10] sm:$0xf]
        %v3768 = vld [vmem:[%s3 + $0x14] sm:$0xf]
        %v3769 = vld [vmem:[%s3 + $0x18] sm:$0xf]
        %v3770 = vld [vmem:[%s4] sm:$0x1]
        %v3772 = vlaneseq
        %v3773 = vshrl.u32 %v3772, 7
        %v3774 = vsub.s32 0, %v3773
        %v3775 = vrot.slane %v3770, %v3774
        %v3784 = vunpack.c.l.b16 %v3763
        %v3785 = vunpack.c.l.b16 %v3764
        %v3786 = vunpack.c.l.b16 %v3765
        %v3787 = vunpack.c.l.b16 %v3766
        %v3788 = vunpack.c.l.b16 %v3767
        %v3789 = vunpack.c.l.b16 %v3768
        %v3790 = vunpack.c.l.b16 %v3769
        %v3791 = vpack.c.b16 %v3785, %v3784
        %v3792 = vpack.c.b16 %v3787, %v3786
        %v3793 = vpack.c.b16 %v3789, %v3788
        %v3794 = vpack.c.b16 %v3790, %v3790
        %v3799 = vsel %vm1378, %v3762, 0
        %v3802 = vand.u32 %v3794, %v1385
        %3804 = vmatprep.subr.bf16.mxu0 0
        %3805 = vmatpush1.bf16.msra.mxu0 %v3791
        %3806 = vmatprep.subr.bf16.mxu0 0
        %3807 = vmatpush1.bf16.msra.mxu0 %v3792
        %3808 = vmatprep.subr.bf16.mxu0 0
        %3809 = vmatpush1.bf16.msra.mxu0 %v3793
        %3810 = vmatprep.subr.bf16.mxu0 0
        %3811 = vmatpush1.bf16.msra.mxu0 %v3802
        %3812 = vmatprep.subr.bf16.mxu0 0
        %3813 = vmatpush1.bf16.msra.mxu0 0
        %3814 = vmatprep.subr.bf16.mxu0 0
        %3815 = vmatpush1.bf16.msra.mxu0 0
        %3816 = vmatprep.subr.bf16.mxu0 0
        %3817 = vmatpush1.bf16.msra.mxu0 0
        %3818 = vmatprep.subr.bf16.mxu0 0
        %3819 = vmatpush1.bf16.msra.mxu0 0
        %3820 = vmatprep.subr.bf16.mxu0 0
        %3821 = vmatpush1.bf16.msra.mxu0 0
        %3822 = vmatprep.subr.bf16.mxu0 0
        %3823 = vmatpush1.bf16.msra.mxu0 0
        %3824 = vmatprep.subr.bf16.mxu0 0
        %3825 = vmatpush1.bf16.msra.mxu0 0
        %3826 = vmatprep.subr.bf16.mxu0 0
        %3827 = vmatpush1.bf16.msra.mxu0 0
        %3828 = vmatprep.subr.bf16.mxu0 0
        %3829 = vmatpush1.bf16.msra.mxu0 0
        %3830 = vmatprep.subr.bf16.mxu0 0
        %3831 = vmatpush1.bf16.msra.mxu0 0
        %3832 = vmatprep.subr.bf16.mxu0 0
        %3833 = vmatpush1.bf16.msra.mxu0 0
        %3834 = vmatprep.subr.bf16.mxu0 0
        %3835 = vmatpush1.bf16.msra.mxu0 0
        %3836 = vmatprep.mubr.bf16.mxu0 0
        %3837 = vmatmul.mubr.bf16.gmra.mrb[0].mxu0 %v3799
        %v3838 = vpop.f32.mrb[0].mxu0
        %v3839 = vadd.f32 %v3775, %v3838
        %v3840 = vpop.f32.mrb[0].mxu0
        %v3841 = vpop.f32.mrb[0].mxu0
        %v3842 = vpop.f32.mrb[0].mxu0
        %3843 = vdwg.mxu0
        %v3844 = vtanh.pop %v3839
        %v3845 = vld [vmem:[#allocation2] sm:$0x3]
        %v3846 = vpack.c.bf16 %v3844, %v3844
        %s3847 = scalar_lea.vmem %s294, 64
        %v3848 = vld [vmem:[%s3847] sm:$0xf]
        %v3849 = vld [vmem:[%s3847 + $0x4] sm:$0xf]
        %v3850 = vld [vmem:[%s3847 + $0x8] sm:$0xf]
        %v3851 = vld [vmem:[%s3847 + $0xc] sm:$0xf]
        %v3852 = vld [vmem:[%s3847 + $0x10] sm:$0xf]
        %v3853 = vld [vmem:[%s3847 + $0x14] sm:$0xf]
        %v3854 = vld [vmem:[%s3847 + $0x18] sm:$0xf]
        %v3855 = vld [vmem:[%s3847 + $0x1c] sm:$0x7]
        %v3864 = vunpack.c.l.b16 %v3848
        %v3865 = vunpack.c.l.b16 %v3849
        %v3866 = vunpack.c.l.b16 %v3850
        %v3867 = vunpack.c.l.b16 %v3851
        %v3868 = vunpack.c.l.b16 %v3852
        %v3869 = vunpack.c.l.b16 %v3853
        %v3870 = vunpack.c.l.b16 %v3854
        %v3871 = vunpack.c.l.b16 %v3855
        %v3872 = vpack.c.b16 %v3865, %v3864
        %v3873 = vpack.c.b16 %v3867, %v3866
        %v3874 = vpack.c.b16 %v3869, %v3868
        %v3875 = vpack.c.b16 %v3871, %v3870
        %v3880 = vsel %vm1463, %v3846, 0
        %v3883 = vand.u32 %v3875, %v1470
        %3885 = vmatprep.subr.bf16.mxu0 0
        %3886 = vmatpush1.bf16.msra.mxu0 %v3872
        %3887 = vmatprep.subr.bf16.mxu0 0
        %3888 = vmatpush1.bf16.msra.mxu0 %v3873
        %3889 = vmatprep.subr.bf16.mxu0 0
        %3890 = vmatpush1.bf16.msra.mxu0 %v3874
        %3891 = vmatprep.subr.bf16.mxu0 0
        %3892 = vmatpush1.bf16.msra.mxu0 %v3883
        %3893 = vmatprep.subr.bf16.mxu0 0
        %3894 = vmatpush1.bf16.msra.mxu0 0
        %3895 = vmatprep.subr.bf16.mxu0 0
        %3896 = vmatpush1.bf16.msra.mxu0 0
        %3897 = vmatprep.subr.bf16.mxu0 0
        %3898 = vmatpush1.bf16.msra.mxu0 0
        %3899 = vmatprep.subr.bf16.mxu0 0
        %3900 = vmatpush1.bf16.msra.mxu0 0
        %3901 = vmatprep.subr.bf16.mxu0 0
        %3902 = vmatpush1.bf16.msra.mxu0 0
        %3903 = vmatprep.subr.bf16.mxu0 0
        %3904 = vmatpush1.bf16.msra.mxu0 0
        %3905 = vmatprep.subr.bf16.mxu0 0
        %3906 = vmatpush1.bf16.msra.mxu0 0
        %3907 = vmatprep.subr.bf16.mxu0 0
        %3908 = vmatpush1.bf16.msra.mxu0 0
        %3909 = vmatprep.subr.bf16.mxu0 0
        %3910 = vmatpush1.bf16.msra.mxu0 0
        %3911 = vmatprep.subr.bf16.mxu0 0
        %3912 = vmatpush1.bf16.msra.mxu0 0
        %3913 = vmatprep.subr.bf16.mxu0 0
        %3914 = vmatpush1.bf16.msra.mxu0 0
        %3915 = vmatprep.subr.bf16.mxu0 0
        %3916 = vmatpush1.bf16.msra.mxu0 0
        %3917 = vmatprep.mubr.bf16.mxu0 0
        %3918 = vmatmul.mubr.bf16.gmra.mrb[0].mxu0 %v3880
        %v3919 = vpop.f32.mrb[0].mxu0
        %v3920 = vadd.f32 0.0, %v3919
        %v3921 = vpop.f32.mrb[0].mxu0
        %v3922 = vpop.f32.mrb[0].mxu0
        %v3923 = vpop.f32.mrb[0].mxu0
        %3924 = vdwg.mxu0
        %v3925 = vadd.f32 %v3845, %v3920
        %3926 = vst.msk [vmem:[#allocation2] sm:$0x3] %vm1515, %v3925
        %s3927 = scalar_lea.vmem %s287, 33
        %v3928 = vld [vmem:[%s3927] sm:$0xff]
        %v3929 = vld [vmem:[%s3927 + $0x8] sm:$0x7]
        %v3930 = vld [vmem:[%s1] sm:$0xf]
        %v3931 = vld [vmem:[%s1 + $0x4] sm:$0xf]
        %v3932 = vld [vmem:[%s1 + $0x8] sm:$0xf]
        %v3933 = vld [vmem:[%s1 + $0xc] sm:$0xf]
        %v3934 = vld [vmem:[%s1 + $0x10] sm:$0xf]
        %v3935 = vld [vmem:[%s1 + $0x14] sm:$0xf]
        %v3936 = vld [vmem:[%s1 + $0x18] sm:$0xf]
        %v3937 = vld [vmem:[%s1 + $0x1c] sm:$0xf]
        %v3938 = vld [vmem:[%s1 + $0x20] sm:$0xf]
        %v3939 = vld [vmem:[%s1 + $0x24] sm:$0xf]
        %v3940 = vld [vmem:[%s1 + $0x28] sm:$0xf]
        %v3941 = vld [vmem:[%s1 + $0x2c] sm:$0xf]
        %v3942 = vld [vmem:[%s1 + $0x30] sm:$0xf]
        %v3943 = vld [vmem:[%s1 + $0x34] sm:$0xf]
        %v3944 = vld [vmem:[%s1 + $0x38] sm:$0xf]
        %v3945 = vld [vmem:[%s1 + $0x3c] sm:$0xf]
        %v3946 = vld [vmem:[%s1 + $0x40] sm:$0xf]
        %v3947 = vld [vmem:[%s1 + $0x44] sm:$0xf]
        %v3948 = vld [vmem:[%s1 + $0x48] sm:$0xf]
        %v3949 = vld [vmem:[%s1 + $0x4c] sm:$0xf]
        %v3950 = vld [vmem:[%s1 + $0x50] sm:$0xf]
        %v3951 = vld [vmem:[%s1 + $0x54] sm:$0xf]
        %v3952 = vld [vmem:[%s1 + $0x58] sm:$0xf]
        %v3953 = vld [vmem:[%s1 + $0x5c] sm:$0xf]
        %v3954 = vld [vmem:[%s1 + $0x60] sm:$0xf]
        %v3955 = vld [vmem:[%s1 + $0x64] sm:$0xf]
        %v3956 = vld [vmem:[%s1 + $0x68] sm:$0xf]
        %v3957 = vld [vmem:[%s1 + $0x6c] sm:$0xf]
        %v3958 = vld [vmem:[%s1 + $0x70] sm:$0xf]
        %v3959 = vld [vmem:[%s1 + $0x74] sm:$0xf]
        %v3960 = vld [vmem:[%s1 + $0x78] sm:$0xf]
        %v3961 = vld [vmem:[%s1 + $0x7c] sm:$0xf]
        %v3962 = vld [vmem:[%s1 + $0x80] sm:$0xf]
        %v3963 = vld [vmem:[%s1 + $0x84] sm:$0xf]
        %v3964 = vld [vmem:[%s1 + $0x88] sm:$0xf]
        %v3965 = vld [vmem:[%s1 + $0x8c] sm:$0xf]
        %v3966 = vld [vmem:[%s1 + $0x90] sm:$0xf]
        %v3967 = vld [vmem:[%s1 + $0x94] sm:$0xf]
        %v3968 = vld [vmem:[%s1 + $0x98] sm:$0xf]
        %v3969 = vld [vmem:[%s1 + $0x9c] sm:$0xf]
        %v3970 = vld [vmem:[%s1 + $0xa0] sm:$0xf]
        %v3971 = vld [vmem:[%s1 + $0xa4] sm:$0xf]
        %v3972 = vld [vmem:[%s1 + $0xa8] sm:$0xf]
        %v3973 = vld [vmem:[%s1 + $0xac] sm:$0xf]
        %v3974 = vld [vmem:[%s1 + $0xb0] sm:$0xf]
        %v3975 = vld [vmem:[%s1 + $0xb4] sm:$0xf]
        %v3976 = vld [vmem:[%s1 + $0xb8] sm:$0xf]
        %v3977 = vld [vmem:[%s1 + $0xbc] sm:$0xf]
        %v3978 = vld [vmem:[%s1 + $0xc0] sm:$0xf]
        %v3979 = vld [vmem:[%s1 + $0xc4] sm:$0xf]
        %v3980 = vld [vmem:[%s1 + $0xc8] sm:$0xf]
        %v3981 = vld [vmem:[%s1 + $0xcc] sm:$0xf]
        %v3982 = vld [vmem:[%s1 + $0xd0] sm:$0xf]
        %v3983 = vld [vmem:[%s1 + $0xd4] sm:$0xf]
        %v3984 = vld [vmem:[%s1 + $0xd8] sm:$0xf]
        %v3985 = vld [vmem:[%s1 + $0xdc] sm:$0xf]
        %v3986 = vld [vmem:[%s1 + $0xe0] sm:$0xf]
        %v3987 = vld [vmem:[%s1 + $0xe4] sm:$0xf]
        %v3988 = vld [vmem:[%s1 + $0xe8] sm:$0xf]
        %v3989 = vld [vmem:[%s1 + $0xec] sm:$0xf]
        %v3990 = vld [vmem:[%s1 + $0xf0] sm:$0xf]
        %v3991 = vld [vmem:[%s1 + $0xf4] sm:$0xf]
        %v3992 = vld [vmem:[%s1 + $0xf8] sm:$0xf]
        %v3993 = vld [vmem:[%s1 + $0xfc] sm:$0xf]
        %v3994 = vld [vmem:[%s1 + $0x100] sm:$0xf]
        %v3995 = vld [vmem:[%s1 + $0x104] sm:$0xf]
        %v3996 = vld [vmem:[%s1 + $0x108] sm:$0xf]
        %v3997 = vld [vmem:[%s1 + $0x10c] sm:$0xf]
        %v3998 = vld [vmem:[%s1 + $0x110] sm:$0xf]
        %v3999 = vld [vmem:[%s1 + $0x114] sm:$0xf]
        %v4000 = vld [vmem:[%s1 + $0x118] sm:$0xf]
        %v4001 = vld [vmem:[%s1 + $0x11c] sm:$0xf]
        %v4002 = vld [vmem:[%s1 + $0x120] sm:$0xf]
        %v4003 = vld [vmem:[%s1 + $0x124] sm:$0xf]
        %v4004 = vld [vmem:[%s1 + $0x128] sm:$0xf]
        %v4005 = vld [vmem:[%s1 + $0x12c] sm:$0xf]
        %v4006 = vld [vmem:[%s1 + $0x130] sm:$0xf]
        %v4007 = vld [vmem:[%s1 + $0x134] sm:$0xf]
        %v4008 = vld [vmem:[%s1 + $0x138] sm:$0xf]
        %v4009 = vld [vmem:[%s1 + $0x13c] sm:$0xf]
        %v4010 = vld [vmem:[%s1 + $0x140] sm:$0xf]
        %v4011 = vld [vmem:[%s1 + $0x144] sm:$0xf]
        %v4012 = vld [vmem:[%s1 + $0x148] sm:$0xf]
        %v4013 = vld [vmem:[%s1 + $0x14c] sm:$0xf]
        %v4014 = vld [vmem:[%s1 + $0x150] sm:$0xf]
        %v4015 = vld [vmem:[%s1 + $0x154] sm:$0xf]
        %v4016 = vld [vmem:[%s1 + $0x158] sm:$0xf]
        %v4017 = vld [vmem:[%s1 + $0x15c] sm:$0xf]
        %v4018 = vld [vmem:[%s1 + $0x160] sm:$0xf]
        %v4019 = vld [vmem:[%s1 + $0x164] sm:$0xf]
        %v4020 = vld [vmem:[%s1 + $0x168] sm:$0xf]
        %v4021 = vld [vmem:[%s1 + $0x16c] sm:$0xf]
        %v4022 = vld [vmem:[%s1 + $0x170] sm:$0xf]
        %v4023 = vld [vmem:[%s1 + $0x174] sm:$0xf]
        %v4024 = vld [vmem:[%s1 + $0x178] sm:$0xf]
        %v4025 = vld [vmem:[%s1 + $0x17c] sm:$0xf]
        %v4026 = vld [vmem:[%s1 + $0x180] sm:$0xf]
        %v4027 = vld [vmem:[%s1 + $0x184] sm:$0xf]
        %v4028 = vld [vmem:[%s1 + $0x188] sm:$0xf]
        %v4029 = vld [vmem:[%s1 + $0x18c] sm:$0xf]
        %v4030 = vld [vmem:[%s1 + $0x190] sm:$0xf]
        %v4031 = vld [vmem:[%s1 + $0x194] sm:$0xf]
        %v4032 = vld [vmem:[%s1 + $0x198] sm:$0xf]
        %v4033 = vld [vmem:[%s1 + $0x19c] sm:$0xf]
        %v4034 = vld [vmem:[%s1 + $0x1a0] sm:$0xf]
        %v4035 = vld [vmem:[%s1 + $0x1a4] sm:$0xf]
        %v4036 = vld [vmem:[%s1 + $0x1a8] sm:$0xf]
        %v4037 = vld [vmem:[%s1 + $0x1ac] sm:$0xf]
        %v4038 = vld [vmem:[%s1 + $0x1b0] sm:$0xf]
        %v4039 = vld [vmem:[%s1 + $0x1b4] sm:$0xf]
        %v4040 = vld [vmem:[%s1 + $0x1b8] sm:$0xf]
        %v4041 = vld [vmem:[%s1 + $0x1bc] sm:$0xf]
        %v4042 = vld [vmem:[%s1 + $0x1c0] sm:$0xf]
        %v4043 = vld [vmem:[%s1 + $0x1c4] sm:$0xf]
        %v4044 = vld [vmem:[%s1 + $0x1c8] sm:$0xf]
        %v4045 = vld [vmem:[%s1 + $0x1cc] sm:$0xf]
        %v4046 = vld [vmem:[%s1 + $0x1d0] sm:$0xf]
        %v4047 = vld [vmem:[%s1 + $0x1d4] sm:$0xf]
        %v4048 = vld [vmem:[%s1 + $0x1d8] sm:$0xf]
        %v4049 = vld [vmem:[%s1 + $0x1dc] sm:$0xf]
        %v4050 = vld [vmem:[%s1 + $0x1e0] sm:$0xf]
        %v4051 = vld [vmem:[%s1 + $0x1e4] sm:$0xf]
        %v4052 = vld [vmem:[%s1 + $0x1e8] sm:$0xf]
        %v4053 = vld [vmem:[%s1 + $0x1ec] sm:$0xf]
        %v4054 = vld [vmem:[%s1 + $0x1f0] sm:$0xf]
        %v4055 = vld [vmem:[%s1 + $0x1f4] sm:$0xf]
        %v4056 = vld [vmem:[%s1 + $0x1f8] sm:$0xf]
        %v4057 = vld [vmem:[%s1 + $0x1fc] sm:$0xf]
        %v4058 = vld [vmem:[%s1 + $0x200] sm:$0xf]
        %v4059 = vld [vmem:[%s1 + $0x204] sm:$0xf]
        %v4060 = vld [vmem:[%s1 + $0x208] sm:$0xf]
        %v4061 = vld [vmem:[%s1 + $0x20c] sm:$0xf]
        %v4062 = vld [vmem:[%s1 + $0x210] sm:$0xf]
        %v4063 = vld [vmem:[%s1 + $0x214] sm:$0xf]
        %v4064 = vld [vmem:[%s1 + $0x218] sm:$0xf]
        %v4065 = vld [vmem:[%s1 + $0x21c] sm:$0xf]
        %v4066 = vld [vmem:[%s1 + $0x220] sm:$0xf]
        %v4067 = vld [vmem:[%s1 + $0x224] sm:$0xf]
        %v4068 = vld [vmem:[%s1 + $0x228] sm:$0xf]
        %v4069 = vld [vmem:[%s1 + $0x22c] sm:$0xf]
        %v4070 = vld [vmem:[%s1 + $0x230] sm:$0xf]
        %v4071 = vld [vmem:[%s1 + $0x234] sm:$0xf]
        %v4072 = vld [vmem:[%s1 + $0x238] sm:$0xf]
        %v4073 = vld [vmem:[%s1 + $0x23c] sm:$0xf]
        %v4074 = vld [vmem:[%s1 + $0x240] sm:$0xf]
        %v4075 = vld [vmem:[%s1 + $0x244] sm:$0xf]
        %v4076 = vld [vmem:[%s1 + $0x248] sm:$0xf]
        %v4077 = vld [vmem:[%s1 + $0x24c] sm:$0xf]
        %v4078 = vld [vmem:[%s1 + $0x250] sm:$0xf]
        %v4079 = vld [vmem:[%s1 + $0x254] sm:$0xf]
        %v4080 = vld [vmem:[%s1 + $0x258] sm:$0xf]
        %v4081 = vld [vmem:[%s1 + $0x25c] sm:$0xf]
        %v4082 = vld [vmem:[%s1 + $0x260] sm:$0xf]
        %v4083 = vld [vmem:[%s1 + $0x264] sm:$0xf]
        %v4084 = vld [vmem:[%s1 + $0x268] sm:$0xf]
        %v4085 = vld [vmem:[%s1 + $0x26c] sm:$0xf]
        %v4086 = vld [vmem:[%s1 + $0x270] sm:$0xf]
        %v4087 = vld [vmem:[%s1 + $0x274] sm:$0xf]
        %v4088 = vld [vmem:[%s1 + $0x278] sm:$0xf]
        %v4089 = vld [vmem:[%s1 + $0x27c] sm:$0xf]
        %v4090 = vld [vmem:[%s1 + $0x280] sm:$0xf]
        %v4091 = vld [vmem:[%s1 + $0x284] sm:$0xf]
        %v4092 = vld [vmem:[%s1 + $0x288] sm:$0xf]
        %v4093 = vld [vmem:[%s1 + $0x28c] sm:$0xf]
        %v4094 = vld [vmem:[%s1 + $0x290] sm:$0xf]
        %v4095 = vld [vmem:[%s1 + $0x294] sm:$0xf]
        %v4096 = vld [vmem:[%s1 + $0x298] sm:$0xf]
        %v4097 = vld [vmem:[%s1 + $0x29c] sm:$0xf]
        %v4098 = vld [vmem:[%s1 + $0x2a0] sm:$0xf]
        %v4099 = vld [vmem:[%s1 + $0x2a4] sm:$0xf]
        %v4100 = vld [vmem:[%s1 + $0x2a8] sm:$0xf]
        %v4101 = vld [vmem:[%s1 + $0x2ac] sm:$0xf]
        %v4102 = vld [vmem:[%s1 + $0x2b0] sm:$0xf]
        %v4103 = vld [vmem:[%s1 + $0x2b4] sm:$0xf]
        %v4104 = vld [vmem:[%s1 + $0x2b8] sm:$0xf]
        %v4105 = vld [vmem:[%s1 + $0x2bc] sm:$0xf]
        %v4106 = vld [vmem:[%s2] sm:$0x1]
        %v4108 = vlaneseq
        %v4109 = vshrl.u32 %v4108, 7
        %v4110 = vsub.s32 0, %v4109
        %v4111 = vrot.slane %v4106, %v4110
        %v4115 = vcombine.high %v3928, %v3928
        %v4117 = vunpack.c.l.s4 1966171168
        %v4118 = vunpack.c.0.s8 %v4117
        %v4119 = vlaneseq
        %v4120 = vshrl.u32 %v4119, 7
        %v4121 = vsub.s32 %v4118, %v4120
        %v4122 = vrot.slane %v3928, %v4121
        %v4124 = vunpack.c.l.s4 1966171168
        %v4125 = vunpack.c.0.s8 %v4124
        %v4126 = vlaneseq
        %v4127 = vshrl.u32 %v4126, 7
        %v4128 = vsub.s32 %v4125, %v4127
        %v4129 = vrot.slane %v4115, %v4128
        %v4130 = vcombine.high %v4122, %v4122
        %v4131 = vcombine.high %v4129, %v4129
        %v4133 = vunpack.c.l.s4 1966171168
        %v4134 = vunpack.c.0.s8 %v4133
        %v4135 = vlaneseq
        %v4136 = vshrl.u32 %v4135, 7
        %v4137 = vsub.s32 %v4134, %v4136
        %v4138 = vrot.slane %v4122, %v4137
        %v4140 = vunpack.c.l.s4 1966171168
        %v4141 = vunpack.c.0.s8 %v4140
        %v4142 = vlaneseq
        %v4143 = vshrl.u32 %v4142, 7
        %v4144 = vsub.s32 %v4141, %v4143
        %v4145 = vrot.slane %v4129, %v4144
        %v4147 = vunpack.c.l.s4 1966171168
        %v4148 = vunpack.c.0.s8 %v4147
        %v4149 = vlaneseq
        %v4150 = vshrl.u32 %v4149, 7
        %v4151 = vsub.s32 %v4148, %v4150
        %v4152 = vrot.slane %v4130, %v4151
        %v4154 = vunpack.c.l.s4 1966171168
        %v4155 = vunpack.c.0.s8 %v4154
        %v4156 = vlaneseq
        %v4157 = vshrl.u32 %v4156, 7
        %v4158 = vsub.s32 %v4155, %v4157
        %v4159 = vrot.slane %v4131, %v4158
        %v4160 = vcombine.high %v4138, %v4138
        %v4161 = vcombine.high %v4145, %v4145
        %v4162 = vcombine.high %v4152, %v4152
        %v4163 = vcombine.high %v4159, %v4159
        %v4165 = vunpack.c.l.s4 1966171168
        %v4166 = vunpack.c.0.s8 %v4165
        %v4167 = vlaneseq
        %v4168 = vshrl.u32 %v4167, 7
        %v4169 = vsub.s32 %v4166, %v4168
        %v4170 = vrot.slane %v3929, %v4169
        %v4171 = vcombine.high %v4170, %v4170
        %v4173 = vunpack.c.l.s4 1966171168
        %v4174 = vunpack.c.0.s8 %v4173
        %v4175 = vlaneseq
        %v4176 = vshrl.u32 %v4175, 7
        %v4177 = vsub.s32 %v4174, %v4176
        %v4178 = vrot.slane %v4170, %v4177
        %v4180 = vunpack.c.l.s4 1966171168
        %v4181 = vunpack.c.0.s8 %v4180
        %v4182 = vlaneseq
        %v4183 = vshrl.u32 %v4182, 7
        %v4184 = vsub.s32 %v4181, %v4183
        %v4185 = vrot.slane %v4171, %v4184
        %v4186 = vcombine.high %v4178, %v4178
        %v4374 = vunpack.c.l.b16 %v3930
        %v4375 = vunpack.c.l.b16 %v3931
        %v4376 = vunpack.c.l.b16 %v3932
        %v4377 = vunpack.c.l.b16 %v3933
        %v4378 = vunpack.c.l.b16 %v3934
        %v4379 = vunpack.c.l.b16 %v3935
        %v4380 = vunpack.c.l.b16 %v3936
        %v4381 = vunpack.c.l.b16 %v3937
        %v4382 = vunpack.c.l.b16 %v3938
        %v4383 = vunpack.c.l.b16 %v3939
        %v4384 = vunpack.c.l.b16 %v3940
        %v4385 = vunpack.c.l.b16 %v3941
        %v4386 = vunpack.c.l.b16 %v3942
        %v4387 = vunpack.c.l.b16 %v3943
        %v4388 = vunpack.c.l.b16 %v3944
        %v4389 = vunpack.c.l.b16 %v3945
        %v4390 = vunpack.c.l.b16 %v3946
        %v4391 = vunpack.c.l.b16 %v3947
        %v4392 = vunpack.c.l.b16 %v3948
        %v4393 = vunpack.c.l.b16 %v3949
        %v4394 = vunpack.c.l.b16 %v3950
        %v4395 = vunpack.c.l.b16 %v3951
        %v4396 = vunpack.c.l.b16 %v3952
        %v4397 = vunpack.c.l.b16 %v3953
        %v4398 = vunpack.c.l.b16 %v3954
        %v4399 = vunpack.c.l.b16 %v3955
        %v4400 = vunpack.c.l.b16 %v3956
        %v4401 = vunpack.c.l.b16 %v3957
        %v4402 = vunpack.c.l.b16 %v3958
        %v4403 = vunpack.c.l.b16 %v3959
        %v4404 = vunpack.c.l.b16 %v3960
        %v4405 = vunpack.c.l.b16 %v3961
        %v4406 = vunpack.c.l.b16 %v3962
        %v4407 = vunpack.c.l.b16 %v3963
        %v4408 = vunpack.c.l.b16 %v3964
        %v4409 = vunpack.c.l.b16 %v3965
        %v4410 = vunpack.c.l.b16 %v3966
        %v4411 = vunpack.c.l.b16 %v3967
        %v4412 = vunpack.c.l.b16 %v3968
        %v4413 = vunpack.c.l.b16 %v3969
        %v4414 = vunpack.c.l.b16 %v3970
        %v4415 = vunpack.c.l.b16 %v3971
        %v4416 = vunpack.c.l.b16 %v3972
        %v4417 = vunpack.c.l.b16 %v3973
        %v4418 = vunpack.c.l.b16 %v3974
        %v4419 = vunpack.c.l.b16 %v3975
        %v4420 = vunpack.c.l.b16 %v3976
        %v4421 = vunpack.c.l.b16 %v3977
        %v4422 = vunpack.c.l.b16 %v3978
        %v4423 = vunpack.c.l.b16 %v3979
        %v4424 = vunpack.c.l.b16 %v3980
        %v4425 = vunpack.c.l.b16 %v3981
        %v4426 = vunpack.c.l.b16 %v3982
        %v4427 = vunpack.c.l.b16 %v3983
        %v4428 = vunpack.c.l.b16 %v3984
        %v4429 = vunpack.c.l.b16 %v3985
        %v4430 = vunpack.c.l.b16 %v3986
        %v4431 = vunpack.c.l.b16 %v3987
        %v4432 = vunpack.c.l.b16 %v3988
        %v4433 = vunpack.c.l.b16 %v3989
        %v4434 = vunpack.c.l.b16 %v3990
        %v4435 = vunpack.c.l.b16 %v3991
        %v4436 = vunpack.c.l.b16 %v3992
        %v4437 = vunpack.c.l.b16 %v3993
        %v4438 = vunpack.c.l.b16 %v3994
        %v4439 = vunpack.c.l.b16 %v3995
        %v4440 = vunpack.c.l.b16 %v3996
        %v4441 = vunpack.c.l.b16 %v3997
        %v4442 = vunpack.c.l.b16 %v3998
        %v4443 = vunpack.c.l.b16 %v3999
        %v4444 = vunpack.c.l.b16 %v4000
        %v4445 = vunpack.c.l.b16 %v4001
        %v4446 = vunpack.c.l.b16 %v4002
        %v4447 = vunpack.c.l.b16 %v4003
        %v4448 = vunpack.c.l.b16 %v4004
        %v4449 = vunpack.c.l.b16 %v4005
        %v4450 = vunpack.c.l.b16 %v4006
        %v4451 = vunpack.c.l.b16 %v4007
        %v4452 = vunpack.c.l.b16 %v4008
        %v4453 = vunpack.c.l.b16 %v4009
        %v4454 = vunpack.c.l.b16 %v4010
        %v4455 = vunpack.c.l.b16 %v4011
        %v4456 = vunpack.c.l.b16 %v4012
        %v4457 = vunpack.c.l.b16 %v4013
        %v4458 = vunpack.c.l.b16 %v4014
        %v4459 = vunpack.c.l.b16 %v4015
        %v4460 = vunpack.c.l.b16 %v4016
        %v4461 = vunpack.c.l.b16 %v4017
        %v4462 = vunpack.c.l.b16 %v4018
        %v4463 = vunpack.c.l.b16 %v4019
        %v4464 = vunpack.c.l.b16 %v4020
        %v4465 = vunpack.c.l.b16 %v4021
        %v4466 = vunpack.c.l.b16 %v4022
        %v4467 = vunpack.c.l.b16 %v4023
        %v4468 = vunpack.c.l.b16 %v4024
        %v4469 = vunpack.c.l.b16 %v4025
        %v4470 = vunpack.c.l.b16 %v4026
        %v4471 = vunpack.c.l.b16 %v4027
        %v4472 = vunpack.c.l.b16 %v4028
        %v4473 = vunpack.c.l.b16 %v4029
        %v4474 = vunpack.c.l.b16 %v4030
        %v4475 = vunpack.c.l.b16 %v4031
        %v4476 = vunpack.c.l.b16 %v4032
        %v4477 = vunpack.c.l.b16 %v4033
        %v4478 = vunpack.c.l.b16 %v4034
        %v4479 = vunpack.c.l.b16 %v4035
        %v4480 = vunpack.c.l.b16 %v4036
        %v4481 = vunpack.c.l.b16 %v4037
        %v4482 = vunpack.c.l.b16 %v4038
        %v4483 = vunpack.c.l.b16 %v4039
        %v4484 = vunpack.c.l.b16 %v4040
        %v4485 = vunpack.c.l.b16 %v4041
        %v4486 = vunpack.c.l.b16 %v4042
        %v4487 = vunpack.c.l.b16 %v4043
        %v4488 = vunpack.c.l.b16 %v4044
        %v4489 = vunpack.c.l.b16 %v4045
        %v4490 = vunpack.c.l.b16 %v4046
        %v4491 = vunpack.c.l.b16 %v4047
        %v4492 = vunpack.c.l.b16 %v4048
        %v4493 = vunpack.c.l.b16 %v4049
        %v4494 = vunpack.c.l.b16 %v4050
        %v4495 = vunpack.c.l.b16 %v4051
        %v4496 = vunpack.c.l.b16 %v4052
        %v4497 = vunpack.c.l.b16 %v4053
        %v4498 = vunpack.c.l.b16 %v4054
        %v4499 = vunpack.c.l.b16 %v4055
        %v4500 = vunpack.c.l.b16 %v4056
        %v4501 = vunpack.c.l.b16 %v4057
        %v4502 = vunpack.c.l.b16 %v4058
        %v4503 = vunpack.c.l.b16 %v4059
        %v4504 = vunpack.c.l.b16 %v4060
        %v4505 = vunpack.c.l.b16 %v4061
        %v4506 = vunpack.c.l.b16 %v4062
        %v4507 = vunpack.c.l.b16 %v4063
        %v4508 = vunpack.c.l.b16 %v4064
        %v4509 = vunpack.c.l.b16 %v4065
        %v4510 = vunpack.c.l.b16 %v4066
        %v4511 = vunpack.c.l.b16 %v4067
        %v4512 = vunpack.c.l.b16 %v4068
        %v4513 = vunpack.c.l.b16 %v4069
        %v4514 = vunpack.c.l.b16 %v4070
        %v4515 = vunpack.c.l.b16 %v4071
        %v4516 = vunpack.c.l.b16 %v4072
        %v4517 = vunpack.c.l.b16 %v4073
        %v4518 = vunpack.c.l.b16 %v4074
        %v4519 = vunpack.c.l.b16 %v4075
        %v4520 = vunpack.c.l.b16 %v4076
        %v4521 = vunpack.c.l.b16 %v4077
        %v4522 = vunpack.c.l.b16 %v4078
        %v4523 = vunpack.c.l.b16 %v4079
        %v4524 = vunpack.c.l.b16 %v4080
        %v4525 = vunpack.c.l.b16 %v4081
        %v4526 = vunpack.c.l.b16 %v4082
        %v4527 = vunpack.c.l.b16 %v4083
        %v4528 = vunpack.c.l.b16 %v4084
        %v4529 = vunpack.c.l.b16 %v4085
        %v4530 = vunpack.c.l.b16 %v4086
        %v4531 = vunpack.c.l.b16 %v4087
        %v4532 = vunpack.c.l.b16 %v4088
        %v4533 = vunpack.c.l.b16 %v4089
        %v4534 = vunpack.c.l.b16 %v4090
        %v4535 = vunpack.c.l.b16 %v4091
        %v4536 = vunpack.c.l.b16 %v4092
        %v4537 = vunpack.c.l.b16 %v4093
        %v4538 = vunpack.c.l.b16 %v4094
        %v4539 = vunpack.c.l.b16 %v4095
        %v4540 = vunpack.c.l.b16 %v4096
        %v4541 = vunpack.c.l.b16 %v4097
        %v4542 = vunpack.c.l.b16 %v4098
        %v4543 = vunpack.c.l.b16 %v4099
        %v4544 = vunpack.c.l.b16 %v4100
        %v4545 = vunpack.c.l.b16 %v4101
        %v4546 = vunpack.c.l.b16 %v4102
        %v4547 = vunpack.c.l.b16 %v4103
        %v4548 = vunpack.c.l.b16 %v4104
        %v4549 = vunpack.c.l.b16 %v4105
        %v4550 = vpack.c.b16 %v4375, %v4374
        %v4551 = vpack.c.b16 %v4377, %v4376
        %v4552 = vpack.c.b16 %v4379, %v4378
        %v4553 = vpack.c.b16 %v4381, %v4380
        %v4554 = vpack.c.b16 %v4383, %v4382
        %v4555 = vpack.c.b16 %v4385, %v4384
        %v4556 = vpack.c.b16 %v4387, %v4386
        %v4557 = vpack.c.b16 %v4389, %v4388
        %v4558 = vpack.c.b16 %v4391, %v4390
        %v4559 = vpack.c.b16 %v4393, %v4392
        %v4560 = vpack.c.b16 %v4395, %v4394
        %v4561 = vpack.c.b16 %v4397, %v4396
        %v4562 = vpack.c.b16 %v4399, %v4398
        %v4563 = vpack.c.b16 %v4401, %v4400
        %v4564 = vpack.c.b16 %v4403, %v4402
        %v4565 = vpack.c.b16 %v4405, %v4404
        %v4566 = vpack.c.b16 %v4407, %v4406
        %v4567 = vpack.c.b16 %v4409, %v4408
        %v4568 = vpack.c.b16 %v4411, %v4410
        %v4569 = vpack.c.b16 %v4413, %v4412
        %v4570 = vpack.c.b16 %v4415, %v4414
        %v4571 = vpack.c.b16 %v4417, %v4416
        %v4572 = vpack.c.b16 %v4419, %v4418
        %v4573 = vpack.c.b16 %v4421, %v4420
        %v4574 = vpack.c.b16 %v4423, %v4422
        %v4575 = vpack.c.b16 %v4425, %v4424
        %v4576 = vpack.c.b16 %v4427, %v4426
        %v4577 = vpack.c.b16 %v4429, %v4428
        %v4578 = vpack.c.b16 %v4431, %v4430
        %v4579 = vpack.c.b16 %v4433, %v4432
        %v4580 = vpack.c.b16 %v4435, %v4434
        %v4581 = vpack.c.b16 %v4437, %v4436
        %v4582 = vpack.c.b16 %v4439, %v4438
        %v4583 = vpack.c.b16 %v4441, %v4440
        %v4584 = vpack.c.b16 %v4443, %v4442
        %v4585 = vpack.c.b16 %v4445, %v4444
        %v4586 = vpack.c.b16 %v4447, %v4446
        %v4587 = vpack.c.b16 %v4449, %v4448
        %v4588 = vpack.c.b16 %v4451, %v4450
        %v4589 = vpack.c.b16 %v4453, %v4452
        %v4590 = vpack.c.b16 %v4455, %v4454
        %v4591 = vpack.c.b16 %v4457, %v4456
        %v4592 = vpack.c.b16 %v4459, %v4458
        %v4593 = vpack.c.b16 %v4461, %v4460
        %v4594 = vpack.c.b16 %v4463, %v4462
        %v4595 = vpack.c.b16 %v4465, %v4464
        %v4596 = vpack.c.b16 %v4467, %v4466
        %v4597 = vpack.c.b16 %v4469, %v4468
        %v4598 = vpack.c.b16 %v4471, %v4470
        %v4599 = vpack.c.b16 %v4473, %v4472
        %v4600 = vpack.c.b16 %v4475, %v4474
        %v4601 = vpack.c.b16 %v4477, %v4476
        %v4602 = vpack.c.b16 %v4479, %v4478
        %v4603 = vpack.c.b16 %v4481, %v4480
        %v4604 = vpack.c.b16 %v4483, %v4482
        %v4605 = vpack.c.b16 %v4485, %v4484
        %v4606 = vpack.c.b16 %v4487, %v4486
        %v4607 = vpack.c.b16 %v4489, %v4488
        %v4608 = vpack.c.b16 %v4491, %v4490
        %v4609 = vpack.c.b16 %v4493, %v4492
        %v4610 = vpack.c.b16 %v4495, %v4494
        %v4611 = vpack.c.b16 %v4497, %v4496
        %v4612 = vpack.c.b16 %v4499, %v4498
        %v4613 = vpack.c.b16 %v4501, %v4500
        %v4614 = vpack.c.b16 %v4503, %v4502
        %v4615 = vpack.c.b16 %v4505, %v4504
        %v4616 = vpack.c.b16 %v4507, %v4506
        %v4617 = vpack.c.b16 %v4509, %v4508
        %v4618 = vpack.c.b16 %v4511, %v4510
        %v4619 = vpack.c.b16 %v4513, %v4512
        %v4620 = vpack.c.b16 %v4515, %v4514
        %v4621 = vpack.c.b16 %v4517, %v4516
        %v4622 = vpack.c.b16 %v4519, %v4518
        %v4623 = vpack.c.b16 %v4521, %v4520
        %v4624 = vpack.c.b16 %v4523, %v4522
        %v4625 = vpack.c.b16 %v4525, %v4524
        %v4626 = vpack.c.b16 %v4527, %v4526
        %v4627 = vpack.c.b16 %v4529, %v4528
        %v4628 = vpack.c.b16 %v4531, %v4530
        %v4629 = vpack.c.b16 %v4533, %v4532
        %v4630 = vpack.c.b16 %v4535, %v4534
        %v4631 = vpack.c.b16 %v4537, %v4536
        %v4632 = vpack.c.b16 %v4539, %v4538
        %v4633 = vpack.c.b16 %v4541, %v4540
        %v4634 = vpack.c.b16 %v4543, %v4542
        %v4635 = vpack.c.b16 %v4545, %v4544
        %v4636 = vpack.c.b16 %v4547, %v4546
        %v4637 = vpack.c.b16 %v4549, %v4548
        %4726 = vmatprep.subr.bf16.mxu0 0
        %4727 = vmatpush1.bf16.msra.mxu0 %v4550
        %4728 = vmatprep.subr.bf16.mxu0 0
        %4729 = vmatpush1.bf16.msra.mxu0 %v4551
        %4730 = vmatprep.subr.bf16.mxu0 0
        %4731 = vmatpush1.bf16.msra.mxu0 %v4552
        %4732 = vmatprep.subr.bf16.mxu0 0
        %4733 = vmatpush1.bf16.msra.mxu0 %v4553
        %4734 = vmatprep.subr.bf16.mxu0 0
        %4735 = vmatpush1.bf16.msra.mxu0 %v4554
        %4736 = vmatprep.subr.bf16.mxu0 0
        %4737 = vmatpush1.bf16.msra.mxu0 %v4555
        %4738 = vmatprep.subr.bf16.mxu0 0
        %4739 = vmatpush1.bf16.msra.mxu0 %v4556
        %4740 = vmatprep.subr.bf16.mxu0 0
        %4741 = vmatpush1.bf16.msra.mxu0 %v4557
        %4742 = vmatprep.subr.bf16.mxu0 0
        %4743 = vmatpush1.bf16.msra.mxu0 %v4558
        %4744 = vmatprep.subr.bf16.mxu0 0
        %4745 = vmatpush1.bf16.msra.mxu0 %v4559
        %4746 = vmatprep.subr.bf16.mxu0 0
        %4747 = vmatpush1.bf16.msra.mxu0 %v4560
        %4748 = vmatprep.subr.bf16.mxu0 0
        %4749 = vmatpush1.bf16.msra.mxu0 %v4561
        %4750 = vmatprep.subr.bf16.mxu0 0
        %4751 = vmatpush1.bf16.msra.mxu0 %v4562
        %4752 = vmatprep.subr.bf16.mxu0 0
        %4753 = vmatpush1.bf16.msra.mxu0 %v4563
        %4754 = vmatprep.subr.bf16.mxu0 0
        %4755 = vmatpush1.bf16.msra.mxu0 %v4564
        %4756 = vmatprep.subr.bf16.mxu0 0
        %4757 = vmatpush1.bf16.msra.mxu0 %v4565
        %4758 = vmatprep.mubr.bf16.mxu0 %v4152
        %4759 = vmatmul.mubr.bf16.gmra.mrb[0].mxu0 %v4138
        %v4760 = vpop.f32.mrb[0].mxu0
        %v4761 = vadd.f32 %v4111, %v4760
        %v4762 = vpop.f32.mrb[0].mxu0
        %v4763 = vpop.f32.mrb[0].mxu0
        %v4764 = vpop.f32.mrb[0].mxu0
        %4765 = vdwg.mxu0
        %4766 = vmatprep.subr.bf16.mxu0 0
        %4767 = vmatpush1.bf16.msra.mxu0 %v4566
        %4768 = vmatprep.subr.bf16.mxu0 0
        %4769 = vmatpush1.bf16.msra.mxu0 %v4567
        %4770 = vmatprep.subr.bf16.mxu0 0
        %4771 = vmatpush1.bf16.msra.mxu0 %v4568
        %4772 = vmatprep.subr.bf16.mxu0 0
        %4773 = vmatpush1.bf16.msra.mxu0 %v4569
        %4774 = vmatprep.subr.bf16.mxu0 0
        %4775 = vmatpush1.bf16.msra.mxu0 %v4570
        %4776 = vmatprep.subr.bf16.mxu0 0
        %4777 = vmatpush1.bf16.msra.mxu0 %v4571
        %4778 = vmatprep.subr.bf16.mxu0 0
        %4779 = vmatpush1.bf16.msra.mxu0 %v4572
        %4780 = vmatprep.subr.bf16.mxu0 0
        %4781 = vmatpush1.bf16.msra.mxu0 %v4573
        %4782 = vmatprep.subr.bf16.mxu0 0
        %4783 = vmatpush1.bf16.msra.mxu0 %v4574
        %4784 = vmatprep.subr.bf16.mxu0 0
        %4785 = vmatpush1.bf16.msra.mxu0 %v4575
        %4786 = vmatprep.subr.bf16.mxu0 0
        %4787 = vmatpush1.bf16.msra.mxu0 %v4576
        %4788 = vmatprep.subr.bf16.mxu0 0
        %4789 = vmatpush1.bf16.msra.mxu0 %v4577
        %4790 = vmatprep.subr.bf16.mxu0 0
        %4791 = vmatpush1.bf16.msra.mxu0 %v4578
        %4792 = vmatprep.subr.bf16.mxu0 0
        %4793 = vmatpush1.bf16.msra.mxu0 %v4579
        %4794 = vmatprep.subr.bf16.mxu0 0
        %4795 = vmatpush1.bf16.msra.mxu0 %v4580
        %4796 = vmatprep.subr.bf16.mxu0 0
        %4797 = vmatpush1.bf16.msra.mxu0 %v4581
        %4798 = vmatprep.mubr.bf16.mxu0 %v4162
        %4799 = vmatmul.mubr.bf16.gmra.mrb[0].mxu0 %v4160
        %v4800 = vpop.f32.mrb[0].mxu0
        %v4801 = vadd.f32 %v4761, %v4800
        %v4802 = vpop.f32.mrb[0].mxu0
        %v4803 = vpop.f32.mrb[0].mxu0
        %v4804 = vpop.f32.mrb[0].mxu0
        %4805 = vdwg.mxu0
        %4806 = vmatprep.subr.bf16.mxu0 0
        %4807 = vmatpush1.bf16.msra.mxu0 %v4582
        %4808 = vmatprep.subr.bf16.mxu0 0
        %4809 = vmatpush1.bf16.msra.mxu0 %v4583
        %4810 = vmatprep.subr.bf16.mxu0 0
        %4811 = vmatpush1.bf16.msra.mxu0 %v4584
        %4812 = vmatprep.subr.bf16.mxu0 0
        %4813 = vmatpush1.bf16.msra.mxu0 %v4585
        %4814 = vmatprep.subr.bf16.mxu0 0
        %4815 = vmatpush1.bf16.msra.mxu0 %v4586
        %4816 = vmatprep.subr.bf16.mxu0 0
        %4817 = vmatpush1.bf16.msra.mxu0 %v4587
        %4818 = vmatprep.subr.bf16.mxu0 0
        %4819 = vmatpush1.bf16.msra.mxu0 %v4588
        %4820 = vmatprep.subr.bf16.mxu0 0
        %4821 = vmatpush1.bf16.msra.mxu0 %v4589
        %4822 = vmatprep.subr.bf16.mxu0 0
        %4823 = vmatpush1.bf16.msra.mxu0 %v4590
        %4824 = vmatprep.subr.bf16.mxu0 0
        %4825 = vmatpush1.bf16.msra.mxu0 %v4591
        %4826 = vmatprep.subr.bf16.mxu0 0
        %4827 = vmatpush1.bf16.msra.mxu0 %v4592
        %4828 = vmatprep.subr.bf16.mxu0 0
        %4829 = vmatpush1.bf16.msra.mxu0 %v4593
        %4830 = vmatprep.subr.bf16.mxu0 0
        %4831 = vmatpush1.bf16.msra.mxu0 %v4594
        %4832 = vmatprep.subr.bf16.mxu0 0
        %4833 = vmatpush1.bf16.msra.mxu0 %v4595
        %4834 = vmatprep.subr.bf16.mxu0 0
        %4835 = vmatpush1.bf16.msra.mxu0 %v4596
        %4836 = vmatprep.subr.bf16.mxu0 0
        %4837 = vmatpush1.bf16.msra.mxu0 %v4597
        %4838 = vmatprep.mubr.bf16.mxu0 %v4159
        %4839 = vmatmul.mubr.bf16.gmra.mrb[0].mxu0 %v4145
        %v4840 = vpop.f32.mrb[0].mxu0
        %v4841 = vadd.f32 %v4801, %v4840
        %v4842 = vpop.f32.mrb[0].mxu0
        %v4843 = vpop.f32.mrb[0].mxu0
        %v4844 = vpop.f32.mrb[0].mxu0
        %4845 = vdwg.mxu0
        %4846 = vmatprep.subr.bf16.mxu0 0
        %4847 = vmatpush1.bf16.msra.mxu0 %v4598
        %4848 = vmatprep.subr.bf16.mxu0 0
        %4849 = vmatpush1.bf16.msra.mxu0 %v4599
        %4850 = vmatprep.subr.bf16.mxu0 0
        %4851 = vmatpush1.bf16.msra.mxu0 %v4600
        %4852 = vmatprep.subr.bf16.mxu0 0
        %4853 = vmatpush1.bf16.msra.mxu0 %v4601
        %4854 = vmatprep.subr.bf16.mxu0 0
        %4855 = vmatpush1.bf16.msra.mxu0 %v4602
        %4856 = vmatprep.subr.bf16.mxu0 0
        %4857 = vmatpush1.bf16.msra.mxu0 %v4603
        %4858 = vmatprep.subr.bf16.mxu0 0
        %4859 = vmatpush1.bf16.msra.mxu0 %v4604
        %4860 = vmatprep.subr.bf16.mxu0 0
        %4861 = vmatpush1.bf16.msra.mxu0 %v4605
        %4862 = vmatprep.subr.bf16.mxu0 0
        %4863 = vmatpush1.bf16.msra.mxu0 %v4606
        %4864 = vmatprep.subr.bf16.mxu0 0
        %4865 = vmatpush1.bf16.msra.mxu0 %v4607
        %4866 = vmatprep.subr.bf16.mxu0 0
        %4867 = vmatpush1.bf16.msra.mxu0 %v4608
        %4868 = vmatprep.subr.bf16.mxu0 0
        %4869 = vmatpush1.bf16.msra.mxu0 %v4609
        %4870 = vmatprep.subr.bf16.mxu0 0
        %4871 = vmatpush1.bf16.msra.mxu0 %v4610
        %4872 = vmatprep.subr.bf16.mxu0 0
        %4873 = vmatpush1.bf16.msra.mxu0 %v4611
        %4874 = vmatprep.subr.bf16.mxu0 0
        %4875 = vmatpush1.bf16.msra.mxu0 %v4612
        %4876 = vmatprep.subr.bf16.mxu0 0
        %4877 = vmatpush1.bf16.msra.mxu0 %v4613
        %4878 = vmatprep.mubr.bf16.mxu0 %v4163
        %4879 = vmatmul.mubr.bf16.gmra.mrb[0].mxu0 %v4161
        %v4880 = vpop.f32.mrb[0].mxu0
        %v4881 = vadd.f32 %v4841, %v4880
        %v4882 = vpop.f32.mrb[0].mxu0
        %v4883 = vpop.f32.mrb[0].mxu0
        %v4884 = vpop.f32.mrb[0].mxu0
        %4885 = vdwg.mxu0
        %4886 = vmatprep.subr.bf16.mxu0 0
        %4887 = vmatpush1.bf16.msra.mxu0 %v4614
        %4888 = vmatprep.subr.bf16.mxu0 0
        %4889 = vmatpush1.bf16.msra.mxu0 %v4615
        %4890 = vmatprep.subr.bf16.mxu0 0
        %4891 = vmatpush1.bf16.msra.mxu0 %v4616
        %4892 = vmatprep.subr.bf16.mxu0 0
        %4893 = vmatpush1.bf16.msra.mxu0 %v4617
        %4894 = vmatprep.subr.bf16.mxu0 0
        %4895 = vmatpush1.bf16.msra.mxu0 %v4618
        %4896 = vmatprep.subr.bf16.mxu0 0
        %4897 = vmatpush1.bf16.msra.mxu0 %v4619
        %4898 = vmatprep.subr.bf16.mxu0 0
        %4899 = vmatpush1.bf16.msra.mxu0 %v4620
        %4900 = vmatprep.subr.bf16.mxu0 0
        %4901 = vmatpush1.bf16.msra.mxu0 %v4621
        %4902 = vmatprep.subr.bf16.mxu0 0
        %4903 = vmatpush1.bf16.msra.mxu0 %v4622
        %4904 = vmatprep.subr.bf16.mxu0 0
        %4905 = vmatpush1.bf16.msra.mxu0 %v4623
        %4906 = vmatprep.subr.bf16.mxu0 0
        %4907 = vmatpush1.bf16.msra.mxu0 %v4624
        %4908 = vmatprep.subr.bf16.mxu0 0
        %4909 = vmatpush1.bf16.msra.mxu0 %v4625
        %4910 = vmatprep.subr.bf16.mxu0 0
        %4911 = vmatpush1.bf16.msra.mxu0 %v4626
        %4912 = vmatprep.subr.bf16.mxu0 0
        %4913 = vmatpush1.bf16.msra.mxu0 %v4627
        %4914 = vmatprep.subr.bf16.mxu0 0
        %4915 = vmatpush1.bf16.msra.mxu0 %v4628
        %4916 = vmatprep.subr.bf16.mxu0 0
        %4917 = vmatpush1.bf16.msra.mxu0 %v4629
        %4918 = vmatprep.mubr.bf16.mxu0 %v4185
        %4919 = vmatmul.mubr.bf16.gmra.mrb[0].mxu0 %v4178
        %v4920 = vpop.f32.mrb[0].mxu0
        %v4921 = vadd.f32 %v4881, %v4920
        %v4922 = vpop.f32.mrb[0].mxu0
        %v4923 = vpop.f32.mrb[0].mxu0
        %v4924 = vpop.f32.mrb[0].mxu0
        %4925 = vdwg.mxu0
        %4926 = vmatprep.subr.bf16.mxu0 0
        %4927 = vmatpush1.bf16.msra.mxu0 %v4630
        %4928 = vmatprep.subr.bf16.mxu0 0
        %4929 = vmatpush1.bf16.msra.mxu0 %v4631
        %4930 = vmatprep.subr.bf16.mxu0 0
        %4931 = vmatpush1.bf16.msra.mxu0 %v4632
        %4932 = vmatprep.subr.bf16.mxu0 0
        %4933 = vmatpush1.bf16.msra.mxu0 %v4633
        %4934 = vmatprep.subr.bf16.mxu0 0
        %4935 = vmatpush1.bf16.msra.mxu0 %v4634
        %4936 = vmatprep.subr.bf16.mxu0 0
        %4937 = vmatpush1.bf16.msra.mxu0 %v4635
        %4938 = vmatprep.subr.bf16.mxu0 0
        %4939 = vmatpush1.bf16.msra.mxu0 %v4636
        %4940 = vmatprep.subr.bf16.mxu0 0
        %4941 = vmatpush1.bf16.msra.mxu0 %v4637
        %4942 = vmatprep.subr.bf16.mxu0 0
        %4943 = vmatpush1.bf16.msra.mxu0 0
        %4944 = vmatprep.subr.bf16.mxu0 0
        %4945 = vmatpush1.bf16.msra.mxu0 0
        %4946 = vmatprep.subr.bf16.mxu0 0
        %4947 = vmatpush1.bf16.msra.mxu0 0
        %4948 = vmatprep.subr.bf16.mxu0 0
        %4949 = vmatpush1.bf16.msra.mxu0 0
        %4950 = vmatprep.subr.bf16.mxu0 0
        %4951 = vmatpush1.bf16.msra.mxu0 0
        %4952 = vmatprep.subr.bf16.mxu0 0
        %4953 = vmatpush1.bf16.msra.mxu0 0
        %4954 = vmatprep.subr.bf16.mxu0 0
        %4955 = vmatpush1.bf16.msra.mxu0 0
        %4956 = vmatprep.subr.bf16.mxu0 0
        %4957 = vmatpush1.bf16.msra.mxu0 0
        %4958 = vmatprep.mubr.bf16.mxu0 0
        %4959 = vmatmul.mubr.bf16.gmra.mrb[0].mxu0 %v4186
        %v4960 = vpop.f32.mrb[0].mxu0
        %v4961 = vadd.f32 %v4921, %v4960
        %v4962 = vpop.f32.mrb[0].mxu0
        %v4963 = vpop.f32.mrb[0].mxu0
        %v4964 = vpop.f32.mrb[0].mxu0
        %4965 = vdwg.mxu0
        %v4966 = vtanh.pop %v4961
        %v4967 = vpack.c.bf16 %v4966, %v4966
        %v4968 = vld [vmem:[%s3] sm:$0xf]
        %v4969 = vld [vmem:[%s3 + $0x4] sm:$0xf]
        %v4970 = vld [vmem:[%s3 + $0x8] sm:$0xf]
        %v4971 = vld [vmem:[%s3 + $0xc] sm:$0xf]
        %v4972 = vld [vmem:[%s3 + $0x10] sm:$0xf]
        %v4973 = vld [vmem:[%s3 + $0x14] sm:$0xf]
        %v4974 = vld [vmem:[%s3 + $0x18] sm:$0xf]
        %v4975 = vld [vmem:[%s4] sm:$0x1]
        %v4977 = vlaneseq
        %v4978 = vshrl.u32 %v4977, 7
        %v4979 = vsub.s32 0, %v4978
        %v4980 = vrot.slane %v4975, %v4979
        %v4989 = vunpack.c.l.b16 %v4968
        %v4990 = vunpack.c.l.b16 %v4969
        %v4991 = vunpack.c.l.b16 %v4970
        %v4992 = vunpack.c.l.b16 %v4971
        %v4993 = vunpack.c.l.b16 %v4972
        %v4994 = vunpack.c.l.b16 %v4973
        %v4995 = vunpack.c.l.b16 %v4974
        %v4996 = vpack.c.b16 %v4990, %v4989
        %v4997 = vpack.c.b16 %v4992, %v4991
        %v4998 = vpack.c.b16 %v4994, %v4993
        %v4999 = vpack.c.b16 %v4995, %v4995
        %v5004 = vsel %vm1378, %v4967, 0
        %v5007 = vand.u32 %v4999, %v1385
        %5009 = vmatprep.subr.bf16.mxu0 0
        %5010 = vmatpush1.bf16.msra.mxu0 %v4996
        %5011 = vmatprep.subr.bf16.mxu0 0
        %5012 = vmatpush1.bf16.msra.mxu0 %v4997
        %5013 = vmatprep.subr.bf16.mxu0 0
        %5014 = vmatpush1.bf16.msra.mxu0 %v4998
        %5015 = vmatprep.subr.bf16.mxu0 0
        %5016 = vmatpush1.bf16.msra.mxu0 %v5007
        %5017 = vmatprep.subr.bf16.mxu0 0
        %5018 = vmatpush1.bf16.msra.mxu0 0
        %5019 = vmatprep.subr.bf16.mxu0 0
        %5020 = vmatpush1.bf16.msra.mxu0 0
        %5021 = vmatprep.subr.bf16.mxu0 0
        %5022 = vmatpush1.bf16.msra.mxu0 0
        %5023 = vmatprep.subr.bf16.mxu0 0
        %5024 = vmatpush1.bf16.msra.mxu0 0
        %5025 = vmatprep.subr.bf16.mxu0 0
        %5026 = vmatpush1.bf16.msra.mxu0 0
        %5027 = vmatprep.subr.bf16.mxu0 0
        %5028 = vmatpush1.bf16.msra.mxu0 0
        %5029 = vmatprep.subr.bf16.mxu0 0
        %5030 = vmatpush1.bf16.msra.mxu0 0
        %5031 = vmatprep.subr.bf16.mxu0 0
        %5032 = vmatpush1.bf16.msra.mxu0 0
        %5033 = vmatprep.subr.bf16.mxu0 0
        %5034 = vmatpush1.bf16.msra.mxu0 0
        %5035 = vmatprep.subr.bf16.mxu0 0
        %5036 = vmatpush1.bf16.msra.mxu0 0
        %5037 = vmatprep.subr.bf16.mxu0 0
        %5038 = vmatpush1.bf16.msra.mxu0 0
        %5039 = vmatprep.subr.bf16.mxu0 0
        %5040 = vmatpush1.bf16.msra.mxu0 0
        %5041 = vmatprep.mubr.bf16.mxu0 0
        %5042 = vmatmul.mubr.bf16.gmra.mrb[0].mxu0 %v5004
        %v5043 = vpop.f32.mrb[0].mxu0
        %v5044 = vadd.f32 %v4980, %v5043
        %v5045 = vpop.f32.mrb[0].mxu0
        %v5046 = vpop.f32.mrb[0].mxu0
        %v5047 = vpop.f32.mrb[0].mxu0
        %5048 = vdwg.mxu0
        %v5049 = vtanh.pop %v5044
        %v5050 = vld [vmem:[#allocation2] sm:$0x3]
        %v5051 = vpack.c.bf16 %v5049, %v5049
        %s5052 = scalar_lea.vmem %s294, 96
        %v5053 = vld [vmem:[%s5052] sm:$0xf]
        %v5054 = vld [vmem:[%s5052 + $0x4] sm:$0xf]
        %v5055 = vld [vmem:[%s5052 + $0x8] sm:$0xf]
        %v5056 = vld [vmem:[%s5052 + $0xc] sm:$0xf]
        %v5057 = vld [vmem:[%s5052 + $0x10] sm:$0xf]
        %v5058 = vld [vmem:[%s5052 + $0x14] sm:$0xf]
        %v5059 = vld [vmem:[%s5052 + $0x18] sm:$0xf]
        %v5060 = vld [vmem:[%s5052 + $0x1c] sm:$0x7]
        %v5069 = vunpack.c.l.b16 %v5053
        %v5070 = vunpack.c.l.b16 %v5054
        %v5071 = vunpack.c.l.b16 %v5055
        %v5072 = vunpack.c.l.b16 %v5056
        %v5073 = vunpack.c.l.b16 %v5057
        %v5074 = vunpack.c.l.b16 %v5058
        %v5075 = vunpack.c.l.b16 %v5059
        %v5076 = vunpack.c.l.b16 %v5060
        %v5077 = vpack.c.b16 %v5070, %v5069
        %v5078 = vpack.c.b16 %v5072, %v5071
        %v5079 = vpack.c.b16 %v5074, %v5073
        %v5080 = vpack.c.b16 %v5076, %v5075
        %v5085 = vsel %vm1463, %v5051, 0
        %v5088 = vand.u32 %v5080, %v1470
        %5090 = vmatprep.subr.bf16.mxu0 0
        %5091 = vmatpush1.bf16.msra.mxu0 %v5077
        %5092 = vmatprep.subr.bf16.mxu0 0
        %5093 = vmatpush1.bf16.msra.mxu0 %v5078
        %5094 = vmatprep.subr.bf16.mxu0 0
        %5095 = vmatpush1.bf16.msra.mxu0 %v5079
        %5096 = vmatprep.subr.bf16.mxu0 0
        %5097 = vmatpush1.bf16.msra.mxu0 %v5088
        %5098 = vmatprep.subr.bf16.mxu0 0
        %5099 = vmatpush1.bf16.msra.mxu0 0
        %5100 = vmatprep.subr.bf16.mxu0 0
        %5101 = vmatpush1.bf16.msra.mxu0 0
        %5102 = vmatprep.subr.bf16.mxu0 0
        %5103 = vmatpush1.bf16.msra.mxu0 0
        %5104 = vmatprep.subr.bf16.mxu0 0
        %5105 = vmatpush1.bf16.msra.mxu0 0
        %5106 = vmatprep.subr.bf16.mxu0 0
        %5107 = vmatpush1.bf16.msra.mxu0 0
        %5108 = vmatprep.subr.bf16.mxu0 0
        %5109 = vmatpush1.bf16.msra.mxu0 0
        %5110 = vmatprep.subr.bf16.mxu0 0
        %5111 = vmatpush1.bf16.msra.mxu0 0
        %5112 = vmatprep.subr.bf16.mxu0 0
        %5113 = vmatpush1.bf16.msra.mxu0 0
        %5114 = vmatprep.subr.bf16.mxu0 0
        %5115 = vmatpush1.bf16.msra.mxu0 0
        %5116 = vmatprep.subr.bf16.mxu0 0
        %5117 = vmatpush1.bf16.msra.mxu0 0
        %5118 = vmatprep.subr.bf16.mxu0 0
        %5119 = vmatpush1.bf16.msra.mxu0 0
        %5120 = vmatprep.subr.bf16.mxu0 0
        %5121 = vmatpush1.bf16.msra.mxu0 0
        %5122 = vmatprep.mubr.bf16.mxu0 0
        %5123 = vmatmul.mubr.bf16.gmra.mrb[0].mxu0 %v5085
        %v5124 = vpop.f32.mrb[0].mxu0
        %v5125 = vadd.f32 0.0, %v5124
        %v5126 = vpop.f32.mrb[0].mxu0
        %v5127 = vpop.f32.mrb[0].mxu0
        %v5128 = vpop.f32.mrb[0].mxu0
        %5129 = vdwg.mxu0
        %v5130 = vadd.f32 %v5050, %v5125
        %5131 = vst.msk [vmem:[#allocation2] sm:$0x3] %vm1515, %v5130
        %p5132 = scmp.eq.s32.totalorder %s23, 10
        // Predicated region
        $region49: #{forward.3} parent=43 // pred_check
          %p5133 = pneg %p5132
        $region50: #{forward.3} parent=43 // pred_check_branch
          %5135 = sbr.rel (%p5133) target = $region52
        $region51: #{forward.3} parent=43 // pred_region
          %v5136 = vld [vmem:[#allocation2] sm:$0x3]
          %v5137 = vsel %vm1515, %v5136, -inf
          %5138 = vmax.xlane.f32.xlu0 %v5137
          %v5139 = vpop.xlane.xlu0 %5138
          %v5140 = vsub.f32 %v5136, %v5139
          %v5141 = vmul.f32 %v5140, 1.442695
          %v5142 = vpow.pop %v5141
          %v5143 = vsel %vm1515, %v5142, 0.0
          %5144 = vadd.xlane.f32.xlu0 %v5143
          %v5145 = vpop.xlane.xlu0 %5144
          %v5146 = vlog2.pop %v5145
          %v5147 = vmul.f32 %v5146, 0.6931472
          %v5148 = vsub.f32 %v5140, %v5147
          %5149 = vst.msk [vmem:[#allocation3] sm:$0x3] %vm1515, %v5148
        $region52: #{forward.3} parent=43 // pred_fallthru
          _
        // Predicated region
        $region53: #{forward.3} parent=43 // pred_check
          %p5150 = pneg %p186
        $region54: #{forward.3} parent=43 // pred_check_branch
          %5152 = sbr.rel (%p5150) target = $region56
        $region55: #{forward.3} parent=43 // pred_region
          %s5154 = ssub.s32 32, 32
          %5155 = vsyncadd [#allocation4], %s5154
          %s5156 = smul.addr %s22, 32
          %s5157 = scalar_lea.hbm %s6, %s5156
          %s5159 = sshll.u32 [#allocation3], 4
          %s5160 = int_to_ptr.vmem [resolvable:$true] %s5159
          %5162 = dma.vmem_to_hbm [thread:$0]  %s5160, 32, %s5157, [#allocation4]
        $region56: #{forward.3} parent=43 // pred_fallthru
          _
        // Predicated region
        $region57: #{forward.3} parent=43 // pred_check
          %p5163 = pneg %p186
        $region58: #{forward.3} parent=43 // pred_check_branch
          %5165 = sbr.rel (%p5163) target = $region60
        $region59: #{forward.3} parent=43 // pred_region
          %5166 = dma.done [#allocation4], 32
        $region60: #{forward.3} parent=43 // pred_fallthru
          _
      $region44: #{forward.3} parent=5 // pred_fallthru
        _
      %p5167 = scmp.le.s32.totalorder 2, %s13
      // Predicated region
      $region61: #{forward.3} parent=5 // pred_check
        %p5168 = pneg %p5167
      $region62: #{forward.3} parent=5 // pred_check_branch
        %5170 = sbr.rel (%p5168) target = $region64
      $region63: #{forward.3} parent=5 // pred_region
        %s5171 = ssub.s32 %s13, 2
      $region64: #{forward.3} parent=5 // pred_fallthru
        _
    $region6: #{forward.3} parent=1 // loop_footer
      %s17 = sadd.s32 1, %s13
    $region7: #{forward.3} parent=1 // loop_footer_branch
      %12 = sbr.rel target = $region3
    $region8: #{forward.3} parent=1 // loop_exit
      _
    %5172 = vsyncpa [#allocation4], 1
    %s5173 = scalar_lea.sflag [#allocation4], 1
    %5174 = vsyncpa %s5173, 1

</llo_original>
